<compile_context>
chip_gen: v7x
topology: tpu7x:2x2x1
jax: 0.10.0
libtpu: 0.0.40
codegen_flags: <defaults>
</compile_context>

<pallas_src>
from functools import partial

import jax
import jax.numpy as jnp
from jax.experimental import pallas as pl
from jax.experimental.pallas import tpu as pltpu


# ----------------------------------------------------------------------------
# Fused kernel: BN(folded)+ReLU -> bidir GRU (fused dirs) -> 1-head MHA -> fc
#               -> ConvTranspose1d(k=3,s=2) + Linear(L_out) (folded)
# One grid program per batch element.
# ----------------------------------------------------------------------------
def unet_block_out_kernel(xd_ref, h0_ref, bn_sc_ref, bn_sh_ref,
                          wih_ref, whh_ref, bih_ref, bhh_ref,
                          wqkv_ref, bqkv_ref, wo_ref, bo_ref,
                          wfc_ref, bfc_ref, wct_ref, vk_ref, bfz_ref,
                          out_ref, hn_ref, gi_scr, y_scr):
    # xd_ref : (T, 2I)   dual input rows: [x(t) | x(T-1-t)]  (time-reversal done in wrapper)
    # h0_ref : (1, 2H)   [h0_fwd | h0_bwd]
    # wih_ref: (2I, 6H)  block-structured input weights, columns [r_f r_b z_f z_b n_f n_b]
    # whh_ref: (2H, 6H)  block-diagonal hidden weights
    # gi_scr : (T, 6H)   VMEM scratch, hoisted input projection (already direction-fused)
    # y_scr  : (T, 2H)   VMEM scratch, per-step GRU outputs in loop order
    T = xd_ref.shape[0]
    E = hn_ref.shape[-1]          # 2H
    H = E // 2

    # TODO(synk): BatchNorm1d is inference-mode only (running stats folded to scale/shift);
    # training-mode batch statistics / running-stat updates are not computed.

    # ---- hoisted out of the recurrence: BN + ReLU + input projection (one matmul) ----
    xr = jnp.maximum(xd_ref[...] * bn_sc_ref[...] + bn_sh_ref[...], 0.0)         # (T, 2I)
    gi_scr[...] = (jnp.dot(xr, wih_ref[...], preferred_element_type=jnp.float32)
                   + bih_ref[...])                                                # (T, 6H)

    # ---- fused bidirectional recurrence: T dependent steps (both directions per step) ----
    whh = whh_ref[...]
    bhh = bhh_ref[...]

    def step(t, h_cat):                                       # h_cat: (1, 2H) = [h_f | h_b]
        gi_t = gi_scr[pl.ds(t, 1), :]                         # (1, 6H) single dynamic load
        gh = jnp.dot(h_cat, whh, preferred_element_type=jnp.float32) + bhh       # (1, 6H)
        rz = jax.nn.sigmoid(gi_t[:, 0:4 * H] + gh[:, 0:4 * H])
        r = rz[:, 0:2 * H]                                    # [r_f | r_b]
        z = rz[:, 2 * H:4 * H]                                # [z_f | z_b]
        n = jnp.tanh(gi_t[:, 4 * H:] + r * gh[:, 4 * H:])     # [n_f | n_b]
        h_new = (1.0 - z) * n + z * h_cat                     # (1, 2H)
        y_scr[pl.ds(t, 1), :] = h_new                         # single full-width store / step
        return h_new

    h_fin = jax.lax.fori_loop(0, T, step, h0_ref[...], unroll=True)
    hn_ref[...] = h_fin                                       # [h_f(T-1) | h_b(0)]

    # ---- restore real-time order of the backward half (one tiny MXU reversal, vectorized) ----
    y_loop = y_scr[...]                                       # row t = [f(t) | b(T-1-t)]
    ii = jax.lax.broadcasted_iota(jnp.int32, (T, T), 0)
    jj = jax.lax.broadcasted_iota(jnp.int32, (T, T), 1)
    rev = (ii + jj == T - 1).astype(jnp.float32)
    y_rev = jnp.dot(rev, y_loop, preferred_element_type=jnp.float32)
    col = jax.lax.broadcasted_iota(jnp.int32, (T, E), 1)
    y = jnp.where(col < H, y_loop, y_rev)                     # (T, 2H) real-time order

    # ---- single-head self-attention (1/sqrt(E) pre-folded into q weights) ----
    dn_t = (((1,), (1,)), ((), ()))                           # contract last dims: A @ B.T
    qkv = jnp.dot(y, wqkv_ref[...], preferred_element_type=jnp.float32) + bqkv_ref[...]
    q = qkv[:, 0:E]
    k = qkv[:, E:2 * E]
    v = qkv[:, 2 * E:3 * E]

    s = jax.lax.dot_general(q, k, dn_t, preferred_element_type=jnp.float32)       # (T, T)
    s = s - jnp.max(s, axis=-1, keepdims=True)
    p = jnp.exp(s)
    p = p * pl.reciprocal(jnp.sum(p, axis=-1, keepdims=True), approx=True)

    ao = jnp.dot(p, v, preferred_element_type=jnp.float32)                        # (T, E)
    mo = jnp.dot(ao, wo_ref[...], preferred_element_type=jnp.float32) + bo_ref[...]
    z_fc = jnp.dot(mo, wfc_ref[...], preferred_element_type=jnp.float32) + bfc_ref[...]  # (T, O)

    # ---- ConvTranspose1d(k=3,s=2) + Linear(L_out) folded at init:
    #      out[co, i] = sum_k sum_t (Wct[k] . z)[co, t] * Vk[k][t, i] + bias_fused[co, i]
    acc = bfz_ref[...]                                                             # (O, L_out)
    for kk in range(3):
        yk = jax.lax.dot_general(wct_ref[kk], z_fc, dn_t,
                                 preferred_element_type=jnp.float32)               # (O, T)
        acc = acc + jnp.dot(yk, vk_ref[kk], preferred_element_type=jnp.float32)    # (O, L_out)
    out_ref[...] = acc.astype(out_ref.dtype)


# ----------------------------------------------------------------------------
# Wrapper
# ----------------------------------------------------------------------------
def unet_block_out_forward(x, h, params):
    # x: (B, input_dim, L), h: (2, B, H) -> (out (B, output_dim, 2L+1), h_n (2, B, H))
    B, I, T = x.shape
    H = h.shape[-1]
    E = 2 * H
    O = params["wfc"].shape[-1]
    L_out = params["bfused"].shape[-1]

    # layout-only wrapper work (tiny): dual channels = [x(t) | x(T-1-t)] so the backward
    # direction's time reversal is pre-folded into the hoisted input projection.
    x_bti = jnp.transpose(x, (0, 2, 1))                                   # (B, T, I)
    x_dual = jnp.concatenate([x_bti, x_bti[:, ::-1, :]], axis=-1)         # (B, T, 2I)
    h0_cat = jnp.concatenate([h[0], h[1]], axis=-1)[:, None, :]           # (B, 1, 2H)

    out, hn_cat = pl.pallas_call(
        unet_block_out_kernel,
        out_shape=(jax.ShapeDtypeStruct((B, O, L_out), jnp.float32),
                   jax.ShapeDtypeStruct((B, 1, E), jnp.float32)),
        grid=(B,),
        in_specs=[
            pl.BlockSpec((None, T, 2 * I), lambda b: (b, 0, 0)),          # x_dual
            pl.BlockSpec((None, 1, E), lambda b: (b, 0, 0)),              # h0_cat
            pl.BlockSpec((1, 2 * I), lambda b: (0, 0)),                   # bn_scale (dual)
            pl.BlockSpec((1, 2 * I), lambda b: (0, 0)),                   # bn_shift (dual)
            pl.BlockSpec((2 * I, 6 * H), lambda b: (0, 0)),               # wih (dual, fused dirs)
            pl.BlockSpec((E, 6 * H), lambda b: (0, 0)),                   # whh (block-diagonal)
            pl.BlockSpec((1, 6 * H), lambda b: (0, 0)),                   # bih
            pl.BlockSpec((1, 6 * H), lambda b: (0, 0)),                   # bhh
            pl.BlockSpec((E, 3 * E), lambda b: (0, 0)),                   # wqkv (q pre-scaled)
            pl.BlockSpec((1, 3 * E), lambda b: (0, 0)),                   # bqkv
            pl.BlockSpec((E, E), lambda b: (0, 0)),                       # wo
            pl.BlockSpec((1, E), lambda b: (0, 0)),                       # bo
            pl.BlockSpec((E, O), lambda b: (0, 0)),                       # wfc
            pl.BlockSpec((1, O), lambda b: (0, 0)),                       # bfc
            pl.BlockSpec((3, O, O), lambda b: (0, 0, 0)),                 # wconvT (per-tap)
            pl.BlockSpec((3, T, L_out), lambda b: (0, 0, 0)),             # Vk = sel_k^T @ wlin^T
            pl.BlockSpec((O, L_out), lambda b: (0, 0)),                   # bias_fused
        ],
        out_specs=[
            pl.BlockSpec((None, O, L_out), lambda b: (b, 0, 0)),          # out (channel-major)
            pl.BlockSpec((None, 1, E), lambda b: (b, 0, 0)),              # hn_cat
        ],
        scratch_shapes=[pltpu.VMEM((T, 6 * H), jnp.float32),              # gi (hoisted proj)
                        pltpu.VMEM((T, E), jnp.float32)],                 # per-step GRU outputs
        compiler_params=pltpu.CompilerParams(dimension_semantics=("parallel",)),
    )(x_dual, h0_cat, params["bn_scale"], params["bn_shift"],
      params["wih"], params["whh"], params["bih"], params["bhh"],
      params["wqkv"], params["bqkv"], params["wo"], params["bo"],
      params["wfc"], params["bfc"], params["wct"], params["vk"], params["bfused"])

    hn = jnp.stack([hn_cat[:, 0, :H], hn_cat[:, 0, H:]], axis=0)          # (2, B, H)
    return out, hn


# ----------------------------------------------------------------------------
# Deterministic parameter init (PyTorch shapes, converted to kernel layouts)
# ----------------------------------------------------------------------------
def init_params(key, input_size, hidden_size, output_size, length):
    I, H, O = input_size, hidden_size, output_size
    E = 2 * H
    T = length
    L_out = (length - 1) * 2 + 3          # ConvTranspose1d(k=3, s=2) output length
    ks = jax.random.split(key, 18)
    s = 0.1

    # --- PyTorch-shaped parameters ---
    bn_gamma = jax.random.normal(ks[0], (I,), jnp.float32) * s + 1.0
    bn_beta = jax.random.normal(ks[1], (I,), jnp.float32) * s
    bn_mean = jax.random.normal(ks[2], (I,), jnp.float32) * s
    bn_var = jax.random.uniform(ks[3], (I,), jnp.float32, 0.5, 1.5)
    wih = jax.random.normal(ks[4], (2, 3 * H, I), jnp.float32) * s        # GRU weight_ih [r;z;n]
    whh = jax.random.normal(ks[5], (2, 3 * H, H), jnp.float32) * s
    bih = jax.random.normal(ks[6], (2, 3 * H), jnp.float32) * s
    bhh = jax.random.normal(ks[7], (2, 3 * H), jnp.float32) * s
    in_proj_w = jax.random.normal(ks[8], (3 * E, E), jnp.float32) * s     # MHA in_proj
    in_proj_b = jax.random.normal(ks[9], (3 * E,), jnp.float32) * s
    wo = jax.random.normal(ks[10], (E, E), jnp.float32) * s               # MHA out_proj
    bo = jax.random.normal(ks[11], (E,), jnp.float32) * s
    wfc = jax.random.normal(ks[12], (O, E), jnp.float32) * s              # fc
    bfc = jax.random.normal(ks[13], (O,), jnp.float32) * s
    wconv = jax.random.normal(ks[14], (O, O, 3), jnp.float32) * s         # ConvT1d (in,out,k)
    bconv = jax.random.normal(ks[15], (O,), jnp.float32) * s
    wlin = jax.random.normal(ks[16], (L_out, L_out), jnp.float32) * s     # Linear over length
    blin = jax.random.normal(ks[17], (L_out,), jnp.float32) * s

    # --- BatchNorm folded (inference); duplicated for the dual (fwd | reversed) channels ---
    eps = 1e-5
    bn_scale = bn_gamma / jnp.sqrt(bn_var + eps)
    bn_shift = bn_beta - bn_mean * bn_scale
    bn_scale_dual = jnp.concatenate([bn_scale, bn_scale])[None, :]        # (1, 2I)
    bn_shift_dual = jnp.concatenate([bn_shift, bn_shift])[None, :]

    # --- GRU: fused directions, columns [r_f r_b z_f z_b n_f n_b]; input weights are
    # block-structured over the dual channels (rows [0:I] -> forward cols, [I:2I] -> backward
    # cols) so the backward time-reversal is pre-folded into gi; hidden weight block-diagonal.
    zeros_ih = jnp.zeros((I, H), jnp.float32)
    zeros_hh = jnp.zeros((H, H), jnp.float32)
    ih_blocks, hh_blocks = [], []
    for g in range(3):                       # gate order r, z, n (torch layout)
        for d in range(2):                   # 0=forward, 1=backward
            wt_i = wih[d, g * H:(g + 1) * H, :].T        # (I, H)
            wt_h = whh[d, g * H:(g + 1) * H, :].T        # (H, H)
            if d == 0:
                ih_blocks.append(jnp.concatenate([wt_i, zeros_ih], axis=0))
                hh_blocks.append(jnp.concatenate([wt_h, zeros_hh], axis=0))
            else:
                ih_blocks.append(jnp.concatenate([zeros_ih, wt_i], axis=0))
                hh_blocks.append(jnp.concatenate([zeros_hh, wt_h], axis=0))
    wih_dual = jnp.concatenate(ih_blocks, axis=1)                          # (2I, 6H)
    whh_bd = jnp.concatenate(hh_blocks, axis=1)                            # (2H, 6H)
    bih_cat = jnp.concatenate(
        [bih[d, g * H:(g + 1) * H] for g in range(3) for d in range(2)])[None, :]
    bhh_cat = jnp.concatenate(
        [bhh[d, g * H:(g + 1) * H] for g in range(3) for d in range(2)])[None, :]

    # --- MHA: fold 1/sqrt(E) attention scale into the q block (weight-side, init-time) ---
    scale = 1.0 / float(E) ** 0.5
    wqkv = jnp.concatenate([in_proj_w[:E].T * scale, in_proj_w[E:].T], axis=1)   # (E, 3E)
    bqkv = jnp.concatenate([in_proj_b[:E] * scale, in_proj_b[E:]])[None, :]      # (1, 3E)

    # --- ConvTranspose1d tap-scatter + length-Linear folded:
    #     Vk[k][t, i] = wlin[i, 2t+k];  bias_fused[co, i] = bconv[co]*sum_j wlin[i,j] + blin[i]
    vk = jnp.stack([wlin[:, k + 2 * jnp.arange(T)].T for k in range(3)], axis=0)  # (3, T, L_out)
    bias_fused = bconv[:, None] * jnp.sum(wlin, axis=1)[None, :] + blin[None, :]  # (O, L_out)

    return dict(
        bn_scale=bn_scale_dual, bn_shift=bn_shift_dual,
        wih=wih_dual, whh=whh_bd, bih=bih_cat, bhh=bhh_cat,
        wqkv=wqkv, bqkv=bqkv,
        wo=wo.T, bo=bo[None, :],
        wfc=wfc.T, bfc=bfc[None, :],
        wct=jnp.transpose(wconv, (2, 1, 0)),      # (3, out, in): weight[:, :, k].T per tap
        vk=vk, bfused=bias_fused,
    )


if __name__ == "__main__":
    B, input_dim, hidden_dim, output_dim, length = 2, 4, 32, 4, 8

    key = jax.random.PRNGKey(0)
    kx, kh, kp = jax.random.split(key, 3)
    x = jax.random.normal(kx, (B, input_dim, length), jnp.float32)        # (B, input_dim, L)
    h0 = jax.random.normal(kh, (2, B, hidden_dim), jnp.float32)           # (num_layers*2, B, H)
    params = init_params(kp, input_dim, hidden_dim, output_dim, length)

    fwd = jax.jit(partial(unet_block_out_forward, params=params))
    out, hn = fwd(x, h0)
    jax.block_until_ready((out, hn))

    L_out = (length - 1) * 2 + 3
    assert out.shape == (B, output_dim, L_out), out.shape
    assert hn.shape == (2, B, hidden_dim), hn.shape
    print("KERNEL_OK")
</pallas_src>

<mosaic_0001>
module attributes {stable_mosaic.version = 11 : i64} {
  func.func @unet_block_out_kernel(%arg0: i32, %arg1: memref<1x8x8xf32, #tpu.memory_space<vmem>>, %arg2: memref<1x1x64xf32, #tpu.memory_space<vmem>>, %arg3: memref<1x8xf32, #tpu.memory_space<vmem>>, %arg4: memref<1x8xf32, #tpu.memory_space<vmem>>, %arg5: memref<8x192xf32, #tpu.memory_space<vmem>>, %arg6: memref<64x192xf32, #tpu.memory_space<vmem>>, %arg7: memref<1x192xf32, #tpu.memory_space<vmem>>, %arg8: memref<1x192xf32, #tpu.memory_space<vmem>>, %arg9: memref<64x192xf32, #tpu.memory_space<vmem>>, %arg10: memref<1x192xf32, #tpu.memory_space<vmem>>, %arg11: memref<64x64xf32, #tpu.memory_space<vmem>>, %arg12: memref<1x64xf32, #tpu.memory_space<vmem>>, %arg13: memref<64x4xf32, #tpu.memory_space<vmem>>, %arg14: memref<1x4xf32, #tpu.memory_space<vmem>>, %arg15: memref<3x4x4xf32, #tpu.memory_space<vmem>>, %arg16: memref<3x8x17xf32, #tpu.memory_space<vmem>>, %arg17: memref<4x17xf32, #tpu.memory_space<vmem>>, %arg18: memref<1x4x17xf32, #tpu.memory_space<vmem>>, %arg19: memref<1x1x64xf32, #tpu.memory_space<vmem>>, %arg20: memref<8x192xf32, #tpu.memory_space<vmem>>, %arg21: memref<8x64xf32, #tpu.memory_space<vmem>>) attributes {dimension_semantics = [#tpu.dimension_semantics<parallel>], iteration_bounds = array<i64: 2>, scalar_prefetch = 0 : i64, scratch_operands = 2 : i64, tpu.core_type = #tpu.core_type<tc>, window_params = [{transform_indices = @transform_0, window_bounds = array<i64: 1, 8, 8>}, {transform_indices = @transform_1, window_bounds = array<i64: 1, 1, 64>}, {pipeline_mode = #tpu.pipeline_mode<synchronous>, transform_indices = @transform_2, window_bounds = array<i64: 1, 8>}, {pipeline_mode = #tpu.pipeline_mode<synchronous>, transform_indices = @transform_3, window_bounds = array<i64: 1, 8>}, {pipeline_mode = #tpu.pipeline_mode<synchronous>, transform_indices = @transform_4, window_bounds = array<i64: 8, 192>}, {pipeline_mode = #tpu.pipeline_mode<synchronous>, transform_indices = @transform_5, window_bounds = array<i64: 64, 192>}, {pipeline_mode = #tpu.pipeline_mode<synchronous>, transform_indices = @transform_6, window_bounds = array<i64: 1, 192>}, {pipeline_mode = #tpu.pipeline_mode<synchronous>, transform_indices = @transform_7, window_bounds = array<i64: 1, 192>}, {pipeline_mode = #tpu.pipeline_mode<synchronous>, transform_indices = @transform_8, window_bounds = array<i64: 64, 192>}, {pipeline_mode = #tpu.pipeline_mode<synchronous>, transform_indices = @transform_9, window_bounds = array<i64: 1, 192>}, {pipeline_mode = #tpu.pipeline_mode<synchronous>, transform_indices = @transform_10, window_bounds = array<i64: 64, 64>}, {pipeline_mode = #tpu.pipeline_mode<synchronous>, transform_indices = @transform_11, window_bounds = array<i64: 1, 64>}, {pipeline_mode = #tpu.pipeline_mode<synchronous>, transform_indices = @transform_12, window_bounds = array<i64: 64, 4>}, {pipeline_mode = #tpu.pipeline_mode<synchronous>, transform_indices = @transform_13, window_bounds = array<i64: 1, 4>}, {pipeline_mode = #tpu.pipeline_mode<synchronous>, transform_indices = @transform_14, window_bounds = array<i64: 3, 4, 4>}, {pipeline_mode = #tpu.pipeline_mode<synchronous>, transform_indices = @transform_15, window_bounds = array<i64: 3, 8, 17>}, {pipeline_mode = #tpu.pipeline_mode<synchronous>, transform_indices = @transform_16, window_bounds = array<i64: 4, 17>}, {transform_indices = @transform_17, window_bounds = array<i64: 1, 4, 17>}, {transform_indices = @transform_18, window_bounds = array<i64: 1, 1, 64>}]} {
    %c0 = arith.constant 0 : index
    %c0_0 = arith.constant 0 : index
    %c0_1 = arith.constant 0 : index
    %0 = vector.load %arg1[%c0, %c0_0, %c0_1] : memref<1x8x8xf32, #tpu.memory_space<vmem>>, vector<1x8x8xf32>
    %1 = vector.shape_cast %0 : vector<1x8x8xf32> to vector<8x8xf32>
    %c0_2 = arith.constant 0 : index
    %c0_3 = arith.constant 0 : index
    %2 = vector.load %arg3[%c0_2, %c0_3] : memref<1x8xf32, #tpu.memory_space<vmem>>, vector<1x8xf32>
    %3 = vector.broadcast %2 : vector<1x8xf32> to vector<8x8xf32>
    %4 = arith.mulf %1, %3 : vector<8x8xf32>
    %c0_4 = arith.constant 0 : index
    %c0_5 = arith.constant 0 : index
    %5 = vector.load %arg4[%c0_4, %c0_5] : memref<1x8xf32, #tpu.memory_space<vmem>>, vector<1x8xf32>
    %6 = vector.broadcast %5 : vector<1x8xf32> to vector<8x8xf32>
    %7 = arith.addf %4, %6 : vector<8x8xf32>
    %cst = arith.constant 0.000000e+00 : f32
    %8 = vector.broadcast %cst : f32 to vector<8x8xf32>
    %9 = arith.maximumf %7, %8 : vector<8x8xf32>
    %c0_6 = arith.constant 0 : index
    %c0_7 = arith.constant 0 : index
    %10 = vector.load %arg5[%c0_6, %c0_7] : memref<8x192xf32, #tpu.memory_space<vmem>>, vector<8x192xf32>
    %cst_8 = arith.constant dense<0.000000e+00> : vector<8x192xf32>
    %11 = tpu.matmul %9, %10, %cst_8 {dimension_numbers = #tpu.dot_dimension_numbers<[1], [0], [0], [1], [0, 0, 1, 1], [], []>} : vector<8x8xf32>, vector<8x192xf32>, vector<8x192xf32> -> vector<8x192xf32>
    %c0_9 = arith.constant 0 : index
    %c0_10 = arith.constant 0 : index
    %12 = vector.load %arg7[%c0_9, %c0_10] : memref<1x192xf32, #tpu.memory_space<vmem>>, vector<1x192xf32>
    %13 = vector.broadcast %12 : vector<1x192xf32> to vector<8x192xf32>
    %14 = arith.addf %11, %13 : vector<8x192xf32>
    %c0_11 = arith.constant 0 : index
    %c0_12 = arith.constant 0 : index
    %15 = vector.load %arg20[%c0_11, %c0_12] : memref<8x192xf32, #tpu.memory_space<vmem>>, vector<8x192xf32>
    tpu.vector_store %arg20[%c0_11, %c0_12], %14 {strides = array<i32>} : memref<8x192xf32, #tpu.memory_space<vmem>>, vector<8x192xf32>,
    %c0_13 = arith.constant 0 : index
    %c0_14 = arith.constant 0 : index
    %16 = vector.load %arg6[%c0_13, %c0_14] : memref<64x192xf32, #tpu.memory_space<vmem>>, vector<64x192xf32>
    %c0_15 = arith.constant 0 : index
    %c0_16 = arith.constant 0 : index
    %17 = vector.load %arg8[%c0_15, %c0_16] : memref<1x192xf32, #tpu.memory_space<vmem>>, vector<1x192xf32>
    %c0_17 = arith.constant 0 : index
    %c0_18 = arith.constant 0 : index
    %c0_19 = arith.constant 0 : index
    %18 = vector.load %arg2[%c0_17, %c0_18, %c0_19] : memref<1x1x64xf32, #tpu.memory_space<vmem>>, vector<1x1x64xf32>
    %19 = vector.shape_cast %18 : vector<1x1x64xf32> to vector<1x64xf32>
    %c0_i32 = arith.constant 0 : i32
    %20 = arith.index_cast %c0_i32 : i32 to index
    %c0_20 = arith.constant 0 : index
    %21 = vector.load %arg20[%20, %c0_20] : memref<8x192xf32, #tpu.memory_space<vmem>>, vector<1x192xf32>
    %cst_21 = arith.constant dense<0.000000e+00> : vector<1x192xf32>
    %22 = tpu.matmul %19, %16, %cst_21 {dimension_numbers = #tpu.dot_dimension_numbers<[1], [0], [0], [1], [0, 0, 1, 1], [], []>} : vector<1x64xf32>, vector<64x192xf32>, vector<1x192xf32> -> vector<1x192xf32>
    %23 = arith.addf %22, %17 : vector<1x192xf32>
    %24 = vector.extract_strided_slice %21 {offsets = [0, 0], sizes = [1, 128], strides = [1, 1]} : vector<1x192xf32> to vector<1x128xf32>
    %25 = vector.extract_strided_slice %23 {offsets = [0, 0], sizes = [1, 128], strides = [1, 1]} : vector<1x192xf32> to vector<1x128xf32>
    %26 = arith.addf %24, %25 : vector<1x128xf32>
    %27 = arith.negf %26 : vector<1x128xf32>
    %28 = math.exp %27 : vector<1x128xf32>
    %cst_22 = arith.constant 1.000000e+00 : f32
    %29 = vector.broadcast %cst_22 : f32 to vector<1x128xf32>
    %30 = arith.addf %29, %28 : vector<1x128xf32>
    %31 = arith.divf %29, %30 : vector<1x128xf32>
    %32 = vector.extract_strided_slice %31 {offsets = [0, 0], sizes = [1, 64], strides = [1, 1]} : vector<1x128xf32> to vector<1x64xf32>
    %33 = vector.extract_strided_slice %31 {offsets = [0, 64], sizes = [1, 64], strides = [1, 1]} : vector<1x128xf32> to vector<1x64xf32>
    %34 = vector.extract_strided_slice %21 {offsets = [0, 128], sizes = [1, 64], strides = [1, 1]} : vector<1x192xf32> to vector<1x64xf32>
    %35 = vector.extract_strided_slice %23 {offsets = [0, 128], sizes = [1, 64], strides = [1, 1]} : vector<1x192xf32> to vector<1x64xf32>
    %36 = arith.mulf %32, %35 : vector<1x64xf32>
    %37 = arith.addf %34, %36 : vector<1x64xf32>
    %38 = math.tanh %37 : vector<1x64xf32>
    %cst_23 = arith.constant 1.000000e+00 : f32
    %39 = vector.broadcast %cst_23 : f32 to vector<1x64xf32>
    %40 = arith.subf %39, %33 : vector<1x64xf32>
    %41 = arith.mulf %40, %38 : vector<1x64xf32>
    %42 = arith.mulf %33, %19 : vector<1x64xf32>
    %43 = arith.addf %41, %42 : vector<1x64xf32>
    %44 = arith.index_cast %c0_i32 : i32 to index
    %c0_24 = arith.constant 0 : index
    %45 = vector.load %arg21[%44, %c0_24] : memref<8x64xf32, #tpu.memory_space<vmem>>, vector<1x64xf32>
    tpu.vector_store %arg21[%44, %c0_24], %43 {strides = array<i32>} : memref<8x64xf32, #tpu.memory_space<vmem>>, vector<1x64xf32>,
    %c1_i32 = arith.constant 1 : i32
    %46 = arith.index_cast %c1_i32 : i32 to index
    %c0_25 = arith.constant 0 : index
    %47 = vector.load %arg20[%46, %c0_25] : memref<8x192xf32, #tpu.memory_space<vmem>>, vector<1x192xf32>
    %cst_26 = arith.constant dense<0.000000e+00> : vector<1x192xf32>
    %48 = tpu.matmul %43, %16, %cst_26 {dimension_numbers = #tpu.dot_dimension_numbers<[1], [0], [0], [1], [0, 0, 1, 1], [], []>} : vector<1x64xf32>, vector<64x192xf32>, vector<1x192xf32> -> vector<1x192xf32>
    %49 = arith.addf %48, %17 : vector<1x192xf32>
    %50 = vector.extract_strided_slice %47 {offsets = [0, 0], sizes = [1, 128], strides = [1, 1]} : vector<1x192xf32> to vector<1x128xf32>
    %51 = vector.extract_strided_slice %49 {offsets = [0, 0], sizes = [1, 128], strides = [1, 1]} : vector<1x192xf32> to vector<1x128xf32>
    %52 = arith.addf %50, %51 : vector<1x128xf32>
    %53 = arith.negf %52 : vector<1x128xf32>
    %54 = math.exp %53 : vector<1x128xf32>
    %cst_27 = arith.constant 1.000000e+00 : f32
    %55 = vector.broadcast %cst_27 : f32 to vector<1x128xf32>
    %56 = arith.addf %55, %54 : vector<1x128xf32>
    %57 = arith.divf %55, %56 : vector<1x128xf32>
    %58 = vector.extract_strided_slice %57 {offsets = [0, 0], sizes = [1, 64], strides = [1, 1]} : vector<1x128xf32> to vector<1x64xf32>
    %59 = vector.extract_strided_slice %57 {offsets = [0, 64], sizes = [1, 64], strides = [1, 1]} : vector<1x128xf32> to vector<1x64xf32>
    %60 = vector.extract_strided_slice %47 {offsets = [0, 128], sizes = [1, 64], strides = [1, 1]} : vector<1x192xf32> to vector<1x64xf32>
    %61 = vector.extract_strided_slice %49 {offsets = [0, 128], sizes = [1, 64], strides = [1, 1]} : vector<1x192xf32> to vector<1x64xf32>
    %62 = arith.mulf %58, %61 : vector<1x64xf32>
    %63 = arith.addf %60, %62 : vector<1x64xf32>
    %64 = math.tanh %63 : vector<1x64xf32>
    %cst_28 = arith.constant 1.000000e+00 : f32
    %65 = vector.broadcast %cst_28 : f32 to vector<1x64xf32>
    %66 = arith.subf %65, %59 : vector<1x64xf32>
    %67 = arith.mulf %66, %64 : vector<1x64xf32>
    %68 = arith.mulf %59, %43 : vector<1x64xf32>
    %69 = arith.addf %67, %68 : vector<1x64xf32>
    %70 = arith.index_cast %c1_i32 : i32 to index
    %c0_29 = arith.constant 0 : index
    %71 = vector.load %arg21[%70, %c0_29] : memref<8x64xf32, #tpu.memory_space<vmem>>, vector<1x64xf32>
    tpu.vector_store %arg21[%70, %c0_29], %69 {strides = array<i32>} : memref<8x64xf32, #tpu.memory_space<vmem>>, vector<1x64xf32>,
    %c2_i32 = arith.constant 2 : i32
    %72 = arith.index_cast %c2_i32 : i32 to index
    %c0_30 = arith.constant 0 : index
    %73 = vector.load %arg20[%72, %c0_30] : memref<8x192xf32, #tpu.memory_space<vmem>>, vector<1x192xf32>
    %cst_31 = arith.constant dense<0.000000e+00> : vector<1x192xf32>
    %74 = tpu.matmul %69, %16, %cst_31 {dimension_numbers = #tpu.dot_dimension_numbers<[1], [0], [0], [1], [0, 0, 1, 1], [], []>} : vector<1x64xf32>, vector<64x192xf32>, vector<1x192xf32> -> vector<1x192xf32>
    %75 = arith.addf %74, %17 : vector<1x192xf32>
    %76 = vector.extract_strided_slice %73 {offsets = [0, 0], sizes = [1, 128], strides = [1, 1]} : vector<1x192xf32> to vector<1x128xf32>
    %77 = vector.extract_strided_slice %75 {offsets = [0, 0], sizes = [1, 128], strides = [1, 1]} : vector<1x192xf32> to vector<1x128xf32>
    %78 = arith.addf %76, %77 : vector<1x128xf32>
    %79 = arith.negf %78 : vector<1x128xf32>
    %80 = math.exp %79 : vector<1x128xf32>
    %cst_32 = arith.constant 1.000000e+00 : f32
    %81 = vector.broadcast %cst_32 : f32 to vector<1x128xf32>
    %82 = arith.addf %81, %80 : vector<1x128xf32>
    %83 = arith.divf %81, %82 : vector<1x128xf32>
    %84 = vector.extract_strided_slice %83 {offsets = [0, 0], sizes = [1, 64], strides = [1, 1]} : vector<1x128xf32> to vector<1x64xf32>
    %85 = vector.extract_strided_slice %83 {offsets = [0, 64], sizes = [1, 64], strides = [1, 1]} : vector<1x128xf32> to vector<1x64xf32>
    %86 = vector.extract_strided_slice %73 {offsets = [0, 128], sizes = [1, 64], strides = [1, 1]} : vector<1x192xf32> to vector<1x64xf32>
    %87 = vector.extract_strided_slice %75 {offsets = [0, 128], sizes = [1, 64], strides = [1, 1]} : vector<1x192xf32> to vector<1x64xf32>
    %88 = arith.mulf %84, %87 : vector<1x64xf32>
    %89 = arith.addf %86, %88 : vector<1x64xf32>
    %90 = math.tanh %89 : vector<1x64xf32>
    %cst_33 = arith.constant 1.000000e+00 : f32
    %91 = vector.broadcast %cst_33 : f32 to vector<1x64xf32>
    %92 = arith.subf %91, %85 : vector<1x64xf32>
    %93 = arith.mulf %92, %90 : vector<1x64xf32>
    %94 = arith.mulf %85, %69 : vector<1x64xf32>
    %95 = arith.addf %93, %94 : vector<1x64xf32>
    %96 = arith.index_cast %c2_i32 : i32 to index
    %c0_34 = arith.constant 0 : index
    %97 = vector.load %arg21[%96, %c0_34] : memref<8x64xf32, #tpu.memory_space<vmem>>, vector<1x64xf32>
    tpu.vector_store %arg21[%96, %c0_34], %95 {strides = array<i32>} : memref<8x64xf32, #tpu.memory_space<vmem>>, vector<1x64xf32>,
    %c3_i32 = arith.constant 3 : i32
    %98 = arith.index_cast %c3_i32 : i32 to index
    %c0_35 = arith.constant 0 : index
    %99 = vector.load %arg20[%98, %c0_35] : memref<8x192xf32, #tpu.memory_space<vmem>>, vector<1x192xf32>
    %cst_36 = arith.constant dense<0.000000e+00> : vector<1x192xf32>
    %100 = tpu.matmul %95, %16, %cst_36 {dimension_numbers = #tpu.dot_dimension_numbers<[1], [0], [0], [1], [0, 0, 1, 1], [], []>} : vector<1x64xf32>, vector<64x192xf32>, vector<1x192xf32> -> vector<1x192xf32>
    %101 = arith.addf %100, %17 : vector<1x192xf32>
    %102 = vector.extract_strided_slice %99 {offsets = [0, 0], sizes = [1, 128], strides = [1, 1]} : vector<1x192xf32> to vector<1x128xf32>
    %103 = vector.extract_strided_slice %101 {offsets = [0, 0], sizes = [1, 128], strides = [1, 1]} : vector<1x192xf32> to vector<1x128xf32>
    %104 = arith.addf %102, %103 : vector<1x128xf32>
    %105 = arith.negf %104 : vector<1x128xf32>
    %106 = math.exp %105 : vector<1x128xf32>
    %cst_37 = arith.constant 1.000000e+00 : f32
    %107 = vector.broadcast %cst_37 : f32 to vector<1x128xf32>
    %108 = arith.addf %107, %106 : vector<1x128xf32>
    %109 = arith.divf %107, %108 : vector<1x128xf32>
    %110 = vector.extract_strided_slice %109 {offsets = [0, 0], sizes = [1, 64], strides = [1, 1]} : vector<1x128xf32> to vector<1x64xf32>
    %111 = vector.extract_strided_slice %109 {offsets = [0, 64], sizes = [1, 64], strides = [1, 1]} : vector<1x128xf32> to vector<1x64xf32>
    %112 = vector.extract_strided_slice %99 {offsets = [0, 128], sizes = [1, 64], strides = [1, 1]} : vector<1x192xf32> to vector<1x64xf32>
    %113 = vector.extract_strided_slice %101 {offsets = [0, 128], sizes = [1, 64], strides = [1, 1]} : vector<1x192xf32> to vector<1x64xf32>
    %114 = arith.mulf %110, %113 : vector<1x64xf32>
    %115 = arith.addf %112, %114 : vector<1x64xf32>
    %116 = math.tanh %115 : vector<1x64xf32>
    %cst_38 = arith.constant 1.000000e+00 : f32
    %117 = vector.broadcast %cst_38 : f32 to vector<1x64xf32>
    %118 = arith.subf %117, %111 : vector<1x64xf32>
    %119 = arith.mulf %118, %116 : vector<1x64xf32>
    %120 = arith.mulf %111, %95 : vector<1x64xf32>
    %121 = arith.addf %119, %120 : vector<1x64xf32>
    %122 = arith.index_cast %c3_i32 : i32 to index
    %c0_39 = arith.constant 0 : index
    %123 = vector.load %arg21[%122, %c0_39] : memref<8x64xf32, #tpu.memory_space<vmem>>, vector<1x64xf32>
    tpu.vector_store %arg21[%122, %c0_39], %121 {strides = array<i32>} : memref<8x64xf32, #tpu.memory_space<vmem>>, vector<1x64xf32>,
    %c4_i32 = arith.constant 4 : i32
    %124 = arith.index_cast %c4_i32 : i32 to index
    %c0_40 = arith.constant 0 : index
    %125 = vector.load %arg20[%124, %c0_40] : memref<8x192xf32, #tpu.memory_space<vmem>>, vector<1x192xf32>
    %cst_41 = arith.constant dense<0.000000e+00> : vector<1x192xf32>
    %126 = tpu.matmul %121, %16, %cst_41 {dimension_numbers = #tpu.dot_dimension_numbers<[1], [0], [0], [1], [0, 0, 1, 1], [], []>} : vector<1x64xf32>, vector<64x192xf32>, vector<1x192xf32> -> vector<1x192xf32>
    %127 = arith.addf %126, %17 : vector<1x192xf32>
    %128 = vector.extract_strided_slice %125 {offsets = [0, 0], sizes = [1, 128], strides = [1, 1]} : vector<1x192xf32> to vector<1x128xf32>
    %129 = vector.extract_strided_slice %127 {offsets = [0, 0], sizes = [1, 128], strides = [1, 1]} : vector<1x192xf32> to vector<1x128xf32>
    %130 = arith.addf %128, %129 : vector<1x128xf32>
    %131 = arith.negf %130 : vector<1x128xf32>
    %132 = math.exp %131 : vector<1x128xf32>
    %cst_42 = arith.constant 1.000000e+00 : f32
    %133 = vector.broadcast %cst_42 : f32 to vector<1x128xf32>
    %134 = arith.addf %133, %132 : vector<1x128xf32>
    %135 = arith.divf %133, %134 : vector<1x128xf32>
    %136 = vector.extract_strided_slice %135 {offsets = [0, 0], sizes = [1, 64], strides = [1, 1]} : vector<1x128xf32> to vector<1x64xf32>
    %137 = vector.extract_strided_slice %135 {offsets = [0, 64], sizes = [1, 64], strides = [1, 1]} : vector<1x128xf32> to vector<1x64xf32>
    %138 = vector.extract_strided_slice %125 {offsets = [0, 128], sizes = [1, 64], strides = [1, 1]} : vector<1x192xf32> to vector<1x64xf32>
    %139 = vector.extract_strided_slice %127 {offsets = [0, 128], sizes = [1, 64], strides = [1, 1]} : vector<1x192xf32> to vector<1x64xf32>
    %140 = arith.mulf %136, %139 : vector<1x64xf32>
    %141 = arith.addf %138, %140 : vector<1x64xf32>
    %142 = math.tanh %141 : vector<1x64xf32>
    %cst_43 = arith.constant 1.000000e+00 : f32
    %143 = vector.broadcast %cst_43 : f32 to vector<1x64xf32>
    %144 = arith.subf %143, %137 : vector<1x64xf32>
    %145 = arith.mulf %144, %142 : vector<1x64xf32>
    %146 = arith.mulf %137, %121 : vector<1x64xf32>
    %147 = arith.addf %145, %146 : vector<1x64xf32>
    %148 = arith.index_cast %c4_i32 : i32 to index
    %c0_44 = arith.constant 0 : index
    %149 = vector.load %arg21[%148, %c0_44] : memref<8x64xf32, #tpu.memory_space<vmem>>, vector<1x64xf32>
    tpu.vector_store %arg21[%148, %c0_44], %147 {strides = array<i32>} : memref<8x64xf32, #tpu.memory_space<vmem>>, vector<1x64xf32>,
    %c5_i32 = arith.constant 5 : i32
    %150 = arith.index_cast %c5_i32 : i32 to index
    %c0_45 = arith.constant 0 : index
    %151 = vector.load %arg20[%150, %c0_45] : memref<8x192xf32, #tpu.memory_space<vmem>>, vector<1x192xf32>
    %cst_46 = arith.constant dense<0.000000e+00> : vector<1x192xf32>
    %152 = tpu.matmul %147, %16, %cst_46 {dimension_numbers = #tpu.dot_dimension_numbers<[1], [0], [0], [1], [0, 0, 1, 1], [], []>} : vector<1x64xf32>, vector<64x192xf32>, vector<1x192xf32> -> vector<1x192xf32>
    %153 = arith.addf %152, %17 : vector<1x192xf32>
    %154 = vector.extract_strided_slice %151 {offsets = [0, 0], sizes = [1, 128], strides = [1, 1]} : vector<1x192xf32> to vector<1x128xf32>
    %155 = vector.extract_strided_slice %153 {offsets = [0, 0], sizes = [1, 128], strides = [1, 1]} : vector<1x192xf32> to vector<1x128xf32>
    %156 = arith.addf %154, %155 : vector<1x128xf32>
    %157 = arith.negf %156 : vector<1x128xf32>
    %158 = math.exp %157 : vector<1x128xf32>
    %cst_47 = arith.constant 1.000000e+00 : f32
    %159 = vector.broadcast %cst_47 : f32 to vector<1x128xf32>
    %160 = arith.addf %159, %158 : vector<1x128xf32>
    %161 = arith.divf %159, %160 : vector<1x128xf32>
    %162 = vector.extract_strided_slice %161 {offsets = [0, 0], sizes = [1, 64], strides = [1, 1]} : vector<1x128xf32> to vector<1x64xf32>
    %163 = vector.extract_strided_slice %161 {offsets = [0, 64], sizes = [1, 64], strides = [1, 1]} : vector<1x128xf32> to vector<1x64xf32>
    %164 = vector.extract_strided_slice %151 {offsets = [0, 128], sizes = [1, 64], strides = [1, 1]} : vector<1x192xf32> to vector<1x64xf32>
    %165 = vector.extract_strided_slice %153 {offsets = [0, 128], sizes = [1, 64], strides = [1, 1]} : vector<1x192xf32> to vector<1x64xf32>
    %166 = arith.mulf %162, %165 : vector<1x64xf32>
    %167 = arith.addf %164, %166 : vector<1x64xf32>
    %168 = math.tanh %167 : vector<1x64xf32>
    %cst_48 = arith.constant 1.000000e+00 : f32
    %169 = vector.broadcast %cst_48 : f32 to vector<1x64xf32>
    %170 = arith.subf %169, %163 : vector<1x64xf32>
    %171 = arith.mulf %170, %168 : vector<1x64xf32>
    %172 = arith.mulf %163, %147 : vector<1x64xf32>
    %173 = arith.addf %171, %172 : vector<1x64xf32>
    %174 = arith.index_cast %c5_i32 : i32 to index
    %c0_49 = arith.constant 0 : index
    %175 = vector.load %arg21[%174, %c0_49] : memref<8x64xf32, #tpu.memory_space<vmem>>, vector<1x64xf32>
    tpu.vector_store %arg21[%174, %c0_49], %173 {strides = array<i32>} : memref<8x64xf32, #tpu.memory_space<vmem>>, vector<1x64xf32>,
    %c6_i32 = arith.constant 6 : i32
    %176 = arith.index_cast %c6_i32 : i32 to index
    %c0_50 = arith.constant 0 : index
    %177 = vector.load %arg20[%176, %c0_50] : memref<8x192xf32, #tpu.memory_space<vmem>>, vector<1x192xf32>
    %cst_51 = arith.constant dense<0.000000e+00> : vector<1x192xf32>
    %178 = tpu.matmul %173, %16, %cst_51 {dimension_numbers = #tpu.dot_dimension_numbers<[1], [0], [0], [1], [0, 0, 1, 1], [], []>} : vector<1x64xf32>, vector<64x192xf32>, vector<1x192xf32> -> vector<1x192xf32>
    %179 = arith.addf %178, %17 : vector<1x192xf32>
    %180 = vector.extract_strided_slice %177 {offsets = [0, 0], sizes = [1, 128], strides = [1, 1]} : vector<1x192xf32> to vector<1x128xf32>
    %181 = vector.extract_strided_slice %179 {offsets = [0, 0], sizes = [1, 128], strides = [1, 1]} : vector<1x192xf32> to vector<1x128xf32>
    %182 = arith.addf %180, %181 : vector<1x128xf32>
    %183 = arith.negf %182 : vector<1x128xf32>
    %184 = math.exp %183 : vector<1x128xf32>
    %cst_52 = arith.constant 1.000000e+00 : f32
    %185 = vector.broadcast %cst_52 : f32 to vector<1x128xf32>
    %186 = arith.addf %185, %184 : vector<1x128xf32>
    %187 = arith.divf %185, %186 : vector<1x128xf32>
    %188 = vector.extract_strided_slice %187 {offsets = [0, 0], sizes = [1, 64], strides = [1, 1]} : vector<1x128xf32> to vector<1x64xf32>
    %189 = vector.extract_strided_slice %187 {offsets = [0, 64], sizes = [1, 64], strides = [1, 1]} : vector<1x128xf32> to vector<1x64xf32>
    %190 = vector.extract_strided_slice %177 {offsets = [0, 128], sizes = [1, 64], strides = [1, 1]} : vector<1x192xf32> to vector<1x64xf32>
    %191 = vector.extract_strided_slice %179 {offsets = [0, 128], sizes = [1, 64], strides = [1, 1]} : vector<1x192xf32> to vector<1x64xf32>
    %192 = arith.mulf %188, %191 : vector<1x64xf32>
    %193 = arith.addf %190, %192 : vector<1x64xf32>
    %194 = math.tanh %193 : vector<1x64xf32>
    %cst_53 = arith.constant 1.000000e+00 : f32
    %195 = vector.broadcast %cst_53 : f32 to vector<1x64xf32>
    %196 = arith.subf %195, %189 : vector<1x64xf32>
    %197 = arith.mulf %196, %194 : vector<1x64xf32>
    %198 = arith.mulf %189, %173 : vector<1x64xf32>
    %199 = arith.addf %197, %198 : vector<1x64xf32>
    %200 = arith.index_cast %c6_i32 : i32 to index
    %c0_54 = arith.constant 0 : index
    %201 = vector.load %arg21[%200, %c0_54] : memref<8x64xf32, #tpu.memory_space<vmem>>, vector<1x64xf32>
    tpu.vector_store %arg21[%200, %c0_54], %199 {strides = array<i32>} : memref<8x64xf32, #tpu.memory_space<vmem>>, vector<1x64xf32>,
    %c7_i32 = arith.constant 7 : i32
    %202 = arith.index_cast %c7_i32 : i32 to index
    %c0_55 = arith.constant 0 : index
    %203 = vector.load %arg20[%202, %c0_55] : memref<8x192xf32, #tpu.memory_space<vmem>>, vector<1x192xf32>
    %cst_56 = arith.constant dense<0.000000e+00> : vector<1x192xf32>
    %204 = tpu.matmul %199, %16, %cst_56 {dimension_numbers = #tpu.dot_dimension_numbers<[1], [0], [0], [1], [0, 0, 1, 1], [], []>} : vector<1x64xf32>, vector<64x192xf32>, vector<1x192xf32> -> vector<1x192xf32>
    %205 = arith.addf %204, %17 : vector<1x192xf32>
    %206 = vector.extract_strided_slice %203 {offsets = [0, 0], sizes = [1, 128], strides = [1, 1]} : vector<1x192xf32> to vector<1x128xf32>
    %207 = vector.extract_strided_slice %205 {offsets = [0, 0], sizes = [1, 128], strides = [1, 1]} : vector<1x192xf32> to vector<1x128xf32>
    %208 = arith.addf %206, %207 : vector<1x128xf32>
    %209 = arith.negf %208 : vector<1x128xf32>
    %210 = math.exp %209 : vector<1x128xf32>
    %cst_57 = arith.constant 1.000000e+00 : f32
    %211 = vector.broadcast %cst_57 : f32 to vector<1x128xf32>
    %212 = arith.addf %211, %210 : vector<1x128xf32>
    %213 = arith.divf %211, %212 : vector<1x128xf32>
    %214 = vector.extract_strided_slice %213 {offsets = [0, 0], sizes = [1, 64], strides = [1, 1]} : vector<1x128xf32> to vector<1x64xf32>
    %215 = vector.extract_strided_slice %213 {offsets = [0, 64], sizes = [1, 64], strides = [1, 1]} : vector<1x128xf32> to vector<1x64xf32>
    %216 = vector.extract_strided_slice %203 {offsets = [0, 128], sizes = [1, 64], strides = [1, 1]} : vector<1x192xf32> to vector<1x64xf32>
    %217 = vector.extract_strided_slice %205 {offsets = [0, 128], sizes = [1, 64], strides = [1, 1]} : vector<1x192xf32> to vector<1x64xf32>
    %218 = arith.mulf %214, %217 : vector<1x64xf32>
    %219 = arith.addf %216, %218 : vector<1x64xf32>
    %220 = math.tanh %219 : vector<1x64xf32>
    %cst_58 = arith.constant 1.000000e+00 : f32
    %221 = vector.broadcast %cst_58 : f32 to vector<1x64xf32>
    %222 = arith.subf %221, %215 : vector<1x64xf32>
    %223 = arith.mulf %222, %220 : vector<1x64xf32>
    %224 = arith.mulf %215, %199 : vector<1x64xf32>
    %225 = arith.addf %223, %224 : vector<1x64xf32>
    %226 = arith.index_cast %c7_i32 : i32 to index
    %c0_59 = arith.constant 0 : index
    %227 = vector.load %arg21[%226, %c0_59] : memref<8x64xf32, #tpu.memory_space<vmem>>, vector<1x64xf32>
    tpu.vector_store %arg21[%226, %c0_59], %225 {strides = array<i32>} : memref<8x64xf32, #tpu.memory_space<vmem>>, vector<1x64xf32>,
    %c8_i32 = arith.constant 8 : i32
    %c0_60 = arith.constant 0 : index
    %c0_61 = arith.constant 0 : index
    %c0_62 = arith.constant 0 : index
    %228 = vector.load %arg19[%c0_60, %c0_61, %c0_62] : memref<1x1x64xf32, #tpu.memory_space<vmem>>, vector<1x1x64xf32>
    %229 = vector.shape_cast %228 : vector<1x1x64xf32> to vector<1x64xf32>
    %230 = vector.shape_cast %225 : vector<1x64xf32> to vector<1x1x64xf32>
    tpu.vector_store %arg19[%c0_60, %c0_61, %c0_62], %230 {strides = array<i32>} : memref<1x1x64xf32, #tpu.memory_space<vmem>>, vector<1x1x64xf32>,
    %c0_63 = arith.constant 0 : index
    %c0_64 = arith.constant 0 : index
    %231 = vector.load %arg21[%c0_63, %c0_64] : memref<8x64xf32, #tpu.memory_space<vmem>>, vector<8x64xf32>
    %232 = tpu.iota {dimensions = array<i32: 0>} : vector<8x8xi32>
    %233 = tpu.iota {dimensions = array<i32: 1>} : vector<8x8xi32>
    %234 = arith.addi %232, %233 : vector<8x8xi32>
    %c7_i32_65 = arith.constant 7 : i32
    %235 = vector.broadcast %c7_i32_65 : i32 to vector<8x8xi32>
    %236 = arith.cmpi eq, %234, %235 : vector<8x8xi32>
    %237 = arith.extui %236 : vector<8x8xi1> to vector<8x8xi32>
    %238 = arith.sitofp %237 : vector<8x8xi32> to vector<8x8xf32>
    %cst_66 = arith.constant dense<0.000000e+00> : vector<8x64xf32>
    %239 = tpu.matmul %238, %231, %cst_66 {dimension_numbers = #tpu.dot_dimension_numbers<[1], [0], [0], [1], [0, 0, 1, 1], [], []>} : vector<8x8xf32>, vector<8x64xf32>, vector<8x64xf32> -> vector<8x64xf32>
    %240 = tpu.iota {dimensions = array<i32: 1>} : vector<8x64xi32>
    %c32_i32 = arith.constant 32 : i32
    %241 = vector.broadcast %c32_i32 : i32 to vector<8x64xi32>
    %242 = arith.cmpi slt, %240, %241 : vector<8x64xi32>
    %243 = arith.select %242, %231, %239 : vector<8x64xi1>, vector<8x64xf32>
    %c0_67 = arith.constant 0 : index
    %c0_68 = arith.constant 0 : index
    %244 = vector.load %arg9[%c0_67, %c0_68] : memref<64x192xf32, #tpu.memory_space<vmem>>, vector<64x192xf32>
    %cst_69 = arith.constant dense<0.000000e+00> : vector<8x192xf32>
    %245 = tpu.matmul %243, %244, %cst_69 {dimension_numbers = #tpu.dot_dimension_numbers<[1], [0], [0], [1], [0, 0, 1, 1], [], []>} : vector<8x64xf32>, vector<64x192xf32>, vector<8x192xf32> -> vector<8x192xf32>
    %c0_70 = arith.constant 0 : index
    %c0_71 = arith.constant 0 : index
    %246 = vector.load %arg10[%c0_70, %c0_71] : memref<1x192xf32, #tpu.memory_space<vmem>>, vector<1x192xf32>
    %247 = vector.broadcast %246 : vector<1x192xf32> to vector<8x192xf32>
    %248 = arith.addf %245, %247 : vector<8x192xf32>
    %249 = vector.extract_strided_slice %248 {offsets = [0, 0], sizes = [8, 64], strides = [1, 1]} : vector<8x192xf32> to vector<8x64xf32>
    %250 = vector.extract_strided_slice %248 {offsets = [0, 64], sizes = [8, 64], strides = [1, 1]} : vector<8x192xf32> to vector<8x64xf32>
    %251 = vector.extract_strided_slice %248 {offsets = [0, 128], sizes = [8, 64], strides = [1, 1]} : vector<8x192xf32> to vector<8x64xf32>
    %cst_72 = arith.constant dense<0.000000e+00> : vector<8x8xf32>
    %252 = tpu.matmul %249, %250, %cst_72 {dimension_numbers = #tpu.dot_dimension_numbers<[1], [1], [0], [0], [0, 0, 1, 0], [], []>} : vector<8x64xf32>, vector<8x64xf32>, vector<8x8xf32> -> vector<8x8xf32>
    %cst_73 = arith.constant dense<0xFF800000> : vector<8xf32>
    %253 = vector.multi_reduction <maximumf>, %252, %cst_73 [1] : vector<8x8xf32> to vector<8xf32>
    %254 = vector.shape_cast %253 : vector<8xf32> to vector<8x1xf32>
    %255 = vector.broadcast %254 : vector<8x1xf32> to vector<8x8xf32>
    %256 = arith.subf %252, %255 : vector<8x8xf32>
    %257 = math.exp %256 : vector<8x8xf32>
    %cst_74 = arith.constant dense<0.000000e+00> : vector<8xf32>
    %258 = vector.multi_reduction <add>, %257, %cst_74 [1] : vector<8x8xf32> to vector<8xf32>
    %259 = vector.shape_cast %258 : vector<8xf32> to vector<8x1xf32>
    %260 = tpu.reciprocal %259 {approx = true} : vector<8x1xf32> -> vector<8x1xf32>
    %261 = vector.broadcast %260 : vector<8x1xf32> to vector<8x8xf32>
    %262 = arith.mulf %257, %261 : vector<8x8xf32>
    %cst_75 = arith.constant dense<0.000000e+00> : vector<8x64xf32>
    %263 = tpu.matmul %262, %251, %cst_75 {dimension_numbers = #tpu.dot_dimension_numbers<[1], [0], [0], [1], [0, 0, 1, 1], [], []>} : vector<8x8xf32>, vector<8x64xf32>, vector<8x64xf32> -> vector<8x64xf32>
    %c0_76 = arith.constant 0 : index
    %c0_77 = arith.constant 0 : index
    %264 = vector.load %arg11[%c0_76, %c0_77] : memref<64x64xf32, #tpu.memory_space<vmem>>, vector<64x64xf32>
    %cst_78 = arith.constant dense<0.000000e+00> : vector<8x64xf32>
    %265 = tpu.matmul %263, %264, %cst_78 {dimension_numbers = #tpu.dot_dimension_numbers<[1], [0], [0], [1], [0, 0, 1, 1], [], []>} : vector<8x64xf32>, vector<64x64xf32>, vector<8x64xf32> -> vector<8x64xf32>
    %c0_79 = arith.constant 0 : index
    %c0_80 = arith.constant 0 : index
    %266 = vector.load %arg12[%c0_79, %c0_80] : memref<1x64xf32, #tpu.memory_space<vmem>>, vector<1x64xf32>
    %267 = vector.broadcast %266 : vector<1x64xf32> to vector<8x64xf32>
    %268 = arith.addf %265, %267 : vector<8x64xf32>
    %c0_81 = arith.constant 0 : index
    %c0_82 = arith.constant 0 : index
    %269 = vector.load %arg13[%c0_81, %c0_82] : memref<64x4xf32, #tpu.memory_space<vmem>>, vector<64x4xf32>
    %cst_83 = arith.constant dense<0.000000e+00> : vector<8x4xf32>
    %270 = tpu.matmul %268, %269, %cst_83 {dimension_numbers = #tpu.dot_dimension_numbers<[1], [0], [0], [1], [0, 0, 1, 1], [], []>} : vector<8x64xf32>, vector<64x4xf32>, vector<8x4xf32> -> vector<8x4xf32>
    %c0_84 = arith.constant 0 : index
    %c0_85 = arith.constant 0 : index
    %271 = vector.load %arg14[%c0_84, %c0_85] : memref<1x4xf32, #tpu.memory_space<vmem>>, vector<1x4xf32>
    %272 = vector.broadcast %271 : vector<1x4xf32> to vector<8x4xf32>
    %273 = arith.addf %270, %272 : vector<8x4xf32>
    %c0_86 = arith.constant 0 : index
    %c0_87 = arith.constant 0 : index
    %274 = vector.load %arg17[%c0_86, %c0_87] : memref<4x17xf32, #tpu.memory_space<vmem>>, vector<4x17xf32>
    %c0_88 = arith.constant 0 : index
    %c0_89 = arith.constant 0 : index
    %c0_90 = arith.constant 0 : index
    %275 = vector.load %arg15[%c0_88, %c0_89, %c0_90] : memref<3x4x4xf32, #tpu.memory_space<vmem>>, vector<1x4x4xf32>
    %276 = vector.shape_cast %275 : vector<1x4x4xf32> to vector<4x4xf32>
    %cst_91 = arith.constant dense<0.000000e+00> : vector<4x8xf32>
    %277 = tpu.matmul %276, %273, %cst_91 {dimension_numbers = #tpu.dot_dimension_numbers<[1], [1], [0], [0], [0, 0, 1, 0], [], []>} : vector<4x4xf32>, vector<8x4xf32>, vector<4x8xf32> -> vector<4x8xf32>
    %c0_92 = arith.constant 0 : index
    %c0_93 = arith.constant 0 : index
    %c0_94 = arith.constant 0 : index
    %278 = vector.load %arg16[%c0_92, %c0_93, %c0_94] : memref<3x8x17xf32, #tpu.memory_space<vmem>>, vector<1x8x17xf32>
    %279 = vector.shape_cast %278 : vector<1x8x17xf32> to vector<8x17xf32>
    %cst_95 = arith.constant dense<0.000000e+00> : vector<4x17xf32>
    %280 = tpu.matmul %277, %279, %cst_95 {dimension_numbers = #tpu.dot_dimension_numbers<[1], [0], [0], [1], [0, 0, 1, 1], [], []>} : vector<4x8xf32>, vector<8x17xf32>, vector<4x17xf32> -> vector<4x17xf32>
    %281 = arith.addf %274, %280 : vector<4x17xf32>
    %c1 = arith.constant 1 : index
    %c0_96 = arith.constant 0 : index
    %c0_97 = arith.constant 0 : index
    %282 = vector.load %arg15[%c1, %c0_96, %c0_97] : memref<3x4x4xf32, #tpu.memory_space<vmem>>, vector<1x4x4xf32>
    %283 = vector.shape_cast %282 : vector<1x4x4xf32> to vector<4x4xf32>
    %cst_98 = arith.constant dense<0.000000e+00> : vector<4x8xf32>
    %284 = tpu.matmul %283, %273, %cst_98 {dimension_numbers = #tpu.dot_dimension_numbers<[1], [1], [0], [0], [0, 0, 1, 0], [], []>} : vector<4x4xf32>, vector<8x4xf32>, vector<4x8xf32> -> vector<4x8xf32>
    %c1_99 = arith.constant 1 : index
    %c0_100 = arith.constant 0 : index
    %c0_101 = arith.constant 0 : index
    %285 = vector.load %arg16[%c1_99, %c0_100, %c0_101] : memref<3x8x17xf32, #tpu.memory_space<vmem>>, vector<1x8x17xf32>
    %286 = vector.shape_cast %285 : vector<1x8x17xf32> to vector<8x17xf32>
    %cst_102 = arith.constant dense<0.000000e+00> : vector<4x17xf32>
    %287 = tpu.matmul %284, %286, %cst_102 {dimension_numbers = #tpu.dot_dimension_numbers<[1], [0], [0], [1], [0, 0, 1, 1], [], []>} : vector<4x8xf32>, vector<8x17xf32>, vector<4x17xf32> -> vector<4x17xf32>
    %288 = arith.addf %281, %287 : vector<4x17xf32>
    %c2 = arith.constant 2 : index
    %c0_103 = arith.constant 0 : index
    %c0_104 = arith.constant 0 : index
    %289 = vector.load %arg15[%c2, %c0_103, %c0_104] : memref<3x4x4xf32, #tpu.memory_space<vmem>>, vector<1x4x4xf32>
    %290 = vector.shape_cast %289 : vector<1x4x4xf32> to vector<4x4xf32>
    %cst_105 = arith.constant dense<0.000000e+00> : vector<4x8xf32>
    %291 = tpu.matmul %290, %273, %cst_105 {dimension_numbers = #tpu.dot_dimension_numbers<[1], [1], [0], [0], [0, 0, 1, 0], [], []>} : vector<4x4xf32>, vector<8x4xf32>, vector<4x8xf32> -> vector<4x8xf32>
    %c2_106 = arith.constant 2 : index
    %c0_107 = arith.constant 0 : index
    %c0_108 = arith.constant 0 : index
    %292 = vector.load %arg16[%c2_106, %c0_107, %c0_108] : memref<3x8x17xf32, #tpu.memory_space<vmem>>, vector<1x8x17xf32>
    %293 = vector.shape_cast %292 : vector<1x8x17xf32> to vector<8x17xf32>
    %cst_109 = arith.constant dense<0.000000e+00> : vector<4x17xf32>
    %294 = tpu.matmul %291, %293, %cst_109 {dimension_numbers = #tpu.dot_dimension_numbers<[1], [0], [0], [1], [0, 0, 1, 1], [], []>} : vector<4x8xf32>, vector<8x17xf32>, vector<4x17xf32> -> vector<4x17xf32>
    %295 = arith.addf %288, %294 : vector<4x17xf32>
    %c0_110 = arith.constant 0 : index
    %c0_111 = arith.constant 0 : index
    %c0_112 = arith.constant 0 : index
    %296 = vector.load %arg18[%c0_110, %c0_111, %c0_112] : memref<1x4x17xf32, #tpu.memory_space<vmem>>, vector<1x4x17xf32>
    %297 = vector.shape_cast %296 : vector<1x4x17xf32> to vector<4x17xf32>
    %298 = vector.shape_cast %295 : vector<4x17xf32> to vector<1x4x17xf32>
    tpu.vector_store %arg18[%c0_110, %c0_111, %c0_112], %298 {strides = array<i32>} : memref<1x4x17xf32, #tpu.memory_space<vmem>>, vector<1x4x17xf32>,
    return
  }
  func.func @transform_0(%arg0: i32) -> (i32, i32, i32) {
    %c0_i32 = arith.constant 0 : i32
    %c0_i32_0 = arith.constant 0 : i32
    %c0_i32_1 = arith.constant 0 : i32
    return %arg0, %c0_i32, %c0_i32_0 : i32, i32, i32
  }
  func.func @transform_1(%arg0: i32) -> (i32, i32, i32) {
    %c0_i32 = arith.constant 0 : i32
    %c0_i32_0 = arith.constant 0 : i32
    %c0_i32_1 = arith.constant 0 : i32
    return %arg0, %c0_i32, %c0_i32_0 : i32, i32, i32
  }
  func.func @transform_2(%arg0: i32) -> (i32, i32) {
    %c0_i32 = arith.constant 0 : i32
    %c0_i32_0 = arith.constant 0 : i32
    %c0_i32_1 = arith.constant 0 : i32
    return %c0_i32, %c0_i32_0 : i32, i32
  }
  func.func @transform_3(%arg0: i32) -> (i32, i32) {
    %c0_i32 = arith.constant 0 : i32
    %c0_i32_0 = arith.constant 0 : i32
    %c0_i32_1 = arith.constant 0 : i32
    return %c0_i32, %c0_i32_0 : i32, i32
  }
  func.func @transform_4(%arg0: i32) -> (i32, i32) {
    %c0_i32 = arith.constant 0 : i32
    %c0_i32_0 = arith.constant 0 : i32
    %c0_i32_1 = arith.constant 0 : i32
    return %c0_i32, %c0_i32_0 : i32, i32
  }
  func.func @transform_5(%arg0: i32) -> (i32, i32) {
    %c0_i32 = arith.constant 0 : i32
    %c0_i32_0 = arith.constant 0 : i32
    %c0_i32_1 = arith.constant 0 : i32
    return %c0_i32, %c0_i32_0 : i32, i32
  }
  func.func @transform_6(%arg0: i32) -> (i32, i32) {
    %c0_i32 = arith.constant 0 : i32
    %c0_i32_0 = arith.constant 0 : i32
    %c0_i32_1 = arith.constant 0 : i32
    return %c0_i32, %c0_i32_0 : i32, i32
  }
  func.func @transform_7(%arg0: i32) -> (i32, i32) {
    %c0_i32 = arith.constant 0 : i32
    %c0_i32_0 = arith.constant 0 : i32
    %c0_i32_1 = arith.constant 0 : i32
    return %c0_i32, %c0_i32_0 : i32, i32
  }
  func.func @transform_8(%arg0: i32) -> (i32, i32) {
    %c0_i32 = arith.constant 0 : i32
    %c0_i32_0 = arith.constant 0 : i32
    %c0_i32_1 = arith.constant 0 : i32
    return %c0_i32, %c0_i32_0 : i32, i32
  }
  func.func @transform_9(%arg0: i32) -> (i32, i32) {
    %c0_i32 = arith.constant 0 : i32
    %c0_i32_0 = arith.constant 0 : i32
    %c0_i32_1 = arith.constant 0 : i32
    return %c0_i32, %c0_i32_0 : i32, i32
  }
  func.func @transform_10(%arg0: i32) -> (i32, i32) {
    %c0_i32 = arith.constant 0 : i32
    %c0_i32_0 = arith.constant 0 : i32
    %c0_i32_1 = arith.constant 0 : i32
    return %c0_i32, %c0_i32_0 : i32, i32
  }
  func.func @transform_11(%arg0: i32) -> (i32, i32) {
    %c0_i32 = arith.constant 0 : i32
    %c0_i32_0 = arith.constant 0 : i32
    %c0_i32_1 = arith.constant 0 : i32
    return %c0_i32, %c0_i32_0 : i32, i32
  }
  func.func @transform_12(%arg0: i32) -> (i32, i32) {
    %c0_i32 = arith.constant 0 : i32
    %c0_i32_0 = arith.constant 0 : i32
    %c0_i32_1 = arith.constant 0 : i32
    return %c0_i32, %c0_i32_0 : i32, i32
  }
  func.func @transform_13(%arg0: i32) -> (i32, i32) {
    %c0_i32 = arith.constant 0 : i32
    %c0_i32_0 = arith.constant 0 : i32
    %c0_i32_1 = arith.constant 0 : i32
    return %c0_i32, %c0_i32_0 : i32, i32
  }
  func.func @transform_14(%arg0: i32) -> (i32, i32, i32) {
    %c0_i32 = arith.constant 0 : i32
    %c0_i32_0 = arith.constant 0 : i32
    %c0_i32_1 = arith.constant 0 : i32
    %c0_i32_2 = arith.constant 0 : i32
    return %c0_i32, %c0_i32_0, %c0_i32_1 : i32, i32, i32
  }
  func.func @transform_15(%arg0: i32) -> (i32, i32, i32) {
    %c0_i32 = arith.constant 0 : i32
    %c0_i32_0 = arith.constant 0 : i32
    %c0_i32_1 = arith.constant 0 : i32
    %c0_i32_2 = arith.constant 0 : i32
    return %c0_i32, %c0_i32_0, %c0_i32_1 : i32, i32, i32
  }
  func.func @transform_16(%arg0: i32) -> (i32, i32) {
    %c0_i32 = arith.constant 0 : i32
    %c0_i32_0 = arith.constant 0 : i32
    %c0_i32_1 = arith.constant 0 : i32
    return %c0_i32, %c0_i32_0 : i32, i32
  }
  func.func @transform_17(%arg0: i32) -> (i32, i32, i32) {
    %c0_i32 = arith.constant 0 : i32
    %c0_i32_0 = arith.constant 0 : i32
    %c0_i32_1 = arith.constant 0 : i32
    return %arg0, %c0_i32, %c0_i32_0 : i32, i32, i32
  }
  func.func @transform_18(%arg0: i32) -> (i32, i32, i32) {
    %c0_i32 = arith.constant 0 : i32
    %c0_i32_0 = arith.constant 0 : i32
    %c0_i32_1 = arith.constant 0 : i32
    return %arg0, %c0_i32, %c0_i32_0 : i32, i32, i32
  }
}

</mosaic_0001>

<llo_original>
// kernel: unet_block_out_forward.1
$region0: #{unet_block_out_forward.1}
  #allocation0 [shape = 'u32[]', space=smem, size = 0x4, offset = 0x4, fixed_abs, tag = 'smem constant byte address 0x4 - core index']
  #allocation1 [shape = 'u32[144,128]{1,0:T(1,128)}', space=vmem, size = 0x12000, scoped, tag = 'internal scratch']
  #allocation2 [shape = 'f32[8,192]{1,0:T(8,128)}', space=vmem, size = 0x2000, scoped, tag = 'scratch operand']
  #allocation3 [shape = 'f32[8,64]{1,0:T(8,128)}', space=vmem, size = 0x1000, scoped, tag = 'scratch operand']
  %s0 = inlined_call_operand.vmem [shape: f32[2,8,8], index: 0, kind: input, shape index: {}]
  %s1 = inlined_call_operand.vmem [shape: f32[2,1,64], index: 1, kind: input, shape index: {}]
  %s2 = inlined_call_operand.vmem [shape: f32[1,8], index: 2, kind: input, shape index: {}]
  %s3 = inlined_call_operand.vmem [shape: f32[1,8], index: 3, kind: input, shape index: {}]
  %s4 = inlined_call_operand.vmem [shape: f32[8,192], index: 4, kind: input, shape index: {}]
  %s5 = inlined_call_operand.vmem [shape: f32[64,192], index: 5, kind: input, shape index: {}]
  %s6 = inlined_call_operand.vmem [shape: f32[1,192], index: 6, kind: input, shape index: {}]
  %s7 = inlined_call_operand.hbm [shape: f32[1,192], index: 7, kind: input, shape index: {}]
  %s8 = inlined_call_operand.hbm [shape: f32[64,192], index: 8, kind: input, shape index: {}]
  %s9 = inlined_call_operand.hbm [shape: f32[1,192], index: 9, kind: input, shape index: {}]
  %s10 = inlined_call_operand.hbm [shape: f32[64,64], index: 10, kind: input, shape index: {}]
  %s11 = inlined_call_operand.hbm [shape: f32[1,64], index: 11, kind: input, shape index: {}]
  %s12 = inlined_call_operand.hbm [shape: f32[64,4], index: 12, kind: input, shape index: {}]
  %s13 = inlined_call_operand.hbm [shape: f32[1,4], index: 13, kind: input, shape index: {}]
  %s14 = inlined_call_operand.vmem [shape: f32[3,4,4], index: 14, kind: input, shape index: {}]
  %s15 = inlined_call_operand.vmem [shape: f32[3,8,17], index: 15, kind: input, shape index: {}]
  %s16 = inlined_call_operand.hbm [shape: f32[4,17], index: 16, kind: input, shape index: {}]
  %s17 = inlined_call_operand.hbm [shape: f32[2,4,17], index: 17, kind: output, shape index: {0}]
  %s18 = inlined_call_operand.vmem [shape: f32[2,1,64], index: 18, kind: output, shape index: {1}]
  %19 = xla_tuple %s17, %s18
  %s20 = sld [smem:[#allocation0]]
  $region141: #{unet_block_out_forward.1} parent=0
    _
  %s22 = ssub.s32 1, %s20
  %s23 = scalar_select 0, %s22, %s20
  $region1: #{unet_block_out_forward.1} parent=0
    #allocation4 [shape = 'u8[1024]{0}', space=vmem, size = 0x400, scoped, tag = 'input window, operand 7, single buffered']
    #allocation5 [shape = 's32[2]{0}', space=sflag, size = 0x8, scoped, tag = 'scoped memory for unet_block_out_forward.1']
    #allocation6 [shape = 's32[2]{0}', space=sflag, size = 0x8, scoped, tag = 'scoped memory for unet_block_out_forward.1']
    #allocation7 [shape = 'u8[65536]{0}', space=vmem, size = 0x10000, scoped, tag = 'input window, operand 8, single buffered']
    #allocation8 [shape = 's32[1]{0}', space=sflag, size = 0x4, scoped, tag = 'scoped memory for unet_block_out_forward.1']
    #allocation9 [shape = 'u8[1024]{0}', space=vmem, size = 0x400, scoped, tag = 'input window, operand 9, single buffered']
    #allocation10 [shape = 'u8[32768]{0}', space=vmem, size = 0x8000, scoped, tag = 'input window, operand 10, single buffered']
    #allocation11 [shape = 's32[1]{0}', space=sflag, size = 0x4, scoped, tag = 'scoped memory for unet_block_out_forward.1']
    #allocation12 [shape = 'u8[512]{0}', space=vmem, size = 0x400, scoped, tag = 'input window, operand 11, single buffered']
    #allocation13 [shape = 'u8[32768]{0}', space=vmem, size = 0x8000, scoped, tag = 'input window, operand 12, single buffered']
    #allocation14 [shape = 's32[1]{0}', space=sflag, size = 0x4, scoped, tag = 'scoped memory for unet_block_out_forward.1']
    #allocation15 [shape = 'u8[512]{0}', space=vmem, size = 0x400, scoped, tag = 'input window, operand 13, single buffered']
    #allocation16 [shape = 'u8[2048]{0}', space=vmem, size = 0x800, scoped, tag = 'input window, operand 16, single buffered']
    #allocation17 [shape = 's32[1]{0}', space=sflag, size = 0x4, scoped, tag = 'scoped memory for unet_block_out_forward.1']
    #allocation18 [shape = 'u8[4096]{0}', space=vmem, size = 0x1000, scoped, tag = 'output window, operand 0']
    %24 = vsyncpa [#allocation5], 0
    %25 = vsyncpa [#allocation8], 0
    %26 = vsyncpa [#allocation11], 0
    %27 = vsyncpa [#allocation14], 0
    %28 = vsyncpa [#allocation17], 0
    %29 = vsyncpa [#allocation6], 0
    %s30 = scalar_lea.sflag [#allocation6], 1
    %31 = vsyncpa %s30, 0
    loop: start=0, step=1, limit=4
    $region2: #{unet_block_out_forward.1} parent=1 // loop_pre_header
      _
    $region3: #{unet_block_out_forward.1} parent=1 // loop_header
      %s33 = sphi 0, %s37
      %p34 = scmp.ge.s32.totalorder %s33, 4
      %s43 = sphi 0, %s45
      %s46 = sphi 0, %s43
      %s47 = sphi 0, %s46
      %s63 = sphi 0, %s47
      %s69 = sphi 0, %s71
      %s72 = sphi 0, %s69
      %s73 = sphi 0, %s72
      %s89 = sphi 0, %s73
      %s93 = sphi 0, %s93
      %s95 = sphi 0, %s93
      %s96 = sphi 0, %s95
      %s110 = sphi 0, %s96
      %s114 = sphi 0, %s114
      %s116 = sphi 0, %s114
      %s117 = sphi 0, %s116
      %s131 = sphi 0, %s117
      %s135 = sphi 0, %s135
      %s137 = sphi 0, %s135
      %s138 = sphi 0, %s137
      %s152 = sphi 0, %s138
      %s156 = sphi 0, %s156
      %s158 = sphi 0, %s156
      %s159 = sphi 0, %s158
      %s173 = sphi 0, %s159
      %s177 = sphi 0, %s177
      %s179 = sphi 0, %s177
      %s180 = sphi 0, %s179
      %s194 = sphi 0, %s180
      %s198 = sphi 0, %s198
      %s200 = sphi 0, %s198
      %s201 = sphi 0, %s200
      %s215 = sphi 0, %s201
      %s219 = sphi 0, %s219
      %s221 = sphi 0, %s219
      %s222 = sphi 0, %s221
      %s236 = sphi 0, %s222
      %s240 = sphi 0, %s240
      %s242 = sphi 0, %s240
      %s243 = sphi 0, %s242
      %s257 = sphi 0, %s243
      %s261 = sphi 0, %s261
      %s263 = sphi 0, %s261
      %s264 = sphi 0, %s263
      %s278 = sphi 0, %s264
      %s282 = sphi 0, %s282
      %s284 = sphi 0, %s282
      %s285 = sphi 0, %s284
      %s299 = sphi 0, %s285
      %s303 = sphi 0, %s303
      %s305 = sphi 0, %s303
      %s306 = sphi 0, %s305
      %s320 = sphi 0, %s306
      %s324 = sphi 0, %s324
      %s326 = sphi 0, %s324
      %s327 = sphi 0, %s326
      %s341 = sphi 0, %s327
      %s345 = sphi 0, %s345
      %s347 = sphi 0, %s345
      %s348 = sphi 0, %s347
      %s362 = sphi 0, %s348
      %s366 = sphi 0, %s366
      %s368 = sphi 0, %s366
      %s369 = sphi 0, %s368
      %s383 = sphi 0, %s369
      %s387 = sphi 0, %s387
      %s389 = sphi 0, %s387
      %s390 = sphi 0, %s389
      %s404 = sphi 0, %s390
      %s410 = sphi 0, %s412
      %s413 = sphi 0, %s410
      %s414 = sphi 0, %s413
      %s430 = sphi 0, %s414
      %s436 = sphi 0, %s438
      %s439 = sphi 0, %s436
      %s440 = sphi 0, %s439
      %s456 = sphi 0, %s440
    $region4: #{unet_block_out_forward.1} parent=1 // loop_header_branch
      %36 = sbr.rel (%p34) target = $region8
    $region5: #{unet_block_out_forward.1} parent=1 // loop_body
      %s38 = ssub.s32 %s33, 1
      %s39 = ssub.s32 %s33, 2
      %s40 = sadd.s32 %s33, 1
      %s41 = ssub.s32 %s33, %s40
      %p42 = scmp.eq.s32.totalorder %s41, 0
      %s44 = sadd.s32 %s43, 1
      %s45 = scalar_select %p42, %s43, %s44
      %p48 = pneg %p42
      %p49 = scmp.eq.s32.totalorder %s33, 1
      %p50 = por %p48, %p49
      %p51 = scmp.ne.s32.totalorder %s43, %s46
      %p52 = scmp.eq.s32.totalorder %s33, 0
      %p53 = por %p51, %p52
      %p54 = scmp.ne.s32.totalorder %s43, %s46
      %p55 = scmp.eq.s32.totalorder %s38, 1
      %p56 = por %p54, %p55
      %p57 = scmp.ne.s32.totalorder %s46, %s47
      %p58 = scmp.eq.s32.totalorder %s38, 0
      %p59 = por %p57, %p58
      %p60 = scmp.ne.s32.totalorder %s46, %s47
      %p61 = scmp.eq.s32.totalorder %s39, 1
      %p62 = por %p60, %p61
      %p64 = scmp.ne.s32.totalorder %s47, %s63
      %p65 = scmp.eq.s32.totalorder %s39, 0
      %p66 = por %p64, %p65
      %s67 = ssub.s32 %s33, %s40
      %p68 = scmp.eq.s32.totalorder %s67, 0
      %s70 = sadd.s32 %s69, 1
      %s71 = scalar_select %p68, %s69, %s70
      %p74 = pneg %p68
      %p75 = scmp.eq.s32.totalorder %s33, 1
      %p76 = por %p74, %p75
      %p77 = scmp.ne.s32.totalorder %s69, %s72
      %p78 = scmp.eq.s32.totalorder %s33, 0
      %p79 = por %p77, %p78
      %p80 = scmp.ne.s32.totalorder %s69, %s72
      %p81 = scmp.eq.s32.totalorder %s38, 1
      %p82 = por %p80, %p81
      %p83 = scmp.ne.s32.totalorder %s72, %s73
      %p84 = scmp.eq.s32.totalorder %s38, 0
      %p85 = por %p83, %p84
      %p86 = scmp.ne.s32.totalorder %s72, %s73
      %p87 = scmp.eq.s32.totalorder %s39, 1
      %p88 = por %p86, %p87
      %p90 = scmp.ne.s32.totalorder %s73, %s89
      %p91 = scmp.eq.s32.totalorder %s39, 0
      %p92 = por %p90, %p91
      %s94 = sadd.s32 %s93, 1
      %p97 = scmp.eq.s32.totalorder %s33, 1
      %p98 = scmp.ne.s32.totalorder %s93, %s95
      %p99 = scmp.eq.s32.totalorder %s33, 0
      %p100 = por %p98, %p99
      %p101 = scmp.ne.s32.totalorder %s93, %s95
      %p102 = scmp.eq.s32.totalorder %s38, 1
      %p103 = por %p101, %p102
      %p104 = scmp.ne.s32.totalorder %s95, %s96
      %p105 = scmp.eq.s32.totalorder %s38, 0
      %p106 = por %p104, %p105
      %p107 = scmp.ne.s32.totalorder %s95, %s96
      %p108 = scmp.eq.s32.totalorder %s39, 1
      %p109 = por %p107, %p108
      %p111 = scmp.ne.s32.totalorder %s96, %s110
      %p112 = scmp.eq.s32.totalorder %s39, 0
      %p113 = por %p111, %p112
      %s115 = sadd.s32 %s114, 1
      %p118 = scmp.eq.s32.totalorder %s33, 1
      %p119 = scmp.ne.s32.totalorder %s114, %s116
      %p120 = scmp.eq.s32.totalorder %s33, 0
      %p121 = por %p119, %p120
      %p122 = scmp.ne.s32.totalorder %s114, %s116
      %p123 = scmp.eq.s32.totalorder %s38, 1
      %p124 = por %p122, %p123
      %p125 = scmp.ne.s32.totalorder %s116, %s117
      %p126 = scmp.eq.s32.totalorder %s38, 0
      %p127 = por %p125, %p126
      %p128 = scmp.ne.s32.totalorder %s116, %s117
      %p129 = scmp.eq.s32.totalorder %s39, 1
      %p130 = por %p128, %p129
      %p132 = scmp.ne.s32.totalorder %s117, %s131
      %p133 = scmp.eq.s32.totalorder %s39, 0
      %p134 = por %p132, %p133
      %s136 = sadd.s32 %s135, 1
      %p139 = scmp.eq.s32.totalorder %s33, 1
      %p140 = scmp.ne.s32.totalorder %s135, %s137
      %p141 = scmp.eq.s32.totalorder %s33, 0
      %p142 = por %p140, %p141
      %p143 = scmp.ne.s32.totalorder %s135, %s137
      %p144 = scmp.eq.s32.totalorder %s38, 1
      %p145 = por %p143, %p144
      %p146 = scmp.ne.s32.totalorder %s137, %s138
      %p147 = scmp.eq.s32.totalorder %s38, 0
      %p148 = por %p146, %p147
      %p149 = scmp.ne.s32.totalorder %s137, %s138
      %p150 = scmp.eq.s32.totalorder %s39, 1
      %p151 = por %p149, %p150
      %p153 = scmp.ne.s32.totalorder %s138, %s152
      %p154 = scmp.eq.s32.totalorder %s39, 0
      %p155 = por %p153, %p154
      %s157 = sadd.s32 %s156, 1
      %p160 = scmp.eq.s32.totalorder %s33, 1
      %p161 = scmp.ne.s32.totalorder %s156, %s158
      %p162 = scmp.eq.s32.totalorder %s33, 0
      %p163 = por %p161, %p162
      %p164 = scmp.ne.s32.totalorder %s156, %s158
      %p165 = scmp.eq.s32.totalorder %s38, 1
      %p166 = por %p164, %p165
      %p167 = scmp.ne.s32.totalorder %s158, %s159
      %p168 = scmp.eq.s32.totalorder %s38, 0
      %p169 = por %p167, %p168
      %p170 = scmp.ne.s32.totalorder %s158, %s159
      %p171 = scmp.eq.s32.totalorder %s39, 1
      %p172 = por %p170, %p171
      %p174 = scmp.ne.s32.totalorder %s159, %s173
      %p175 = scmp.eq.s32.totalorder %s39, 0
      %p176 = por %p174, %p175
      %s178 = sadd.s32 %s177, 1
      %p181 = scmp.eq.s32.totalorder %s33, 1
      %p182 = scmp.ne.s32.totalorder %s177, %s179
      %p183 = scmp.eq.s32.totalorder %s33, 0
      %p184 = por %p182, %p183
      %p185 = scmp.ne.s32.totalorder %s177, %s179
      %p186 = scmp.eq.s32.totalorder %s38, 1
      %p187 = por %p185, %p186
      %p188 = scmp.ne.s32.totalorder %s179, %s180
      %p189 = scmp.eq.s32.totalorder %s38, 0
      %p190 = por %p188, %p189
      %p191 = scmp.ne.s32.totalorder %s179, %s180
      %p192 = scmp.eq.s32.totalorder %s39, 1
      %p193 = por %p191, %p192
      %p195 = scmp.ne.s32.totalorder %s180, %s194
      %p196 = scmp.eq.s32.totalorder %s39, 0
      %p197 = por %p195, %p196
      %s199 = sadd.s32 %s198, 1
      %p202 = scmp.eq.s32.totalorder %s33, 1
      %p203 = scmp.ne.s32.totalorder %s198, %s200
      %p204 = scmp.eq.s32.totalorder %s33, 0
      %p205 = por %p203, %p204
      %p206 = scmp.ne.s32.totalorder %s198, %s200
      %p207 = scmp.eq.s32.totalorder %s38, 1
      %p208 = por %p206, %p207
      %p209 = scmp.ne.s32.totalorder %s200, %s201
      %p210 = scmp.eq.s32.totalorder %s38, 0
      %p211 = por %p209, %p210
      %p212 = scmp.ne.s32.totalorder %s200, %s201
      %p213 = scmp.eq.s32.totalorder %s39, 1
      %p214 = por %p212, %p213
      %p216 = scmp.ne.s32.totalorder %s201, %s215
      %p217 = scmp.eq.s32.totalorder %s39, 0
      %p218 = por %p216, %p217
      %s220 = sadd.s32 %s219, 1
      %p223 = scmp.eq.s32.totalorder %s33, 1
      %p224 = scmp.ne.s32.totalorder %s219, %s221
      %p225 = scmp.eq.s32.totalorder %s33, 0
      %p226 = por %p224, %p225
      %p227 = scmp.ne.s32.totalorder %s219, %s221
      %p228 = scmp.eq.s32.totalorder %s38, 1
      %p229 = por %p227, %p228
      %p230 = scmp.ne.s32.totalorder %s221, %s222
      %p231 = scmp.eq.s32.totalorder %s38, 0
      %p232 = por %p230, %p231
      %p233 = scmp.ne.s32.totalorder %s221, %s222
      %p234 = scmp.eq.s32.totalorder %s39, 1
      %p235 = por %p233, %p234
      %p237 = scmp.ne.s32.totalorder %s222, %s236
      %p238 = scmp.eq.s32.totalorder %s39, 0
      %p239 = por %p237, %p238
      %s241 = sadd.s32 %s240, 1
      %p244 = scmp.eq.s32.totalorder %s33, 1
      %p245 = scmp.ne.s32.totalorder %s240, %s242
      %p246 = scmp.eq.s32.totalorder %s33, 0
      %p247 = por %p245, %p246
      %p248 = scmp.ne.s32.totalorder %s240, %s242
      %p249 = scmp.eq.s32.totalorder %s38, 1
      %p250 = por %p248, %p249
      %p251 = scmp.ne.s32.totalorder %s242, %s243
      %p252 = scmp.eq.s32.totalorder %s38, 0
      %p253 = por %p251, %p252
      %p254 = scmp.ne.s32.totalorder %s242, %s243
      %p255 = scmp.eq.s32.totalorder %s39, 1
      %p256 = por %p254, %p255
      %p258 = scmp.ne.s32.totalorder %s243, %s257
      %p259 = scmp.eq.s32.totalorder %s39, 0
      %p260 = por %p258, %p259
      %s262 = sadd.s32 %s261, 1
      %p265 = scmp.eq.s32.totalorder %s33, 1
      %p266 = scmp.ne.s32.totalorder %s261, %s263
      %p267 = scmp.eq.s32.totalorder %s33, 0
      %p268 = por %p266, %p267
      %p269 = scmp.ne.s32.totalorder %s261, %s263
      %p270 = scmp.eq.s32.totalorder %s38, 1
      %p271 = por %p269, %p270
      %p272 = scmp.ne.s32.totalorder %s263, %s264
      %p273 = scmp.eq.s32.totalorder %s38, 0
      %p274 = por %p272, %p273
      %p275 = scmp.ne.s32.totalorder %s263, %s264
      %p276 = scmp.eq.s32.totalorder %s39, 1
      %p277 = por %p275, %p276
      %p279 = scmp.ne.s32.totalorder %s264, %s278
      %p280 = scmp.eq.s32.totalorder %s39, 0
      %p281 = por %p279, %p280
      %s283 = sadd.s32 %s282, 1
      %p286 = scmp.eq.s32.totalorder %s33, 1
      %p287 = scmp.ne.s32.totalorder %s282, %s284
      %p288 = scmp.eq.s32.totalorder %s33, 0
      %p289 = por %p287, %p288
      %p290 = scmp.ne.s32.totalorder %s282, %s284
      %p291 = scmp.eq.s32.totalorder %s38, 1
      %p292 = por %p290, %p291
      %p293 = scmp.ne.s32.totalorder %s284, %s285
      %p294 = scmp.eq.s32.totalorder %s38, 0
      %p295 = por %p293, %p294
      %p296 = scmp.ne.s32.totalorder %s284, %s285
      %p297 = scmp.eq.s32.totalorder %s39, 1
      %p298 = por %p296, %p297
      %p300 = scmp.ne.s32.totalorder %s285, %s299
      %p301 = scmp.eq.s32.totalorder %s39, 0
      %p302 = por %p300, %p301
      %s304 = sadd.s32 %s303, 1
      %p307 = scmp.eq.s32.totalorder %s33, 1
      %p308 = scmp.ne.s32.totalorder %s303, %s305
      %p309 = scmp.eq.s32.totalorder %s33, 0
      %p310 = por %p308, %p309
      %p311 = scmp.ne.s32.totalorder %s303, %s305
      %p312 = scmp.eq.s32.totalorder %s38, 1
      %p313 = por %p311, %p312
      %p314 = scmp.ne.s32.totalorder %s305, %s306
      %p315 = scmp.eq.s32.totalorder %s38, 0
      %p316 = por %p314, %p315
      %p317 = scmp.ne.s32.totalorder %s305, %s306
      %p318 = scmp.eq.s32.totalorder %s39, 1
      %p319 = por %p317, %p318
      %p321 = scmp.ne.s32.totalorder %s306, %s320
      %p322 = scmp.eq.s32.totalorder %s39, 0
      %p323 = por %p321, %p322
      %s325 = sadd.s32 %s324, 1
      %p328 = scmp.eq.s32.totalorder %s33, 1
      %p329 = scmp.ne.s32.totalorder %s324, %s326
      %p330 = scmp.eq.s32.totalorder %s33, 0
      %p331 = por %p329, %p330
      %p332 = scmp.ne.s32.totalorder %s324, %s326
      %p333 = scmp.eq.s32.totalorder %s38, 1
      %p334 = por %p332, %p333
      %p335 = scmp.ne.s32.totalorder %s326, %s327
      %p336 = scmp.eq.s32.totalorder %s38, 0
      %p337 = por %p335, %p336
      %p338 = scmp.ne.s32.totalorder %s326, %s327
      %p339 = scmp.eq.s32.totalorder %s39, 1
      %p340 = por %p338, %p339
      %p342 = scmp.ne.s32.totalorder %s327, %s341
      %p343 = scmp.eq.s32.totalorder %s39, 0
      %p344 = por %p342, %p343
      %s346 = sadd.s32 %s345, 1
      %p349 = scmp.eq.s32.totalorder %s33, 1
      %p350 = scmp.ne.s32.totalorder %s345, %s347
      %p351 = scmp.eq.s32.totalorder %s33, 0
      %p352 = por %p350, %p351
      %p353 = scmp.ne.s32.totalorder %s345, %s347
      %p354 = scmp.eq.s32.totalorder %s38, 1
      %p355 = por %p353, %p354
      %p356 = scmp.ne.s32.totalorder %s347, %s348
      %p357 = scmp.eq.s32.totalorder %s38, 0
      %p358 = por %p356, %p357
      %p359 = scmp.ne.s32.totalorder %s347, %s348
      %p360 = scmp.eq.s32.totalorder %s39, 1
      %p361 = por %p359, %p360
      %p363 = scmp.ne.s32.totalorder %s348, %s362
      %p364 = scmp.eq.s32.totalorder %s39, 0
      %p365 = por %p363, %p364
      %s367 = sadd.s32 %s366, 1
      %p370 = scmp.eq.s32.totalorder %s33, 1
      %p371 = scmp.ne.s32.totalorder %s366, %s368
      %p372 = scmp.eq.s32.totalorder %s33, 0
      %p373 = por %p371, %p372
      %p374 = scmp.ne.s32.totalorder %s366, %s368
      %p375 = scmp.eq.s32.totalorder %s38, 1
      %p376 = por %p374, %p375
      %p377 = scmp.ne.s32.totalorder %s368, %s369
      %p378 = scmp.eq.s32.totalorder %s38, 0
      %p379 = por %p377, %p378
      %p380 = scmp.ne.s32.totalorder %s368, %s369
      %p381 = scmp.eq.s32.totalorder %s39, 1
      %p382 = por %p380, %p381
      %p384 = scmp.ne.s32.totalorder %s369, %s383
      %p385 = scmp.eq.s32.totalorder %s39, 0
      %p386 = por %p384, %p385
      %s388 = sadd.s32 %s387, 1
      %p391 = scmp.eq.s32.totalorder %s33, 1
      %p392 = scmp.ne.s32.totalorder %s387, %s389
      %p393 = scmp.eq.s32.totalorder %s33, 0
      %p394 = por %p392, %p393
      %p395 = scmp.ne.s32.totalorder %s387, %s389
      %p396 = scmp.eq.s32.totalorder %s38, 1
      %p397 = por %p395, %p396
      %p398 = scmp.ne.s32.totalorder %s389, %s390
      %p399 = scmp.eq.s32.totalorder %s38, 0
      %p400 = por %p398, %p399
      %p401 = scmp.ne.s32.totalorder %s389, %s390
      %p402 = scmp.eq.s32.totalorder %s39, 1
      %p403 = por %p401, %p402
      %p405 = scmp.ne.s32.totalorder %s390, %s404
      %p406 = scmp.eq.s32.totalorder %s39, 0
      %p407 = por %p405, %p406
      %s408 = ssub.s32 %s33, %s40
      %p409 = scmp.eq.s32.totalorder %s408, 0
      %s411 = sadd.s32 %s410, 1
      %s412 = scalar_select %p409, %s410, %s411
      %p415 = pneg %p409
      %p416 = scmp.eq.s32.totalorder %s33, 1
      %p417 = por %p415, %p416
      %p418 = scmp.ne.s32.totalorder %s410, %s413
      %p419 = scmp.eq.s32.totalorder %s33, 0
      %p420 = por %p418, %p419
      %p421 = scmp.ne.s32.totalorder %s410, %s413
      %p422 = scmp.eq.s32.totalorder %s38, 1
      %p423 = por %p421, %p422
      %p424 = scmp.ne.s32.totalorder %s413, %s414
      %p425 = scmp.eq.s32.totalorder %s38, 0
      %p426 = por %p424, %p425
      %p427 = scmp.ne.s32.totalorder %s413, %s414
      %p428 = scmp.eq.s32.totalorder %s39, 1
      %p429 = por %p427, %p428
      %p431 = scmp.ne.s32.totalorder %s414, %s430
      %p432 = scmp.eq.s32.totalorder %s39, 0
      %p433 = por %p431, %p432
      %s434 = ssub.s32 %s33, %s40
      %p435 = scmp.eq.s32.totalorder %s434, 0
      %s437 = sadd.s32 %s436, 1
      %s438 = scalar_select %p435, %s436, %s437
      %p441 = pneg %p435
      %p442 = scmp.eq.s32.totalorder %s33, 1
      %p443 = por %p441, %p442
      %p444 = scmp.ne.s32.totalorder %s436, %s439
      %p445 = scmp.eq.s32.totalorder %s33, 0
      %p446 = por %p444, %p445
      %p447 = scmp.ne.s32.totalorder %s436, %s439
      %p448 = scmp.eq.s32.totalorder %s38, 1
      %p449 = por %p447, %p448
      %p450 = scmp.ne.s32.totalorder %s439, %s440
      %p451 = scmp.eq.s32.totalorder %s38, 0
      %p452 = por %p450, %p451
      %p453 = scmp.ne.s32.totalorder %s439, %s440
      %p454 = scmp.eq.s32.totalorder %s39, 1
      %p455 = por %p453, %p454
      %p457 = scmp.ne.s32.totalorder %s440, %s456
      %p458 = scmp.eq.s32.totalorder %s39, 0
      %p459 = por %p457, %p458
      %p460 = scmp.le.s32.totalorder 1, %s33
      %p461 = scmp.lt.s32.totalorder %s33, 3
      %p462 = pnand %p460, %p461
      %p463 = pneg %p462
      // Predicated region
      $region9: #{unet_block_out_forward.1} parent=5 // pred_check
        _
      $region10: #{unet_block_out_forward.1} parent=5 // pred_check_branch
        %465 = sbr.rel (%p462) target = $region12
      $region11: #{unet_block_out_forward.1} parent=5 // pred_region
        %s466 = ssub.s32 %s33, 1
        // Predicated region
        $region13: #{unet_block_out_forward.1} parent=11 // pred_check
          %p467 = pneg %p106
        $region14: #{unet_block_out_forward.1} parent=11 // pred_check_branch
          %469 = sbr.rel (%p467) target = $region16
        $region15: #{unet_block_out_forward.1} parent=11 // pred_region
          _
        $region16: #{unet_block_out_forward.1} parent=11 // pred_fallthru
          _
        // Predicated region
        $region17: #{unet_block_out_forward.1} parent=11 // pred_check
          %p470 = pneg %p127
        $region18: #{unet_block_out_forward.1} parent=11 // pred_check_branch
          %472 = sbr.rel (%p470) target = $region20
        $region19: #{unet_block_out_forward.1} parent=11 // pred_region
          _
        $region20: #{unet_block_out_forward.1} parent=11 // pred_fallthru
          _
        // Predicated region
        $region21: #{unet_block_out_forward.1} parent=11 // pred_check
          %p473 = pneg %p148
        $region22: #{unet_block_out_forward.1} parent=11 // pred_check_branch
          %475 = sbr.rel (%p473) target = $region24
        $region23: #{unet_block_out_forward.1} parent=11 // pred_region
          _
        $region24: #{unet_block_out_forward.1} parent=11 // pred_fallthru
          _
        // Predicated region
        $region25: #{unet_block_out_forward.1} parent=11 // pred_check
          %p476 = pneg %p169
        $region26: #{unet_block_out_forward.1} parent=11 // pred_check_branch
          %478 = sbr.rel (%p476) target = $region28
        $region27: #{unet_block_out_forward.1} parent=11 // pred_region
          _
        $region28: #{unet_block_out_forward.1} parent=11 // pred_fallthru
          _
        // Predicated region
        $region29: #{unet_block_out_forward.1} parent=11 // pred_check
          %p479 = pneg %p190
        $region30: #{unet_block_out_forward.1} parent=11 // pred_check_branch
          %481 = sbr.rel (%p479) target = $region32
        $region31: #{unet_block_out_forward.1} parent=11 // pred_region
          _
        $region32: #{unet_block_out_forward.1} parent=11 // pred_fallthru
          _
        // Predicated region
        $region33: #{unet_block_out_forward.1} parent=11 // pred_check
          %p482 = pneg %p211
        $region34: #{unet_block_out_forward.1} parent=11 // pred_check_branch
          %484 = sbr.rel (%p482) target = $region36
        $region35: #{unet_block_out_forward.1} parent=11 // pred_region
          %s486 = ssub.s32 32, 32
          %487 = vsyncadd [#allocation5], %s486
          %s489 = sshll.u32 [#allocation4], 4
          %s490 = int_to_ptr.vmem [resolvable:$true] %s489
          %492 = dma.hbm_to_vmem [thread:$0]  %s7, 32, %s490, [#allocation5]
        $region36: #{unet_block_out_forward.1} parent=11 // pred_fallthru
          _
        // Predicated region
        $region37: #{unet_block_out_forward.1} parent=11 // pred_check
          %p493 = pneg %p232
        $region38: #{unet_block_out_forward.1} parent=11 // pred_check_branch
          %495 = sbr.rel (%p493) target = $region40
        $region39: #{unet_block_out_forward.1} parent=11 // pred_region
          %s497 = ssub.s32 2048, 2048
          %498 = vsyncadd [#allocation8], %s497
          %s499 = sshll.u32 [#allocation7], 4
          %s500 = int_to_ptr.vmem [resolvable:$true] %s499
          %505 = dma.hbm_to_vmem [thread:$0]  %s8, 2048, %s500, [#allocation8], 256, 256, 16
        $region40: #{unet_block_out_forward.1} parent=11 // pred_fallthru
          _
        // Predicated region
        $region41: #{unet_block_out_forward.1} parent=11 // pred_check
          %p506 = pneg %p253
        $region42: #{unet_block_out_forward.1} parent=11 // pred_check_branch
          %508 = sbr.rel (%p506) target = $region44
        $region43: #{unet_block_out_forward.1} parent=11 // pred_region
          %s510 = ssub.s32 32, 32
          %511 = vsyncadd [#allocation8], %s510
          %s513 = sshll.u32 [#allocation9], 4
          %s514 = int_to_ptr.vmem [resolvable:$true] %s513
          %516 = dma.hbm_to_vmem [thread:$0]  %s9, 32, %s514, [#allocation8]
        $region44: #{unet_block_out_forward.1} parent=11 // pred_fallthru
          _
        // Predicated region
        $region45: #{unet_block_out_forward.1} parent=11 // pred_check
          %p517 = pneg %p274
        $region46: #{unet_block_out_forward.1} parent=11 // pred_check_branch
          %519 = sbr.rel (%p517) target = $region48
        $region47: #{unet_block_out_forward.1} parent=11 // pred_region
          %s521 = ssub.s32 1024, 1024
          %522 = vsyncadd [#allocation11], %s521
          %s523 = sshll.u32 [#allocation10], 4
          %s524 = int_to_ptr.vmem [resolvable:$true] %s523
          %529 = dma.hbm_to_vmem [thread:$0]  %s10, 1024, %s524, [#allocation11], 128, 128, 8
        $region48: #{unet_block_out_forward.1} parent=11 // pred_fallthru
          _
        // Predicated region
        $region49: #{unet_block_out_forward.1} parent=11 // pred_check
          %p530 = pneg %p295
        $region50: #{unet_block_out_forward.1} parent=11 // pred_check_branch
          %532 = sbr.rel (%p530) target = $region52
        $region51: #{unet_block_out_forward.1} parent=11 // pred_region
          %s534 = ssub.s32 16, 16
          %535 = vsyncadd [#allocation11], %s534
          %s537 = sshll.u32 [#allocation12], 4
          %s538 = int_to_ptr.vmem [resolvable:$true] %s537
          %540 = dma.hbm_to_vmem [thread:$0]  %s11, 16, %s538, [#allocation11]
        $region52: #{unet_block_out_forward.1} parent=11 // pred_fallthru
          _
        // Predicated region
        $region53: #{unet_block_out_forward.1} parent=11 // pred_check
          %p541 = pneg %p316
        $region54: #{unet_block_out_forward.1} parent=11 // pred_check_branch
          %543 = sbr.rel (%p541) target = $region56
        $region55: #{unet_block_out_forward.1} parent=11 // pred_region
          %s545 = ssub.s32 1024, 1024
          %546 = vsyncadd [#allocation14], %s545
          %s547 = sshll.u32 [#allocation13], 4
          %s548 = int_to_ptr.vmem [resolvable:$true] %s547
          %553 = dma.hbm_to_vmem [thread:$0]  %s12, 1024, %s548, [#allocation14], 128, 128, 8
        $region56: #{unet_block_out_forward.1} parent=11 // pred_fallthru
          _
        // Predicated region
        $region57: #{unet_block_out_forward.1} parent=11 // pred_check
          %p554 = pneg %p337
        $region58: #{unet_block_out_forward.1} parent=11 // pred_check_branch
          %556 = sbr.rel (%p554) target = $region60
        $region59: #{unet_block_out_forward.1} parent=11 // pred_region
          %s558 = ssub.s32 16, 16
          %559 = vsyncadd [#allocation14], %s558
          %s561 = sshll.u32 [#allocation15], 4
          %s562 = int_to_ptr.vmem [resolvable:$true] %s561
          %564 = dma.hbm_to_vmem [thread:$0]  %s13, 16, %s562, [#allocation14]
        $region60: #{unet_block_out_forward.1} parent=11 // pred_fallthru
          _
        // Predicated region
        $region61: #{unet_block_out_forward.1} parent=11 // pred_check
          %p565 = pneg %p358
        $region62: #{unet_block_out_forward.1} parent=11 // pred_check_branch
          %567 = sbr.rel (%p565) target = $region64
        $region63: #{unet_block_out_forward.1} parent=11 // pred_region
          _
        $region64: #{unet_block_out_forward.1} parent=11 // pred_fallthru
          _
        // Predicated region
        $region65: #{unet_block_out_forward.1} parent=11 // pred_check
          %p568 = pneg %p379
        $region66: #{unet_block_out_forward.1} parent=11 // pred_check_branch
          %570 = sbr.rel (%p568) target = $region68
        $region67: #{unet_block_out_forward.1} parent=11 // pred_region
          _
        $region68: #{unet_block_out_forward.1} parent=11 // pred_fallthru
          _
        // Predicated region
        $region69: #{unet_block_out_forward.1} parent=11 // pred_check
          %p571 = pneg %p400
        $region70: #{unet_block_out_forward.1} parent=11 // pred_check_branch
          %573 = sbr.rel (%p571) target = $region72
        $region71: #{unet_block_out_forward.1} parent=11 // pred_region
          %s575 = ssub.s32 64, 64
          %576 = vsyncadd [#allocation17], %s575
          %s578 = sshll.u32 [#allocation16], 4
          %s579 = int_to_ptr.vmem [resolvable:$true] %s578
          %581 = dma.hbm_to_vmem [thread:$0]  %s16, 64, %s579, [#allocation17]
        $region72: #{unet_block_out_forward.1} parent=11 // pred_fallthru
          _
      $region12: #{unet_block_out_forward.1} parent=5 // pred_fallthru
        _
      %p582 = scmp.lt.s32.totalorder %s33, 2
      // Predicated region
      $region73: #{unet_block_out_forward.1} parent=5 // pred_check
        %p583 = pneg %p582
      $region74: #{unet_block_out_forward.1} parent=5 // pred_check_branch
        %585 = sbr.rel (%p583) target = $region76
      $region75: #{unet_block_out_forward.1} parent=5 // pred_region
        // Predicated region
        $region77: #{unet_block_out_forward.1} parent=75 // pred_check
          %p586 = pneg %p53
        $region78: #{unet_block_out_forward.1} parent=75 // pred_check_branch
          %588 = sbr.rel (%p586) target = $region80
        $region79: #{unet_block_out_forward.1} parent=75 // pred_region
          %p589 = scmp.lt.s32.totalorder %s33, 1
          %s590 = scalar_select %p589, %s33, 1
          %s591 = smul.addr %s590, 8
          %s592 = scalar_lea.vmem %s0, %s591
        $region80: #{unet_block_out_forward.1} parent=75 // pred_fallthru
          _
        // Predicated region
        $region81: #{unet_block_out_forward.1} parent=75 // pred_check
          %p593 = pneg %p79
        $region82: #{unet_block_out_forward.1} parent=75 // pred_check_branch
          %595 = sbr.rel (%p593) target = $region84
        $region83: #{unet_block_out_forward.1} parent=75 // pred_region
          %p596 = scmp.lt.s32.totalorder %s33, 1
          %s597 = scalar_select %p596, %s33, 1
          %s598 = scalar_lea.vmem %s1, %s597
        $region84: #{unet_block_out_forward.1} parent=75 // pred_fallthru
          _
      $region76: #{unet_block_out_forward.1} parent=5 // pred_fallthru
        _
      %p599 = scmp.le.s32.totalorder 1, %s33
      %p600 = scmp.lt.s32.totalorder %s33, 3
      %p601 = pnand %p599, %p600
      %p602 = pneg %p601
      // Predicated region
      $region85: #{unet_block_out_forward.1} parent=5 // pred_check
        _
      $region86: #{unet_block_out_forward.1} parent=5 // pred_check_branch
        %604 = sbr.rel (%p601) target = $region88
      $region87: #{unet_block_out_forward.1} parent=5 // pred_region
        %s605 = ssub.s32 %s33, 1
        // Predicated region
        $region89: #{unet_block_out_forward.1} parent=87 // pred_check
          %p606 = pneg %p211
        $region90: #{unet_block_out_forward.1} parent=87 // pred_check_branch
          %608 = sbr.rel (%p606) target = $region92
        $region91: #{unet_block_out_forward.1} parent=87 // pred_region
          %609 = dma.done [#allocation5], 32
        $region92: #{unet_block_out_forward.1} parent=87 // pred_fallthru
          _
        // Predicated region
        $region93: #{unet_block_out_forward.1} parent=87 // pred_check
          %p610 = pneg %p232
        $region94: #{unet_block_out_forward.1} parent=87 // pred_check_branch
          %612 = sbr.rel (%p610) target = $region96
        $region95: #{unet_block_out_forward.1} parent=87 // pred_region
          %613 = dma.done [#allocation8], 2048
        $region96: #{unet_block_out_forward.1} parent=87 // pred_fallthru
          _
        // Predicated region
        $region97: #{unet_block_out_forward.1} parent=87 // pred_check
          %p614 = pneg %p253
        $region98: #{unet_block_out_forward.1} parent=87 // pred_check_branch
          %616 = sbr.rel (%p614) target = $region100
        $region99: #{unet_block_out_forward.1} parent=87 // pred_region
          %617 = dma.done [#allocation8], 32
        $region100: #{unet_block_out_forward.1} parent=87 // pred_fallthru
          _
        // Predicated region
        $region101: #{unet_block_out_forward.1} parent=87 // pred_check
          %p618 = pneg %p274
        $region102: #{unet_block_out_forward.1} parent=87 // pred_check_branch
          %620 = sbr.rel (%p618) target = $region104
        $region103: #{unet_block_out_forward.1} parent=87 // pred_region
          %621 = dma.done [#allocation11], 1024
        $region104: #{unet_block_out_forward.1} parent=87 // pred_fallthru
          _
        // Predicated region
        $region105: #{unet_block_out_forward.1} parent=87 // pred_check
          %p622 = pneg %p295
        $region106: #{unet_block_out_forward.1} parent=87 // pred_check_branch
          %624 = sbr.rel (%p622) target = $region108
        $region107: #{unet_block_out_forward.1} parent=87 // pred_region
          %625 = dma.done [#allocation11], 16
        $region108: #{unet_block_out_forward.1} parent=87 // pred_fallthru
          _
        // Predicated region
        $region109: #{unet_block_out_forward.1} parent=87 // pred_check
          %p626 = pneg %p316
        $region110: #{unet_block_out_forward.1} parent=87 // pred_check_branch
          %628 = sbr.rel (%p626) target = $region112
        $region111: #{unet_block_out_forward.1} parent=87 // pred_region
          %629 = dma.done [#allocation14], 1024
        $region112: #{unet_block_out_forward.1} parent=87 // pred_fallthru
          _
        // Predicated region
        $region113: #{unet_block_out_forward.1} parent=87 // pred_check
          %p630 = pneg %p337
        $region114: #{unet_block_out_forward.1} parent=87 // pred_check_branch
          %632 = sbr.rel (%p630) target = $region116
        $region115: #{unet_block_out_forward.1} parent=87 // pred_region
          %633 = dma.done [#allocation14], 16
        $region116: #{unet_block_out_forward.1} parent=87 // pred_fallthru
          _
        // Predicated region
        $region117: #{unet_block_out_forward.1} parent=87 // pred_check
          %p634 = pneg %p400
        $region118: #{unet_block_out_forward.1} parent=87 // pred_check_branch
          %636 = sbr.rel (%p634) target = $region120
        $region119: #{unet_block_out_forward.1} parent=87 // pred_region
          %637 = dma.done [#allocation17], 64
        $region120: #{unet_block_out_forward.1} parent=87 // pred_fallthru
          _
        %p638 = scmp.lt.s32.totalorder %s38, 1
        %s639 = scalar_select %p638, %s38, 1
        %s640 = smul.addr %s639, 8
        %s641 = scalar_lea.vmem %s0, %s640
        %p642 = pneg %p59
        %p643 = pneg %p56
        %p644 = scmp.lt.s32.totalorder %s38, 1
        %s645 = scalar_select %p644, %s38, 1
        %s646 = scalar_lea.vmem %s1, %s645
        %p647 = pneg %p85
        %p648 = pneg %p82
        %p649 = pneg %p106
        %p650 = pneg %p103
        %p651 = pneg %p127
        %p652 = pneg %p124
        %p653 = pneg %p148
        %p654 = pneg %p145
        %p655 = pneg %p169
        %p656 = pneg %p166
        %p657 = pneg %p190
        %p658 = pneg %p187
        %p659 = pneg %p211
        %p660 = pneg %p208
        %p661 = pneg %p232
        %p662 = pneg %p229
        %p663 = pneg %p253
        %p664 = pneg %p250
        %p665 = pneg %p274
        %p666 = pneg %p271
        %p667 = pneg %p295
        %p668 = pneg %p292
        %p669 = pneg %p316
        %p670 = pneg %p313
        %p671 = pneg %p337
        %p672 = pneg %p334
        %p673 = pneg %p358
        %p674 = pneg %p355
        %p675 = pneg %p379
        %p676 = pneg %p376
        %p677 = pneg %p400
        %p678 = pneg %p397
        %p679 = pneg %p426
        %p680 = pneg %p423
        %s681 = sand.u32 %s413, 1
        %s682 = scalar_lea.sflag [#allocation6], %s681
        %s683 = sand.u32 %s413, 1
        %s684 = smul.addr %s683, 4
        %s685 = scalar_lea.vmem [#allocation18], %s684
        %p686 = pneg %p452
        %p687 = pneg %p449
        %p688 = scmp.lt.s32.totalorder %s38, 1
        %s689 = scalar_select %p688, %s38, 1
        %s690 = scalar_lea.vmem %s18, %s689
        %p691 = scmp.lt.s32.totalorder %s38, 1
        %s692 = scalar_select %p691, %s38, 1
        %s693 = smul.addr %s692, 8
        %s694 = scalar_lea.vmem %s0, %s693
        %p695 = scmp.lt.s32.totalorder %s38, 1
        %s696 = scalar_select %p695, %s38, 1
        %s697 = scalar_lea.vmem %s1, %s696
        %p698 = scmp.lt.s32.totalorder %s38, 1
        %s699 = scalar_select %p698, %s38, 1
        %s700 = scalar_lea.vmem %s18, %s699
        %v701 = vld [vmem:[%s694] sm:$0xff]
        %v702 = vld [vmem:[%s2] sm:$0x1]
        %v704 = vlaneseq
        %v705 = vshrl.u32 %v704, 7
        %v706 = vsub.s32 0, %v705
        %v707 = vrot.slane %v702, %v706
        %v709 = vmul.f32 %v701, %v707
        %v710 = vld [vmem:[%s3] sm:$0x1]
        %v712 = vlaneseq
        %v713 = vshrl.u32 %v712, 7
        %v714 = vsub.s32 0, %v713
        %v715 = vrot.slane %v710, %v714
        %v717 = vadd.f32 %v709, %v715
        %v718 = vmax.f32 %v717, 0.0
        %v719 = vld [vmem:[%s4] sm:$0xff]
        %v720 = vld [vmem:[%s4 + $0x8] sm:$0xff]
        %v721 = vld [vmem:[%s6] sm:$0x3]
        %v723 = vlaneseq
        %v724 = vshrl.u32 %v723, 7
        %v725 = vsub.s32 0, %v724
        %v726 = vrot.slane %v721, %v725
        %v727 = vlaneseq
        %v728 = vshrl.u32 %v727, 7
        %v729 = vsub.s32 1, %v728
        %v730 = vrot.slane %v721, %v729
        %vm733 = vcmask 64512
        %v735 = vsel %vm733, %v718, 0
        %737 = vmatprep.subr.mxu0 %v720
        %738 = vmatpush1.msra.mxu0 %v719
        %739 = vmatprep.subr.mxu0 0.0
        %740 = vmatpush1.msra.mxu0 0.0
        %741 = vmatprep.subr.mxu0 0.0
        %742 = vmatpush1.msra.mxu0 0.0
        %743 = vmatprep.subr.mxu0 0.0
        %744 = vmatpush1.msra.mxu0 0.0
        %745 = vmatprep.subr.mxu0 0.0
        %746 = vmatpush1.msra.mxu0 0.0
        %747 = vmatprep.subr.mxu0 0.0
        %748 = vmatpush1.msra.mxu0 0.0
        %749 = vmatprep.subr.mxu0 0.0
        %750 = vmatpush1.msra.mxu0 0.0
        %751 = vmatprep.subr.mxu0 0.0
        %752 = vmatpush1.msra.mxu0 0.0
        %753 = vmatprep.subr.mxu0 0.0
        %754 = vmatpush1.msra.mxu0 0.0
        %755 = vmatprep.subr.mxu0 0.0
        %756 = vmatpush1.msra.mxu0 0.0
        %757 = vmatprep.subr.mxu0 0.0
        %758 = vmatpush1.msra.mxu0 0.0
        %759 = vmatprep.subr.mxu0 0.0
        %760 = vmatpush1.msra.mxu0 0.0
        %761 = vmatprep.subr.mxu0 0.0
        %762 = vmatpush1.msra.mxu0 0.0
        %763 = vmatprep.subr.mxu0 0.0
        %764 = vmatpush1.msra.mxu0 0.0
        %765 = vmatprep.subr.mxu0 0.0
        %766 = vmatpush1.msra.mxu0 0.0
        %767 = vmatprep.subr.mxu0 0.0
        %768 = vmatpush1.msra.mxu0 0.0
        %769 = vmatprep.subr.mxu0 0.0
        %770 = vmatpush1.msra.mxu0 0.0
        %771 = vmatprep.subr.mxu0 0.0
        %772 = vmatpush1.msra.mxu0 0.0
        %773 = vmatprep.subr.mxu0 0.0
        %774 = vmatpush1.msra.mxu0 0.0
        %775 = vmatprep.subr.mxu0 0.0
        %776 = vmatpush1.msra.mxu0 0.0
        %777 = vmatprep.subr.mxu0 0.0
        %778 = vmatpush1.msra.mxu0 0.0
        %779 = vmatprep.subr.mxu0 0.0
        %780 = vmatpush1.msra.mxu0 0.0
        %781 = vmatprep.subr.mxu0 0.0
        %782 = vmatpush1.msra.mxu0 0.0
        %783 = vmatprep.subr.mxu0 0.0
        %784 = vmatpush1.msra.mxu0 0.0
        %785 = vmatprep.subr.mxu0 0.0
        %786 = vmatpush1.msra.mxu0 0.0
        %787 = vmatprep.subr.mxu0 0.0
        %788 = vmatpush1.msra.mxu0 0.0
        %789 = vmatprep.subr.mxu0 0.0
        %790 = vmatpush1.msra.mxu0 0.0
        %791 = vmatprep.subr.mxu0 0.0
        %792 = vmatpush1.msra.mxu0 0.0
        %793 = vmatprep.subr.mxu0 0.0
        %794 = vmatpush1.msra.mxu0 0.0
        %795 = vmatprep.subr.mxu0 0.0
        %796 = vmatpush1.msra.mxu0 0.0
        %797 = vmatprep.subr.mxu0 0.0
        %798 = vmatpush1.msra.mxu0 0.0
        %799 = vmatprep.subr.mxu0 0.0
        %800 = vmatpush1.msra.mxu0 0.0
        %801 = vmatprep.mubr.f32.mxu0 0.0
        %802 = vmatmul.mubr.f32.gmra.mrb[0].mxu0 %v735
        %v803 = vpop.f32.mrb[0].mxu0
        %v804 = vadd.f32 %v726, %v803
        %v805 = vpop.f32.mrb[0].mxu0
        %v806 = vadd.f32 %v730, %v805
        %807 = vdwg.mxu0
        %808 = vst [vmem:[#allocation2] sm:$0xff] %v804
        %vm809 = vcmask 523264
        %810 = vst.msk [vmem:[#allocation2 + $0x8] sm:$0xff] %vm809, %v806
        %v811 = vld [vmem:[%s5] sm:$0xff]
        %v812 = vld [vmem:[%s5 + $0x8] sm:$0xff]
        %v813 = vld [vmem:[%s5 + $0x10] sm:$0xff]
        %v814 = vld [vmem:[%s5 + $0x18] sm:$0xff]
        %v815 = vld [vmem:[%s5 + $0x20] sm:$0xff]
        %v816 = vld [vmem:[%s5 + $0x28] sm:$0xff]
        %v817 = vld [vmem:[%s5 + $0x30] sm:$0xff]
        %v818 = vld [vmem:[%s5 + $0x38] sm:$0xff]
        %v819 = vld [vmem:[%s5 + $0x40] sm:$0xff]
        %v820 = vld [vmem:[%s5 + $0x48] sm:$0xff]
        %v821 = vld [vmem:[%s5 + $0x50] sm:$0xff]
        %v822 = vld [vmem:[%s5 + $0x58] sm:$0xff]
        %v823 = vld [vmem:[%s5 + $0x60] sm:$0xff]
        %v824 = vld [vmem:[%s5 + $0x68] sm:$0xff]
        %v825 = vld [vmem:[%s5 + $0x70] sm:$0xff]
        %v826 = vld [vmem:[%s5 + $0x78] sm:$0xff]
        %v827 = vld [vmem:[#allocation4] sm:$0x3]
        %v828 = vld [vmem:[%s697] sm:$0x1]
        %v829 = vld [vmem:[#allocation2] ss:$8 sm:$0x3]
        %v831 = vlaneseq
        %v832 = vshrl.u32 %v831, 7
        %v833 = vsub.s32 0, %v832
        %v834 = vrot.slane %v827, %v833
        %v835 = vlaneseq
        %v836 = vshrl.u32 %v835, 7
        %v837 = vsub.s32 1, %v836
        %v838 = vrot.slane %v827, %v837
        %v842 = vsel %vm809, %v828, 0
        %844 = vmatprep.subr.mxu0 %v812
        %845 = vmatpush1.msra.mxu0 %v811
        %846 = vmatprep.subr.mxu0 %v814
        %847 = vmatpush1.msra.mxu0 %v813
        %848 = vmatprep.subr.mxu0 %v816
        %849 = vmatpush1.msra.mxu0 %v815
        %850 = vmatprep.subr.mxu0 %v818
        %851 = vmatpush1.msra.mxu0 %v817
        %852 = vmatprep.subr.mxu0 %v820
        %853 = vmatpush1.msra.mxu0 %v819
        %854 = vmatprep.subr.mxu0 %v822
        %855 = vmatpush1.msra.mxu0 %v821
        %856 = vmatprep.subr.mxu0 %v824
        %857 = vmatpush1.msra.mxu0 %v823
        %858 = vmatprep.subr.mxu0 %v826
        %859 = vmatpush1.msra.mxu0 %v825
        %860 = vmatprep.subr.mxu0 0.0
        %861 = vmatpush1.msra.mxu0 0.0
        %862 = vmatprep.subr.mxu0 0.0
        %863 = vmatpush1.msra.mxu0 0.0
        %864 = vmatprep.subr.mxu0 0.0
        %865 = vmatpush1.msra.mxu0 0.0
        %866 = vmatprep.subr.mxu0 0.0
        %867 = vmatpush1.msra.mxu0 0.0
        %868 = vmatprep.subr.mxu0 0.0
        %869 = vmatpush1.msra.mxu0 0.0
        %870 = vmatprep.subr.mxu0 0.0
        %871 = vmatpush1.msra.mxu0 0.0
        %872 = vmatprep.subr.mxu0 0.0
        %873 = vmatpush1.msra.mxu0 0.0
        %874 = vmatprep.subr.mxu0 0.0
        %875 = vmatpush1.msra.mxu0 0.0
        %876 = vmatprep.subr.mxu0 0.0
        %877 = vmatpush1.msra.mxu0 0.0
        %878 = vmatprep.subr.mxu0 0.0
        %879 = vmatpush1.msra.mxu0 0.0
        %880 = vmatprep.subr.mxu0 0.0
        %881 = vmatpush1.msra.mxu0 0.0
        %882 = vmatprep.subr.mxu0 0.0
        %883 = vmatpush1.msra.mxu0 0.0
        %884 = vmatprep.subr.mxu0 0.0
        %885 = vmatpush1.msra.mxu0 0.0
        %886 = vmatprep.subr.mxu0 0.0
        %887 = vmatpush1.msra.mxu0 0.0
        %888 = vmatprep.subr.mxu0 0.0
        %889 = vmatpush1.msra.mxu0 0.0
        %890 = vmatprep.subr.mxu0 0.0
        %891 = vmatpush1.msra.mxu0 0.0
        %892 = vmatprep.subr.mxu0 0.0
        %893 = vmatpush1.msra.mxu0 0.0
        %894 = vmatprep.subr.mxu0 0.0
        %895 = vmatpush1.msra.mxu0 0.0
        %896 = vmatprep.subr.mxu0 0.0
        %897 = vmatpush1.msra.mxu0 0.0
        %898 = vmatprep.subr.mxu0 0.0
        %899 = vmatpush1.msra.mxu0 0.0
        %900 = vmatprep.subr.mxu0 0.0
        %901 = vmatpush1.msra.mxu0 0.0
        %902 = vmatprep.subr.mxu0 0.0
        %903 = vmatpush1.msra.mxu0 0.0
        %904 = vmatprep.subr.mxu0 0.0
        %905 = vmatpush1.msra.mxu0 0.0
        %906 = vmatprep.subr.mxu0 0.0
        %907 = vmatpush1.msra.mxu0 0.0
        %908 = vmatprep.mubr.f32.mxu0 0.0
        %909 = vmatmul.mubr.f32.gmra.mrb[0].mxu0 %v842
        %v910 = vpop.f32.mrb[0].mxu0
        %v911 = vadd.f32 %v834, %v910
        %v912 = vpop.f32.mrb[0].mxu0
        %v913 = vadd.f32 %v838, %v912
        %914 = vdwg.mxu0
        %v915 = vadd.f32 %v829, %v911
        %v916 = vxor.u32 %v915, 2147483648
        %v917 = vmul.f32 %v916, 1.442695
        %v918 = vpow.pop %v917
        %v919 = vadd.f32 %v918, 1.0
        %v920 = vrcp.pop %v919
        %v921 = vmul.f32 1.0, %v920
        %v922 = vmul.f32 %v921, %v913
        %v924 = vrot.slane %v829, 1
        %v926 = vadd.f32 %v924, %v922
        %v927 = vtanh.pop %v926
        %v928 = vsub.f32 1.0, %v921
        %930 = vrot.lane.b32.xlu0 %v927, 64
        %v931 = vpop.permute.xlu0 %930
        %v933 = vmul.f32 %v928, %v931
        %934 = vrot.lane.b32.xlu0 %v828, 64
        %v935 = vpop.permute.xlu0 %934
        %v937 = vmul.f32 %v921, %v935
        %v938 = vadd.f32 %v933, %v937
        %v940 = vlaneseq
        %v941 = vshrl.u32 %v940, 7
        %v942 = vsub.s32 0, %v941
        %v943 = vrot.slane %v938, %v942
        %944 = vrot.lane.b32.xlu0 %v943, 64
        %v945 = vpop.permute.xlu0 %944
        %vm947 = vcmask 516096
        %948 = vst.msk [vmem:[#allocation3] sm:$0x1] %vm947, %v945
        %s949 = scalar_lea.vmem [#allocation2], 1
        %v950 = vld [vmem:[%s949] ss:$8 sm:$0x3]
        %v951 = vsel %vm809, %v945, 0
        %953 = vmatprep.subr.mxu0 %v812
        %954 = vmatpush1.msra.mxu0 %v811
        %955 = vmatprep.subr.mxu0 %v814
        %956 = vmatpush1.msra.mxu0 %v813
        %957 = vmatprep.subr.mxu0 %v816
        %958 = vmatpush1.msra.mxu0 %v815
        %959 = vmatprep.subr.mxu0 %v818
        %960 = vmatpush1.msra.mxu0 %v817
        %961 = vmatprep.subr.mxu0 %v820
        %962 = vmatpush1.msra.mxu0 %v819
        %963 = vmatprep.subr.mxu0 %v822
        %964 = vmatpush1.msra.mxu0 %v821
        %965 = vmatprep.subr.mxu0 %v824
        %966 = vmatpush1.msra.mxu0 %v823
        %967 = vmatprep.subr.mxu0 %v826
        %968 = vmatpush1.msra.mxu0 %v825
        %969 = vmatprep.subr.mxu0 0.0
        %970 = vmatpush1.msra.mxu0 0.0
        %971 = vmatprep.subr.mxu0 0.0
        %972 = vmatpush1.msra.mxu0 0.0
        %973 = vmatprep.subr.mxu0 0.0
        %974 = vmatpush1.msra.mxu0 0.0
        %975 = vmatprep.subr.mxu0 0.0
        %976 = vmatpush1.msra.mxu0 0.0
        %977 = vmatprep.subr.mxu0 0.0
        %978 = vmatpush1.msra.mxu0 0.0
        %979 = vmatprep.subr.mxu0 0.0
        %980 = vmatpush1.msra.mxu0 0.0
        %981 = vmatprep.subr.mxu0 0.0
        %982 = vmatpush1.msra.mxu0 0.0
        %983 = vmatprep.subr.mxu0 0.0
        %984 = vmatpush1.msra.mxu0 0.0
        %985 = vmatprep.subr.mxu0 0.0
        %986 = vmatpush1.msra.mxu0 0.0
        %987 = vmatprep.subr.mxu0 0.0
        %988 = vmatpush1.msra.mxu0 0.0
        %989 = vmatprep.subr.mxu0 0.0
        %990 = vmatpush1.msra.mxu0 0.0
        %991 = vmatprep.subr.mxu0 0.0
        %992 = vmatpush1.msra.mxu0 0.0
        %993 = vmatprep.subr.mxu0 0.0
        %994 = vmatpush1.msra.mxu0 0.0
        %995 = vmatprep.subr.mxu0 0.0
        %996 = vmatpush1.msra.mxu0 0.0
        %997 = vmatprep.subr.mxu0 0.0
        %998 = vmatpush1.msra.mxu0 0.0
        %999 = vmatprep.subr.mxu0 0.0
        %1000 = vmatpush1.msra.mxu0 0.0
        %1001 = vmatprep.subr.mxu0 0.0
        %1002 = vmatpush1.msra.mxu0 0.0
        %1003 = vmatprep.subr.mxu0 0.0
        %1004 = vmatpush1.msra.mxu0 0.0
        %1005 = vmatprep.subr.mxu0 0.0
        %1006 = vmatpush1.msra.mxu0 0.0
        %1007 = vmatprep.subr.mxu0 0.0
        %1008 = vmatpush1.msra.mxu0 0.0
        %1009 = vmatprep.subr.mxu0 0.0
        %1010 = vmatpush1.msra.mxu0 0.0
        %1011 = vmatprep.subr.mxu0 0.0
        %1012 = vmatpush1.msra.mxu0 0.0
        %1013 = vmatprep.subr.mxu0 0.0
        %1014 = vmatpush1.msra.mxu0 0.0
        %1015 = vmatprep.subr.mxu0 0.0
        %1016 = vmatpush1.msra.mxu0 0.0
        %1017 = vmatprep.mubr.f32.mxu0 0.0
        %1018 = vmatmul.mubr.f32.gmra.mrb[0].mxu0 %v951
        %v1019 = vpop.f32.mrb[0].mxu0
        %v1020 = vadd.f32 %v834, %v1019
        %v1021 = vpop.f32.mrb[0].mxu0
        %v1022 = vadd.f32 %v838, %v1021
        %1023 = vdwg.mxu0
        %v1024 = vadd.f32 %v950, %v1020
        %v1025 = vxor.u32 %v1024, 2147483648
        %v1026 = vmul.f32 %v1025, 1.442695
        %v1027 = vpow.pop %v1026
        %v1028 = vadd.f32 %v1027, 1.0
        %v1029 = vrcp.pop %v1028
        %v1030 = vmul.f32 1.0, %v1029
        %v1031 = vmul.f32 %v1030, %v1022
        %v1033 = vrot.slane %v950, 1
        %v1035 = vadd.f32 %v1033, %v1031
        %v1036 = vtanh.pop %v1035
        %v1037 = vsub.f32 1.0, %v1030
        %1039 = vrot.lane.b32.xlu0 %v1036, 64
        %v1040 = vpop.permute.xlu0 %1039
        %v1042 = vmul.f32 %v1037, %v1040
        %v1043 = vmul.f32 %v1030, %v938
        %v1044 = vadd.f32 %v1042, %v1043
        %v1046 = vlaneseq
        %v1047 = vshrl.u32 %v1046, 7
        %v1048 = vsub.s32 0, %v1047
        %v1049 = vrot.slane %v1044, %v1048
        %1050 = vrot.lane.b32.xlu0 %v1049, 64
        %v1051 = vpop.permute.xlu0 %1050
        %1053 = vst.msk [vmem:[#allocation3 + $0x1] sm:$0x1] %vm947, %v1051
        %s1054 = scalar_lea.vmem [#allocation2], 2
        %v1055 = vld [vmem:[%s1054] ss:$8 sm:$0x3]
        %v1056 = vsel %vm809, %v1051, 0
        %1058 = vmatprep.subr.mxu0 %v812
        %1059 = vmatpush1.msra.mxu0 %v811
        %1060 = vmatprep.subr.mxu0 %v814
        %1061 = vmatpush1.msra.mxu0 %v813
        %1062 = vmatprep.subr.mxu0 %v816
        %1063 = vmatpush1.msra.mxu0 %v815
        %1064 = vmatprep.subr.mxu0 %v818
        %1065 = vmatpush1.msra.mxu0 %v817
        %1066 = vmatprep.subr.mxu0 %v820
        %1067 = vmatpush1.msra.mxu0 %v819
        %1068 = vmatprep.subr.mxu0 %v822
        %1069 = vmatpush1.msra.mxu0 %v821
        %1070 = vmatprep.subr.mxu0 %v824
        %1071 = vmatpush1.msra.mxu0 %v823
        %1072 = vmatprep.subr.mxu0 %v826
        %1073 = vmatpush1.msra.mxu0 %v825
        %1074 = vmatprep.subr.mxu0 0.0
        %1075 = vmatpush1.msra.mxu0 0.0
        %1076 = vmatprep.subr.mxu0 0.0
        %1077 = vmatpush1.msra.mxu0 0.0
        %1078 = vmatprep.subr.mxu0 0.0
        %1079 = vmatpush1.msra.mxu0 0.0
        %1080 = vmatprep.subr.mxu0 0.0
        %1081 = vmatpush1.msra.mxu0 0.0
        %1082 = vmatprep.subr.mxu0 0.0
        %1083 = vmatpush1.msra.mxu0 0.0
        %1084 = vmatprep.subr.mxu0 0.0
        %1085 = vmatpush1.msra.mxu0 0.0
        %1086 = vmatprep.subr.mxu0 0.0
        %1087 = vmatpush1.msra.mxu0 0.0
        %1088 = vmatprep.subr.mxu0 0.0
        %1089 = vmatpush1.msra.mxu0 0.0
        %1090 = vmatprep.subr.mxu0 0.0
        %1091 = vmatpush1.msra.mxu0 0.0
        %1092 = vmatprep.subr.mxu0 0.0
        %1093 = vmatpush1.msra.mxu0 0.0
        %1094 = vmatprep.subr.mxu0 0.0
        %1095 = vmatpush1.msra.mxu0 0.0
        %1096 = vmatprep.subr.mxu0 0.0
        %1097 = vmatpush1.msra.mxu0 0.0
        %1098 = vmatprep.subr.mxu0 0.0
        %1099 = vmatpush1.msra.mxu0 0.0
        %1100 = vmatprep.subr.mxu0 0.0
        %1101 = vmatpush1.msra.mxu0 0.0
        %1102 = vmatprep.subr.mxu0 0.0
        %1103 = vmatpush1.msra.mxu0 0.0
        %1104 = vmatprep.subr.mxu0 0.0
        %1105 = vmatpush1.msra.mxu0 0.0
        %1106 = vmatprep.subr.mxu0 0.0
        %1107 = vmatpush1.msra.mxu0 0.0
        %1108 = vmatprep.subr.mxu0 0.0
        %1109 = vmatpush1.msra.mxu0 0.0
        %1110 = vmatprep.subr.mxu0 0.0
        %1111 = vmatpush1.msra.mxu0 0.0
        %1112 = vmatprep.subr.mxu0 0.0
        %1113 = vmatpush1.msra.mxu0 0.0
        %1114 = vmatprep.subr.mxu0 0.0
        %1115 = vmatpush1.msra.mxu0 0.0
        %1116 = vmatprep.subr.mxu0 0.0
        %1117 = vmatpush1.msra.mxu0 0.0
        %1118 = vmatprep.subr.mxu0 0.0
        %1119 = vmatpush1.msra.mxu0 0.0
        %1120 = vmatprep.subr.mxu0 0.0
        %1121 = vmatpush1.msra.mxu0 0.0
        %1122 = vmatprep.mubr.f32.mxu0 0.0
        %1123 = vmatmul.mubr.f32.gmra.mrb[0].mxu0 %v1056
        %v1124 = vpop.f32.mrb[0].mxu0
        %v1125 = vadd.f32 %v834, %v1124
        %v1126 = vpop.f32.mrb[0].mxu0
        %v1127 = vadd.f32 %v838, %v1126
        %1128 = vdwg.mxu0
        %v1129 = vadd.f32 %v1055, %v1125
        %v1130 = vxor.u32 %v1129, 2147483648
        %v1131 = vmul.f32 %v1130, 1.442695
        %v1132 = vpow.pop %v1131
        %v1133 = vadd.f32 %v1132, 1.0
        %v1134 = vrcp.pop %v1133
        %v1135 = vmul.f32 1.0, %v1134
        %v1136 = vmul.f32 %v1135, %v1127
        %v1138 = vrot.slane %v1055, 1
        %v1140 = vadd.f32 %v1138, %v1136
        %v1141 = vtanh.pop %v1140
        %v1142 = vsub.f32 1.0, %v1135
        %1144 = vrot.lane.b32.xlu0 %v1141, 64
        %v1145 = vpop.permute.xlu0 %1144
        %v1147 = vmul.f32 %v1142, %v1145
        %v1148 = vmul.f32 %v1135, %v1044
        %v1149 = vadd.f32 %v1147, %v1148
        %v1151 = vlaneseq
        %v1152 = vshrl.u32 %v1151, 7
        %v1153 = vsub.s32 0, %v1152
        %v1154 = vrot.slane %v1149, %v1153
        %1155 = vrot.lane.b32.xlu0 %v1154, 64
        %v1156 = vpop.permute.xlu0 %1155
        %1158 = vst.msk [vmem:[#allocation3 + $0x2] sm:$0x1] %vm947, %v1156
        %s1159 = scalar_lea.vmem [#allocation2], 3
        %v1160 = vld [vmem:[%s1159] ss:$8 sm:$0x3]
        %v1161 = vsel %vm809, %v1156, 0
        %1163 = vmatprep.subr.mxu0 %v812
        %1164 = vmatpush1.msra.mxu0 %v811
        %1165 = vmatprep.subr.mxu0 %v814
        %1166 = vmatpush1.msra.mxu0 %v813
        %1167 = vmatprep.subr.mxu0 %v816
        %1168 = vmatpush1.msra.mxu0 %v815
        %1169 = vmatprep.subr.mxu0 %v818
        %1170 = vmatpush1.msra.mxu0 %v817
        %1171 = vmatprep.subr.mxu0 %v820
        %1172 = vmatpush1.msra.mxu0 %v819
        %1173 = vmatprep.subr.mxu0 %v822
        %1174 = vmatpush1.msra.mxu0 %v821
        %1175 = vmatprep.subr.mxu0 %v824
        %1176 = vmatpush1.msra.mxu0 %v823
        %1177 = vmatprep.subr.mxu0 %v826
        %1178 = vmatpush1.msra.mxu0 %v825
        %1179 = vmatprep.subr.mxu0 0.0
        %1180 = vmatpush1.msra.mxu0 0.0
        %1181 = vmatprep.subr.mxu0 0.0
        %1182 = vmatpush1.msra.mxu0 0.0
        %1183 = vmatprep.subr.mxu0 0.0
        %1184 = vmatpush1.msra.mxu0 0.0
        %1185 = vmatprep.subr.mxu0 0.0
        %1186 = vmatpush1.msra.mxu0 0.0
        %1187 = vmatprep.subr.mxu0 0.0
        %1188 = vmatpush1.msra.mxu0 0.0
        %1189 = vmatprep.subr.mxu0 0.0
        %1190 = vmatpush1.msra.mxu0 0.0
        %1191 = vmatprep.subr.mxu0 0.0
        %1192 = vmatpush1.msra.mxu0 0.0
        %1193 = vmatprep.subr.mxu0 0.0
        %1194 = vmatpush1.msra.mxu0 0.0
        %1195 = vmatprep.subr.mxu0 0.0
        %1196 = vmatpush1.msra.mxu0 0.0
        %1197 = vmatprep.subr.mxu0 0.0
        %1198 = vmatpush1.msra.mxu0 0.0
        %1199 = vmatprep.subr.mxu0 0.0
        %1200 = vmatpush1.msra.mxu0 0.0
        %1201 = vmatprep.subr.mxu0 0.0
        %1202 = vmatpush1.msra.mxu0 0.0
        %1203 = vmatprep.subr.mxu0 0.0
        %1204 = vmatpush1.msra.mxu0 0.0
        %1205 = vmatprep.subr.mxu0 0.0
        %1206 = vmatpush1.msra.mxu0 0.0
        %1207 = vmatprep.subr.mxu0 0.0
        %1208 = vmatpush1.msra.mxu0 0.0
        %1209 = vmatprep.subr.mxu0 0.0
        %1210 = vmatpush1.msra.mxu0 0.0
        %1211 = vmatprep.subr.mxu0 0.0
        %1212 = vmatpush1.msra.mxu0 0.0
        %1213 = vmatprep.subr.mxu0 0.0
        %1214 = vmatpush1.msra.mxu0 0.0
        %1215 = vmatprep.subr.mxu0 0.0
        %1216 = vmatpush1.msra.mxu0 0.0
        %1217 = vmatprep.subr.mxu0 0.0
        %1218 = vmatpush1.msra.mxu0 0.0
        %1219 = vmatprep.subr.mxu0 0.0
        %1220 = vmatpush1.msra.mxu0 0.0
        %1221 = vmatprep.subr.mxu0 0.0
        %1222 = vmatpush1.msra.mxu0 0.0
        %1223 = vmatprep.subr.mxu0 0.0
        %1224 = vmatpush1.msra.mxu0 0.0
        %1225 = vmatprep.subr.mxu0 0.0
        %1226 = vmatpush1.msra.mxu0 0.0
        %1227 = vmatprep.mubr.f32.mxu0 0.0
        %1228 = vmatmul.mubr.f32.gmra.mrb[0].mxu0 %v1161
        %v1229 = vpop.f32.mrb[0].mxu0
        %v1230 = vadd.f32 %v834, %v1229
        %v1231 = vpop.f32.mrb[0].mxu0
        %v1232 = vadd.f32 %v838, %v1231
        %1233 = vdwg.mxu0
        %v1234 = vadd.f32 %v1160, %v1230
        %v1235 = vxor.u32 %v1234, 2147483648
        %v1236 = vmul.f32 %v1235, 1.442695
        %v1237 = vpow.pop %v1236
        %v1238 = vadd.f32 %v1237, 1.0
        %v1239 = vrcp.pop %v1238
        %v1240 = vmul.f32 1.0, %v1239
        %v1241 = vmul.f32 %v1240, %v1232
        %v1243 = vrot.slane %v1160, 1
        %v1245 = vadd.f32 %v1243, %v1241
        %v1246 = vtanh.pop %v1245
        %v1247 = vsub.f32 1.0, %v1240
        %1249 = vrot.lane.b32.xlu0 %v1246, 64
        %v1250 = vpop.permute.xlu0 %1249
        %v1252 = vmul.f32 %v1247, %v1250
        %v1253 = vmul.f32 %v1240, %v1149
        %v1254 = vadd.f32 %v1252, %v1253
        %v1256 = vlaneseq
        %v1257 = vshrl.u32 %v1256, 7
        %v1258 = vsub.s32 0, %v1257
        %v1259 = vrot.slane %v1254, %v1258
        %1260 = vrot.lane.b32.xlu0 %v1259, 64
        %v1261 = vpop.permute.xlu0 %1260
        %1263 = vst.msk [vmem:[#allocation3 + $0x3] sm:$0x1] %vm947, %v1261
        %s1264 = scalar_lea.vmem [#allocation2], 4
        %v1265 = vld [vmem:[%s1264] ss:$8 sm:$0x3]
        %v1266 = vsel %vm809, %v1261, 0
        %1268 = vmatprep.subr.mxu0 %v812
        %1269 = vmatpush1.msra.mxu0 %v811
        %1270 = vmatprep.subr.mxu0 %v814
        %1271 = vmatpush1.msra.mxu0 %v813
        %1272 = vmatprep.subr.mxu0 %v816
        %1273 = vmatpush1.msra.mxu0 %v815
        %1274 = vmatprep.subr.mxu0 %v818
        %1275 = vmatpush1.msra.mxu0 %v817
        %1276 = vmatprep.subr.mxu0 %v820
        %1277 = vmatpush1.msra.mxu0 %v819
        %1278 = vmatprep.subr.mxu0 %v822
        %1279 = vmatpush1.msra.mxu0 %v821
        %1280 = vmatprep.subr.mxu0 %v824
        %1281 = vmatpush1.msra.mxu0 %v823
        %1282 = vmatprep.subr.mxu0 %v826
        %1283 = vmatpush1.msra.mxu0 %v825
        %1284 = vmatprep.subr.mxu0 0.0
        %1285 = vmatpush1.msra.mxu0 0.0
        %1286 = vmatprep.subr.mxu0 0.0
        %1287 = vmatpush1.msra.mxu0 0.0
        %1288 = vmatprep.subr.mxu0 0.0
        %1289 = vmatpush1.msra.mxu0 0.0
        %1290 = vmatprep.subr.mxu0 0.0
        %1291 = vmatpush1.msra.mxu0 0.0
        %1292 = vmatprep.subr.mxu0 0.0
        %1293 = vmatpush1.msra.mxu0 0.0
        %1294 = vmatprep.subr.mxu0 0.0
        %1295 = vmatpush1.msra.mxu0 0.0
        %1296 = vmatprep.subr.mxu0 0.0
        %1297 = vmatpush1.msra.mxu0 0.0
        %1298 = vmatprep.subr.mxu0 0.0
        %1299 = vmatpush1.msra.mxu0 0.0
        %1300 = vmatprep.subr.mxu0 0.0
        %1301 = vmatpush1.msra.mxu0 0.0
        %1302 = vmatprep.subr.mxu0 0.0
        %1303 = vmatpush1.msra.mxu0 0.0
        %1304 = vmatprep.subr.mxu0 0.0
        %1305 = vmatpush1.msra.mxu0 0.0
        %1306 = vmatprep.subr.mxu0 0.0
        %1307 = vmatpush1.msra.mxu0 0.0
        %1308 = vmatprep.subr.mxu0 0.0
        %1309 = vmatpush1.msra.mxu0 0.0
        %1310 = vmatprep.subr.mxu0 0.0
        %1311 = vmatpush1.msra.mxu0 0.0
        %1312 = vmatprep.subr.mxu0 0.0
        %1313 = vmatpush1.msra.mxu0 0.0
        %1314 = vmatprep.subr.mxu0 0.0
        %1315 = vmatpush1.msra.mxu0 0.0
        %1316 = vmatprep.subr.mxu0 0.0
        %1317 = vmatpush1.msra.mxu0 0.0
        %1318 = vmatprep.subr.mxu0 0.0
        %1319 = vmatpush1.msra.mxu0 0.0
        %1320 = vmatprep.subr.mxu0 0.0
        %1321 = vmatpush1.msra.mxu0 0.0
        %1322 = vmatprep.subr.mxu0 0.0
        %1323 = vmatpush1.msra.mxu0 0.0
        %1324 = vmatprep.subr.mxu0 0.0
        %1325 = vmatpush1.msra.mxu0 0.0
        %1326 = vmatprep.subr.mxu0 0.0
        %1327 = vmatpush1.msra.mxu0 0.0
        %1328 = vmatprep.subr.mxu0 0.0
        %1329 = vmatpush1.msra.mxu0 0.0
        %1330 = vmatprep.subr.mxu0 0.0
        %1331 = vmatpush1.msra.mxu0 0.0
        %1332 = vmatprep.mubr.f32.mxu0 0.0
        %1333 = vmatmul.mubr.f32.gmra.mrb[0].mxu0 %v1266
        %v1334 = vpop.f32.mrb[0].mxu0
        %v1335 = vadd.f32 %v834, %v1334
        %v1336 = vpop.f32.mrb[0].mxu0
        %v1337 = vadd.f32 %v838, %v1336
        %1338 = vdwg.mxu0
        %v1339 = vadd.f32 %v1265, %v1335
        %v1340 = vxor.u32 %v1339, 2147483648
        %v1341 = vmul.f32 %v1340, 1.442695
        %v1342 = vpow.pop %v1341
        %v1343 = vadd.f32 %v1342, 1.0
        %v1344 = vrcp.pop %v1343
        %v1345 = vmul.f32 1.0, %v1344
        %v1346 = vmul.f32 %v1345, %v1337
        %v1348 = vrot.slane %v1265, 1
        %v1350 = vadd.f32 %v1348, %v1346
        %v1351 = vtanh.pop %v1350
        %v1352 = vsub.f32 1.0, %v1345
        %1354 = vrot.lane.b32.xlu0 %v1351, 64
        %v1355 = vpop.permute.xlu0 %1354
        %v1357 = vmul.f32 %v1352, %v1355
        %v1358 = vmul.f32 %v1345, %v1254
        %v1359 = vadd.f32 %v1357, %v1358
        %v1361 = vlaneseq
        %v1362 = vshrl.u32 %v1361, 7
        %v1363 = vsub.s32 0, %v1362
        %v1364 = vrot.slane %v1359, %v1363
        %1365 = vrot.lane.b32.xlu0 %v1364, 64
        %v1366 = vpop.permute.xlu0 %1365
        %1368 = vst.msk [vmem:[#allocation3 + $0x4] sm:$0x1] %vm947, %v1366
        %s1369 = scalar_lea.vmem [#allocation2], 5
        %v1370 = vld [vmem:[%s1369] ss:$8 sm:$0x3]
        %v1371 = vsel %vm809, %v1366, 0
        %1373 = vmatprep.subr.mxu0 %v812
        %1374 = vmatpush1.msra.mxu0 %v811
        %1375 = vmatprep.subr.mxu0 %v814
        %1376 = vmatpush1.msra.mxu0 %v813
        %1377 = vmatprep.subr.mxu0 %v816
        %1378 = vmatpush1.msra.mxu0 %v815
        %1379 = vmatprep.subr.mxu0 %v818
        %1380 = vmatpush1.msra.mxu0 %v817
        %1381 = vmatprep.subr.mxu0 %v820
        %1382 = vmatpush1.msra.mxu0 %v819
        %1383 = vmatprep.subr.mxu0 %v822
        %1384 = vmatpush1.msra.mxu0 %v821
        %1385 = vmatprep.subr.mxu0 %v824
        %1386 = vmatpush1.msra.mxu0 %v823
        %1387 = vmatprep.subr.mxu0 %v826
        %1388 = vmatpush1.msra.mxu0 %v825
        %1389 = vmatprep.subr.mxu0 0.0
        %1390 = vmatpush1.msra.mxu0 0.0
        %1391 = vmatprep.subr.mxu0 0.0
        %1392 = vmatpush1.msra.mxu0 0.0
        %1393 = vmatprep.subr.mxu0 0.0
        %1394 = vmatpush1.msra.mxu0 0.0
        %1395 = vmatprep.subr.mxu0 0.0
        %1396 = vmatpush1.msra.mxu0 0.0
        %1397 = vmatprep.subr.mxu0 0.0
        %1398 = vmatpush1.msra.mxu0 0.0
        %1399 = vmatprep.subr.mxu0 0.0
        %1400 = vmatpush1.msra.mxu0 0.0
        %1401 = vmatprep.subr.mxu0 0.0
        %1402 = vmatpush1.msra.mxu0 0.0
        %1403 = vmatprep.subr.mxu0 0.0
        %1404 = vmatpush1.msra.mxu0 0.0
        %1405 = vmatprep.subr.mxu0 0.0
        %1406 = vmatpush1.msra.mxu0 0.0
        %1407 = vmatprep.subr.mxu0 0.0
        %1408 = vmatpush1.msra.mxu0 0.0
        %1409 = vmatprep.subr.mxu0 0.0
        %1410 = vmatpush1.msra.mxu0 0.0
        %1411 = vmatprep.subr.mxu0 0.0
        %1412 = vmatpush1.msra.mxu0 0.0
        %1413 = vmatprep.subr.mxu0 0.0
        %1414 = vmatpush1.msra.mxu0 0.0
        %1415 = vmatprep.subr.mxu0 0.0
        %1416 = vmatpush1.msra.mxu0 0.0
        %1417 = vmatprep.subr.mxu0 0.0
        %1418 = vmatpush1.msra.mxu0 0.0
        %1419 = vmatprep.subr.mxu0 0.0
        %1420 = vmatpush1.msra.mxu0 0.0
        %1421 = vmatprep.subr.mxu0 0.0
        %1422 = vmatpush1.msra.mxu0 0.0
        %1423 = vmatprep.subr.mxu0 0.0
        %1424 = vmatpush1.msra.mxu0 0.0
        %1425 = vmatprep.subr.mxu0 0.0
        %1426 = vmatpush1.msra.mxu0 0.0
        %1427 = vmatprep.subr.mxu0 0.0
        %1428 = vmatpush1.msra.mxu0 0.0
        %1429 = vmatprep.subr.mxu0 0.0
        %1430 = vmatpush1.msra.mxu0 0.0
        %1431 = vmatprep.subr.mxu0 0.0
        %1432 = vmatpush1.msra.mxu0 0.0
        %1433 = vmatprep.subr.mxu0 0.0
        %1434 = vmatpush1.msra.mxu0 0.0
        %1435 = vmatprep.subr.mxu0 0.0
        %1436 = vmatpush1.msra.mxu0 0.0
        %1437 = vmatprep.mubr.f32.mxu0 0.0
        %1438 = vmatmul.mubr.f32.gmra.mrb[0].mxu0 %v1371
        %v1439 = vpop.f32.mrb[0].mxu0
        %v1440 = vadd.f32 %v834, %v1439
        %v1441 = vpop.f32.mrb[0].mxu0
        %v1442 = vadd.f32 %v838, %v1441
        %1443 = vdwg.mxu0
        %v1444 = vadd.f32 %v1370, %v1440
        %v1445 = vxor.u32 %v1444, 2147483648
        %v1446 = vmul.f32 %v1445, 1.442695
        %v1447 = vpow.pop %v1446
        %v1448 = vadd.f32 %v1447, 1.0
        %v1449 = vrcp.pop %v1448
        %v1450 = vmul.f32 1.0, %v1449
        %v1451 = vmul.f32 %v1450, %v1442
        %v1453 = vrot.slane %v1370, 1
        %v1455 = vadd.f32 %v1453, %v1451
        %v1456 = vtanh.pop %v1455
        %v1457 = vsub.f32 1.0, %v1450
        %1459 = vrot.lane.b32.xlu0 %v1456, 64
        %v1460 = vpop.permute.xlu0 %1459
        %v1462 = vmul.f32 %v1457, %v1460
        %v1463 = vmul.f32 %v1450, %v1359
        %v1464 = vadd.f32 %v1462, %v1463
        %v1466 = vlaneseq
        %v1467 = vshrl.u32 %v1466, 7
        %v1468 = vsub.s32 0, %v1467
        %v1469 = vrot.slane %v1464, %v1468
        %1470 = vrot.lane.b32.xlu0 %v1469, 64
        %v1471 = vpop.permute.xlu0 %1470
        %1473 = vst.msk [vmem:[#allocation3 + $0x5] sm:$0x1] %vm947, %v1471
        %s1474 = scalar_lea.vmem [#allocation2], 6
        %v1475 = vld [vmem:[%s1474] ss:$8 sm:$0x3]
        %v1476 = vsel %vm809, %v1471, 0
        %1478 = vmatprep.subr.mxu0 %v812
        %1479 = vmatpush1.msra.mxu0 %v811
        %1480 = vmatprep.subr.mxu0 %v814
        %1481 = vmatpush1.msra.mxu0 %v813
        %1482 = vmatprep.subr.mxu0 %v816
        %1483 = vmatpush1.msra.mxu0 %v815
        %1484 = vmatprep.subr.mxu0 %v818
        %1485 = vmatpush1.msra.mxu0 %v817
        %1486 = vmatprep.subr.mxu0 %v820
        %1487 = vmatpush1.msra.mxu0 %v819
        %1488 = vmatprep.subr.mxu0 %v822
        %1489 = vmatpush1.msra.mxu0 %v821
        %1490 = vmatprep.subr.mxu0 %v824
        %1491 = vmatpush1.msra.mxu0 %v823
        %1492 = vmatprep.subr.mxu0 %v826
        %1493 = vmatpush1.msra.mxu0 %v825
        %1494 = vmatprep.subr.mxu0 0.0
        %1495 = vmatpush1.msra.mxu0 0.0
        %1496 = vmatprep.subr.mxu0 0.0
        %1497 = vmatpush1.msra.mxu0 0.0
        %1498 = vmatprep.subr.mxu0 0.0
        %1499 = vmatpush1.msra.mxu0 0.0
        %1500 = vmatprep.subr.mxu0 0.0
        %1501 = vmatpush1.msra.mxu0 0.0
        %1502 = vmatprep.subr.mxu0 0.0
        %1503 = vmatpush1.msra.mxu0 0.0
        %1504 = vmatprep.subr.mxu0 0.0
        %1505 = vmatpush1.msra.mxu0 0.0
        %1506 = vmatprep.subr.mxu0 0.0
        %1507 = vmatpush1.msra.mxu0 0.0
        %1508 = vmatprep.subr.mxu0 0.0
        %1509 = vmatpush1.msra.mxu0 0.0
        %1510 = vmatprep.subr.mxu0 0.0
        %1511 = vmatpush1.msra.mxu0 0.0
        %1512 = vmatprep.subr.mxu0 0.0
        %1513 = vmatpush1.msra.mxu0 0.0
        %1514 = vmatprep.subr.mxu0 0.0
        %1515 = vmatpush1.msra.mxu0 0.0
        %1516 = vmatprep.subr.mxu0 0.0
        %1517 = vmatpush1.msra.mxu0 0.0
        %1518 = vmatprep.subr.mxu0 0.0
        %1519 = vmatpush1.msra.mxu0 0.0
        %1520 = vmatprep.subr.mxu0 0.0
        %1521 = vmatpush1.msra.mxu0 0.0
        %1522 = vmatprep.subr.mxu0 0.0
        %1523 = vmatpush1.msra.mxu0 0.0
        %1524 = vmatprep.subr.mxu0 0.0
        %1525 = vmatpush1.msra.mxu0 0.0
        %1526 = vmatprep.subr.mxu0 0.0
        %1527 = vmatpush1.msra.mxu0 0.0
        %1528 = vmatprep.subr.mxu0 0.0
        %1529 = vmatpush1.msra.mxu0 0.0
        %1530 = vmatprep.subr.mxu0 0.0
        %1531 = vmatpush1.msra.mxu0 0.0
        %1532 = vmatprep.subr.mxu0 0.0
        %1533 = vmatpush1.msra.mxu0 0.0
        %1534 = vmatprep.subr.mxu0 0.0
        %1535 = vmatpush1.msra.mxu0 0.0
        %1536 = vmatprep.subr.mxu0 0.0
        %1537 = vmatpush1.msra.mxu0 0.0
        %1538 = vmatprep.subr.mxu0 0.0
        %1539 = vmatpush1.msra.mxu0 0.0
        %1540 = vmatprep.subr.mxu0 0.0
        %1541 = vmatpush1.msra.mxu0 0.0
        %1542 = vmatprep.mubr.f32.mxu0 0.0
        %1543 = vmatmul.mubr.f32.gmra.mrb[0].mxu0 %v1476
        %v1544 = vpop.f32.mrb[0].mxu0
        %v1545 = vadd.f32 %v834, %v1544
        %v1546 = vpop.f32.mrb[0].mxu0
        %v1547 = vadd.f32 %v838, %v1546
        %1548 = vdwg.mxu0
        %v1549 = vadd.f32 %v1475, %v1545
        %v1550 = vxor.u32 %v1549, 2147483648
        %v1551 = vmul.f32 %v1550, 1.442695
        %v1552 = vpow.pop %v1551
        %v1553 = vadd.f32 %v1552, 1.0
        %v1554 = vrcp.pop %v1553
        %v1555 = vmul.f32 1.0, %v1554
        %v1556 = vmul.f32 %v1555, %v1547
        %v1558 = vrot.slane %v1475, 1
        %v1560 = vadd.f32 %v1558, %v1556
        %v1561 = vtanh.pop %v1560
        %v1562 = vsub.f32 1.0, %v1555
        %1564 = vrot.lane.b32.xlu0 %v1561, 64
        %v1565 = vpop.permute.xlu0 %1564
        %v1567 = vmul.f32 %v1562, %v1565
        %v1568 = vmul.f32 %v1555, %v1464
        %v1569 = vadd.f32 %v1567, %v1568
        %v1571 = vlaneseq
        %v1572 = vshrl.u32 %v1571, 7
        %v1573 = vsub.s32 0, %v1572
        %v1574 = vrot.slane %v1569, %v1573
        %1575 = vrot.lane.b32.xlu0 %v1574, 64
        %v1576 = vpop.permute.xlu0 %1575
        %1578 = vst.msk [vmem:[#allocation3 + $0x6] sm:$0x1] %vm947, %v1576
        %s1579 = scalar_lea.vmem [#allocation2], 7
        %v1580 = vld [vmem:[%s1579] ss:$8 sm:$0x3]
        %v1581 = vsel %vm809, %v1576, 0
        %1583 = vmatprep.subr.mxu0 %v812
        %1584 = vmatpush1.msra.mxu0 %v811
        %1585 = vmatprep.subr.mxu0 %v814
        %1586 = vmatpush1.msra.mxu0 %v813
        %1587 = vmatprep.subr.mxu0 %v816
        %1588 = vmatpush1.msra.mxu0 %v815
        %1589 = vmatprep.subr.mxu0 %v818
        %1590 = vmatpush1.msra.mxu0 %v817
        %1591 = vmatprep.subr.mxu0 %v820
        %1592 = vmatpush1.msra.mxu0 %v819
        %1593 = vmatprep.subr.mxu0 %v822
        %1594 = vmatpush1.msra.mxu0 %v821
        %1595 = vmatprep.subr.mxu0 %v824
        %1596 = vmatpush1.msra.mxu0 %v823
        %1597 = vmatprep.subr.mxu0 %v826
        %1598 = vmatpush1.msra.mxu0 %v825
        %1599 = vmatprep.subr.mxu0 0.0
        %1600 = vmatpush1.msra.mxu0 0.0
        %1601 = vmatprep.subr.mxu0 0.0
        %1602 = vmatpush1.msra.mxu0 0.0
        %1603 = vmatprep.subr.mxu0 0.0
        %1604 = vmatpush1.msra.mxu0 0.0
        %1605 = vmatprep.subr.mxu0 0.0
        %1606 = vmatpush1.msra.mxu0 0.0
        %1607 = vmatprep.subr.mxu0 0.0
        %1608 = vmatpush1.msra.mxu0 0.0
        %1609 = vmatprep.subr.mxu0 0.0
        %1610 = vmatpush1.msra.mxu0 0.0
        %1611 = vmatprep.subr.mxu0 0.0
        %1612 = vmatpush1.msra.mxu0 0.0
        %1613 = vmatprep.subr.mxu0 0.0
        %1614 = vmatpush1.msra.mxu0 0.0
        %1615 = vmatprep.subr.mxu0 0.0
        %1616 = vmatpush1.msra.mxu0 0.0
        %1617 = vmatprep.subr.mxu0 0.0
        %1618 = vmatpush1.msra.mxu0 0.0
        %1619 = vmatprep.subr.mxu0 0.0
        %1620 = vmatpush1.msra.mxu0 0.0
        %1621 = vmatprep.subr.mxu0 0.0
        %1622 = vmatpush1.msra.mxu0 0.0
        %1623 = vmatprep.subr.mxu0 0.0
        %1624 = vmatpush1.msra.mxu0 0.0
        %1625 = vmatprep.subr.mxu0 0.0
        %1626 = vmatpush1.msra.mxu0 0.0
        %1627 = vmatprep.subr.mxu0 0.0
        %1628 = vmatpush1.msra.mxu0 0.0
        %1629 = vmatprep.subr.mxu0 0.0
        %1630 = vmatpush1.msra.mxu0 0.0
        %1631 = vmatprep.subr.mxu0 0.0
        %1632 = vmatpush1.msra.mxu0 0.0
        %1633 = vmatprep.subr.mxu0 0.0
        %1634 = vmatpush1.msra.mxu0 0.0
        %1635 = vmatprep.subr.mxu0 0.0
        %1636 = vmatpush1.msra.mxu0 0.0
        %1637 = vmatprep.subr.mxu0 0.0
        %1638 = vmatpush1.msra.mxu0 0.0
        %1639 = vmatprep.subr.mxu0 0.0
        %1640 = vmatpush1.msra.mxu0 0.0
        %1641 = vmatprep.subr.mxu0 0.0
        %1642 = vmatpush1.msra.mxu0 0.0
        %1643 = vmatprep.subr.mxu0 0.0
        %1644 = vmatpush1.msra.mxu0 0.0
        %1645 = vmatprep.subr.mxu0 0.0
        %1646 = vmatpush1.msra.mxu0 0.0
        %1647 = vmatprep.mubr.f32.mxu0 0.0
        %1648 = vmatmul.mubr.f32.gmra.mrb[0].mxu0 %v1581
        %v1649 = vpop.f32.mrb[0].mxu0
        %v1650 = vadd.f32 %v834, %v1649
        %v1651 = vpop.f32.mrb[0].mxu0
        %v1652 = vadd.f32 %v838, %v1651
        %1653 = vdwg.mxu0
        %v1654 = vadd.f32 %v1580, %v1650
        %v1655 = vxor.u32 %v1654, 2147483648
        %v1656 = vmul.f32 %v1655, 1.442695
        %v1657 = vpow.pop %v1656
        %v1658 = vadd.f32 %v1657, 1.0
        %v1659 = vrcp.pop %v1658
        %v1660 = vmul.f32 1.0, %v1659
        %v1661 = vmul.f32 %v1660, %v1652
        %v1663 = vrot.slane %v1580, 1
        %v1665 = vadd.f32 %v1663, %v1661
        %v1666 = vtanh.pop %v1665
        %v1667 = vsub.f32 1.0, %v1660
        %1669 = vrot.lane.b32.xlu0 %v1666, 64
        %v1670 = vpop.permute.xlu0 %1669
        %v1672 = vmul.f32 %v1667, %v1670
        %v1673 = vmul.f32 %v1660, %v1569
        %v1674 = vadd.f32 %v1672, %v1673
        %v1676 = vlaneseq
        %v1677 = vshrl.u32 %v1676, 7
        %v1678 = vsub.s32 0, %v1677
        %v1679 = vrot.slane %v1674, %v1678
        %1680 = vrot.lane.b32.xlu0 %v1679, 64
        %v1681 = vpop.permute.xlu0 %1680
        %1683 = vst.msk [vmem:[#allocation3 + $0x7] sm:$0x1] %vm947, %v1681
        %1684 = vst.msk [vmem:[%s700] sm:$0x1] %vm947, %v1681
        %v1685 = vld [vmem:[#allocation3] sm:$0xff]
        %v1686 = vlaneseq
        %v1687 = vshrl.u32 %v1686, 7
        %v1688 = vlaneseq
        %v1689 = vand.u32 %v1688, 127
        %v1690 = vadd.s32 %v1687, %v1689
        %vm1691 = vcmp.eq.s32.totalorder %v1690, 7
        %v1692 = vsel %vm1691, 1, 0
        %v1693 = vcvt.s32.f32 %v1692
        %v1695 = vsel %vm733, %v1693, 0
        %1697 = vmatprep.subr.mxu0 0.0
        %1698 = vmatpush1.msra.mxu0 %v1685
        %1699 = vmatprep.subr.mxu0 0.0
        %1700 = vmatpush1.msra.mxu0 0.0
        %1701 = vmatprep.subr.mxu0 0.0
        %1702 = vmatpush1.msra.mxu0 0.0
        %1703 = vmatprep.subr.mxu0 0.0
        %1704 = vmatpush1.msra.mxu0 0.0
        %1705 = vmatprep.subr.mxu0 0.0
        %1706 = vmatpush1.msra.mxu0 0.0
        %1707 = vmatprep.subr.mxu0 0.0
        %1708 = vmatpush1.msra.mxu0 0.0
        %1709 = vmatprep.subr.mxu0 0.0
        %1710 = vmatpush1.msra.mxu0 0.0
        %1711 = vmatprep.subr.mxu0 0.0
        %1712 = vmatpush1.msra.mxu0 0.0
        %1713 = vmatprep.subr.mxu0 0.0
        %1714 = vmatpush1.msra.mxu0 0.0
        %1715 = vmatprep.subr.mxu0 0.0
        %1716 = vmatpush1.msra.mxu0 0.0
        %1717 = vmatprep.subr.mxu0 0.0
        %1718 = vmatpush1.msra.mxu0 0.0
        %1719 = vmatprep.subr.mxu0 0.0
        %1720 = vmatpush1.msra.mxu0 0.0
        %1721 = vmatprep.subr.mxu0 0.0
        %1722 = vmatpush1.msra.mxu0 0.0
        %1723 = vmatprep.subr.mxu0 0.0
        %1724 = vmatpush1.msra.mxu0 0.0
        %1725 = vmatprep.subr.mxu0 0.0
        %1726 = vmatpush1.msra.mxu0 0.0
        %1727 = vmatprep.subr.mxu0 0.0
        %1728 = vmatpush1.msra.mxu0 0.0
        %1729 = vmatprep.subr.mxu0 0.0
        %1730 = vmatpush1.msra.mxu0 0.0
        %1731 = vmatprep.subr.mxu0 0.0
        %1732 = vmatpush1.msra.mxu0 0.0
        %1733 = vmatprep.subr.mxu0 0.0
        %1734 = vmatpush1.msra.mxu0 0.0
        %1735 = vmatprep.subr.mxu0 0.0
        %1736 = vmatpush1.msra.mxu0 0.0
        %1737 = vmatprep.subr.mxu0 0.0
        %1738 = vmatpush1.msra.mxu0 0.0
        %1739 = vmatprep.subr.mxu0 0.0
        %1740 = vmatpush1.msra.mxu0 0.0
        %1741 = vmatprep.subr.mxu0 0.0
        %1742 = vmatpush1.msra.mxu0 0.0
        %1743 = vmatprep.subr.mxu0 0.0
        %1744 = vmatpush1.msra.mxu0 0.0
        %1745 = vmatprep.subr.mxu0 0.0
        %1746 = vmatpush1.msra.mxu0 0.0
        %1747 = vmatprep.subr.mxu0 0.0
        %1748 = vmatpush1.msra.mxu0 0.0
        %1749 = vmatprep.subr.mxu0 0.0
        %1750 = vmatpush1.msra.mxu0 0.0
        %1751 = vmatprep.subr.mxu0 0.0
        %1752 = vmatpush1.msra.mxu0 0.0
        %1753 = vmatprep.subr.mxu0 0.0
        %1754 = vmatpush1.msra.mxu0 0.0
        %1755 = vmatprep.subr.mxu0 0.0
        %1756 = vmatpush1.msra.mxu0 0.0
        %1757 = vmatprep.subr.mxu0 0.0
        %1758 = vmatpush1.msra.mxu0 0.0
        %1759 = vmatprep.subr.mxu0 0.0
        %1760 = vmatpush1.msra.mxu0 0.0
        %1761 = vmatprep.mubr.f32.mxu0 0.0
        %1762 = vmatmul.mubr.f32.gmra.mrb[0].mxu0 %v1695
        %v1763 = vpop.f32.mrb[0].mxu0
        %v1764 = vadd.f32 0.0, %v1763
        %v1765 = vpop.f32.mrb[0].mxu0
        %1766 = vdwg.mxu0
        %vm1767 = vcmp.lt.s32.totalorder %v1689, 32
        %v1768 = vsel %vm1767, %v1685, %v1764
        %v1769 = vld [vmem:[#allocation7] sm:$0xff]
        %v1770 = vld [vmem:[#allocation7 + $0x8] sm:$0xff]
        %v1771 = vld [vmem:[#allocation7 + $0x10] sm:$0xff]
        %v1772 = vld [vmem:[#allocation7 + $0x18] sm:$0xff]
        %v1773 = vld [vmem:[#allocation7 + $0x20] sm:$0xff]
        %v1774 = vld [vmem:[#allocation7 + $0x28] sm:$0xff]
        %v1775 = vld [vmem:[#allocation7 + $0x30] sm:$0xff]
        %v1776 = vld [vmem:[#allocation7 + $0x38] sm:$0xff]
        %v1777 = vld [vmem:[#allocation7 + $0x40] sm:$0xff]
        %v1778 = vld [vmem:[#allocation7 + $0x48] sm:$0xff]
        %v1779 = vld [vmem:[#allocation7 + $0x50] sm:$0xff]
        %v1780 = vld [vmem:[#allocation7 + $0x58] sm:$0xff]
        %v1781 = vld [vmem:[#allocation7 + $0x60] sm:$0xff]
        %v1782 = vld [vmem:[#allocation7 + $0x68] sm:$0xff]
        %v1783 = vld [vmem:[#allocation7 + $0x70] sm:$0xff]
        %v1784 = vld [vmem:[#allocation7 + $0x78] sm:$0xff]
        %v1785 = vld [vmem:[#allocation9] sm:$0x3]
        %v1787 = vlaneseq
        %v1788 = vshrl.u32 %v1787, 7
        %v1789 = vsub.s32 0, %v1788
        %v1790 = vrot.slane %v1785, %v1789
        %v1791 = vlaneseq
        %v1792 = vshrl.u32 %v1791, 7
        %v1793 = vsub.s32 1, %v1792
        %v1794 = vrot.slane %v1785, %v1793
        %v1798 = vsel %vm809, %v1768, 0
        %1800 = vmatprep.subr.mxu0 %v1770
        %1801 = vmatpush1.msra.mxu0 %v1769
        %1802 = vmatprep.subr.mxu0 %v1772
        %1803 = vmatpush1.msra.mxu0 %v1771
        %1804 = vmatprep.subr.mxu0 %v1774
        %1805 = vmatpush1.msra.mxu0 %v1773
        %1806 = vmatprep.subr.mxu0 %v1776
        %1807 = vmatpush1.msra.mxu0 %v1775
        %1808 = vmatprep.subr.mxu0 %v1778
        %1809 = vmatpush1.msra.mxu0 %v1777
        %1810 = vmatprep.subr.mxu0 %v1780
        %1811 = vmatpush1.msra.mxu0 %v1779
        %1812 = vmatprep.subr.mxu0 %v1782
        %1813 = vmatpush1.msra.mxu0 %v1781
        %1814 = vmatprep.subr.mxu0 %v1784
        %1815 = vmatpush1.msra.mxu0 %v1783
        %1816 = vmatprep.subr.mxu0 0.0
        %1817 = vmatpush1.msra.mxu0 0.0
        %1818 = vmatprep.subr.mxu0 0.0
        %1819 = vmatpush1.msra.mxu0 0.0
        %1820 = vmatprep.subr.mxu0 0.0
        %1821 = vmatpush1.msra.mxu0 0.0
        %1822 = vmatprep.subr.mxu0 0.0
        %1823 = vmatpush1.msra.mxu0 0.0
        %1824 = vmatprep.subr.mxu0 0.0
        %1825 = vmatpush1.msra.mxu0 0.0
        %1826 = vmatprep.subr.mxu0 0.0
        %1827 = vmatpush1.msra.mxu0 0.0
        %1828 = vmatprep.subr.mxu0 0.0
        %1829 = vmatpush1.msra.mxu0 0.0
        %1830 = vmatprep.subr.mxu0 0.0
        %1831 = vmatpush1.msra.mxu0 0.0
        %1832 = vmatprep.subr.mxu0 0.0
        %1833 = vmatpush1.msra.mxu0 0.0
        %1834 = vmatprep.subr.mxu0 0.0
        %1835 = vmatpush1.msra.mxu0 0.0
        %1836 = vmatprep.subr.mxu0 0.0
        %1837 = vmatpush1.msra.mxu0 0.0
        %1838 = vmatprep.subr.mxu0 0.0
        %1839 = vmatpush1.msra.mxu0 0.0
        %1840 = vmatprep.subr.mxu0 0.0
        %1841 = vmatpush1.msra.mxu0 0.0
        %1842 = vmatprep.subr.mxu0 0.0
        %1843 = vmatpush1.msra.mxu0 0.0
        %1844 = vmatprep.subr.mxu0 0.0
        %1845 = vmatpush1.msra.mxu0 0.0
        %1846 = vmatprep.subr.mxu0 0.0
        %1847 = vmatpush1.msra.mxu0 0.0
        %1848 = vmatprep.subr.mxu0 0.0
        %1849 = vmatpush1.msra.mxu0 0.0
        %1850 = vmatprep.subr.mxu0 0.0
        %1851 = vmatpush1.msra.mxu0 0.0
        %1852 = vmatprep.subr.mxu0 0.0
        %1853 = vmatpush1.msra.mxu0 0.0
        %1854 = vmatprep.subr.mxu0 0.0
        %1855 = vmatpush1.msra.mxu0 0.0
        %1856 = vmatprep.subr.mxu0 0.0
        %1857 = vmatpush1.msra.mxu0 0.0
        %1858 = vmatprep.subr.mxu0 0.0
        %1859 = vmatpush1.msra.mxu0 0.0
        %1860 = vmatprep.subr.mxu0 0.0
        %1861 = vmatpush1.msra.mxu0 0.0
        %1862 = vmatprep.subr.mxu0 0.0
        %1863 = vmatpush1.msra.mxu0 0.0
        %1864 = vmatprep.mubr.f32.mxu0 0.0
        %1865 = vmatmul.mubr.f32.gmra.mrb[0].mxu0 %v1798
        %v1866 = vpop.f32.mrb[0].mxu0
        %v1867 = vadd.f32 %v1790, %v1866
        %v1868 = vpop.f32.mrb[0].mxu0
        %v1869 = vadd.f32 %v1794, %v1868
        %1870 = vdwg.mxu0
        %1872 = vrot.lane.b32.xlu0 %v1867, 64
        %v1873 = vpop.permute.xlu0 %1872
        %v1874 = vsel %vm809, %v1867, 0
        %v1876 = vsel %vm809, %v1873, 0
        %1878 = vmatprep.subr.mxu0 0.0
        %1879 = vmatpush1.xpose.msra.mxu0 %v1876
        %1880 = vmatprep.subr.mxu0 0.0
        %1881 = vmatpush1.xpose.msra.mxu0 0.0
        %1882 = vmatprep.subr.mxu0 0.0
        %1883 = vmatpush1.xpose.msra.mxu0 0.0
        %1884 = vmatprep.subr.mxu0 0.0
        %1885 = vmatpush1.xpose.msra.mxu0 0.0
        %1886 = vmatprep.subr.mxu0 0.0
        %1887 = vmatpush1.xpose.msra.mxu0 0.0
        %1888 = vmatprep.subr.mxu0 0.0
        %1889 = vmatpush1.xpose.msra.mxu0 0.0
        %1890 = vmatprep.subr.mxu0 0.0
        %1891 = vmatpush1.xpose.msra.mxu0 0.0
        %1892 = vmatprep.subr.mxu0 0.0
        %1893 = vmatpush1.xpose.msra.mxu0 0.0
        %1894 = vmatprep.subr.mxu0 0.0
        %1895 = vmatpush1.xpose.msra.mxu0 0.0
        %1896 = vmatprep.subr.mxu0 0.0
        %1897 = vmatpush1.xpose.msra.mxu0 0.0
        %1898 = vmatprep.subr.mxu0 0.0
        %1899 = vmatpush1.xpose.msra.mxu0 0.0
        %1900 = vmatprep.subr.mxu0 0.0
        %1901 = vmatpush1.xpose.msra.mxu0 0.0
        %1902 = vmatprep.subr.mxu0 0.0
        %1903 = vmatpush1.xpose.msra.mxu0 0.0
        %1904 = vmatprep.subr.mxu0 0.0
        %1905 = vmatpush1.xpose.msra.mxu0 0.0
        %1906 = vmatprep.subr.mxu0 0.0
        %1907 = vmatpush1.xpose.msra.mxu0 0.0
        %1908 = vmatprep.subr.mxu0 0.0
        %1909 = vmatpush1.xpose.msra.mxu0 0.0
        %1910 = vmatprep.subr.mxu0 0.0
        %1911 = vmatpush1.xpose.msra.mxu0 0.0
        %1912 = vmatprep.subr.mxu0 0.0
        %1913 = vmatpush1.xpose.msra.mxu0 0.0
        %1914 = vmatprep.subr.mxu0 0.0
        %1915 = vmatpush1.xpose.msra.mxu0 0.0
        %1916 = vmatprep.subr.mxu0 0.0
        %1917 = vmatpush1.xpose.msra.mxu0 0.0
        %1918 = vmatprep.subr.mxu0 0.0
        %1919 = vmatpush1.xpose.msra.mxu0 0.0
        %1920 = vmatprep.subr.mxu0 0.0
        %1921 = vmatpush1.xpose.msra.mxu0 0.0
        %1922 = vmatprep.subr.mxu0 0.0
        %1923 = vmatpush1.xpose.msra.mxu0 0.0
        %1924 = vmatprep.subr.mxu0 0.0
        %1925 = vmatpush1.xpose.msra.mxu0 0.0
        %1926 = vmatprep.subr.mxu0 0.0
        %1927 = vmatpush1.xpose.msra.mxu0 0.0
        %1928 = vmatprep.subr.mxu0 0.0
        %1929 = vmatpush1.xpose.msra.mxu0 0.0
        %1930 = vmatprep.subr.mxu0 0.0
        %1931 = vmatpush1.xpose.msra.mxu0 0.0
        %1932 = vmatprep.subr.mxu0 0.0
        %1933 = vmatpush1.xpose.msra.mxu0 0.0
        %1934 = vmatprep.subr.mxu0 0.0
        %1935 = vmatpush1.xpose.msra.mxu0 0.0
        %1936 = vmatprep.subr.mxu0 0.0
        %1937 = vmatpush1.xpose.msra.mxu0 0.0
        %1938 = vmatprep.subr.mxu0 0.0
        %1939 = vmatpush1.xpose.msra.mxu0 0.0
        %1940 = vmatprep.subr.mxu0 0.0
        %1941 = vmatpush1.xpose.msra.mxu0 0.0
        %1942 = vmatprep.mubr.f32.mxu0 0.0
        %1943 = vmatmul.mubr.f32.gmra.mrb[0].mxu0 %v1874
        %v1944 = vpop.f32.mrb[0].mxu0
        %v1945 = vadd.f32 0.0, %v1944
        %v1946 = vpop.f32.mrb[0].mxu0
        %1947 = vdwg.mxu0
        %v1948 = vsel %vm733, %v1945, -inf
        %1949 = vmax.xlane.f32.xlu0 %v1948
        %v1950 = vpop.xlane.xlu0 %1949
        %v1951 = vsub.f32 %v1945, %v1950
        %v1952 = vmul.f32 %v1951, 1.442695
        %v1953 = vpow.pop %v1952
        %v1954 = vsel %vm733, %v1953, 0.0
        %1955 = vadd.xlane.f32.xlu0 %v1954
        %v1956 = vpop.xlane.xlu0 %1955
        %v1957 = vrcp.pop %v1956
        %v1958 = vmul.f32 %v1953, %v1957
        %v1960 = vsel %vm733, %v1958, 0
        %1962 = vmatprep.subr.mxu0 0.0
        %1963 = vmatpush1.msra.mxu0 %v1869
        %1964 = vmatprep.subr.mxu0 0.0
        %1965 = vmatpush1.msra.mxu0 0.0
        %1966 = vmatprep.subr.mxu0 0.0
        %1967 = vmatpush1.msra.mxu0 0.0
        %1968 = vmatprep.subr.mxu0 0.0
        %1969 = vmatpush1.msra.mxu0 0.0
        %1970 = vmatprep.subr.mxu0 0.0
        %1971 = vmatpush1.msra.mxu0 0.0
        %1972 = vmatprep.subr.mxu0 0.0
        %1973 = vmatpush1.msra.mxu0 0.0
        %1974 = vmatprep.subr.mxu0 0.0
        %1975 = vmatpush1.msra.mxu0 0.0
        %1976 = vmatprep.subr.mxu0 0.0
        %1977 = vmatpush1.msra.mxu0 0.0
        %1978 = vmatprep.subr.mxu0 0.0
        %1979 = vmatpush1.msra.mxu0 0.0
        %1980 = vmatprep.subr.mxu0 0.0
        %1981 = vmatpush1.msra.mxu0 0.0
        %1982 = vmatprep.subr.mxu0 0.0
        %1983 = vmatpush1.msra.mxu0 0.0
        %1984 = vmatprep.subr.mxu0 0.0
        %1985 = vmatpush1.msra.mxu0 0.0
        %1986 = vmatprep.subr.mxu0 0.0
        %1987 = vmatpush1.msra.mxu0 0.0
        %1988 = vmatprep.subr.mxu0 0.0
        %1989 = vmatpush1.msra.mxu0 0.0
        %1990 = vmatprep.subr.mxu0 0.0
        %1991 = vmatpush1.msra.mxu0 0.0
        %1992 = vmatprep.subr.mxu0 0.0
        %1993 = vmatpush1.msra.mxu0 0.0
        %1994 = vmatprep.subr.mxu0 0.0
        %1995 = vmatpush1.msra.mxu0 0.0
        %1996 = vmatprep.subr.mxu0 0.0
        %1997 = vmatpush1.msra.mxu0 0.0
        %1998 = vmatprep.subr.mxu0 0.0
        %1999 = vmatpush1.msra.mxu0 0.0
        %2000 = vmatprep.subr.mxu0 0.0
        %2001 = vmatpush1.msra.mxu0 0.0
        %2002 = vmatprep.subr.mxu0 0.0
        %2003 = vmatpush1.msra.mxu0 0.0
        %2004 = vmatprep.subr.mxu0 0.0
        %2005 = vmatpush1.msra.mxu0 0.0
        %2006 = vmatprep.subr.mxu0 0.0
        %2007 = vmatpush1.msra.mxu0 0.0
        %2008 = vmatprep.subr.mxu0 0.0
        %2009 = vmatpush1.msra.mxu0 0.0
        %2010 = vmatprep.subr.mxu0 0.0
        %2011 = vmatpush1.msra.mxu0 0.0
        %2012 = vmatprep.subr.mxu0 0.0
        %2013 = vmatpush1.msra.mxu0 0.0
        %2014 = vmatprep.subr.mxu0 0.0
        %2015 = vmatpush1.msra.mxu0 0.0
        %2016 = vmatprep.subr.mxu0 0.0
        %2017 = vmatpush1.msra.mxu0 0.0
        %2018 = vmatprep.subr.mxu0 0.0
        %2019 = vmatpush1.msra.mxu0 0.0
        %2020 = vmatprep.subr.mxu0 0.0
        %2021 = vmatpush1.msra.mxu0 0.0
        %2022 = vmatprep.subr.mxu0 0.0
        %2023 = vmatpush1.msra.mxu0 0.0
        %2024 = vmatprep.subr.mxu0 0.0
        %2025 = vmatpush1.msra.mxu0 0.0
        %2026 = vmatprep.mubr.f32.mxu0 0.0
        %2027 = vmatmul.mubr.f32.gmra.mrb[0].mxu0 %v1960
        %v2028 = vpop.f32.mrb[0].mxu0
        %v2029 = vadd.f32 0.0, %v2028
        %v2030 = vpop.f32.mrb[0].mxu0
        %2031 = vdwg.mxu0
        %v2032 = vld [vmem:[#allocation10] sm:$0xff]
        %v2033 = vld [vmem:[#allocation10 + $0x8] sm:$0xff]
        %v2034 = vld [vmem:[#allocation10 + $0x10] sm:$0xff]
        %v2035 = vld [vmem:[#allocation10 + $0x18] sm:$0xff]
        %v2036 = vld [vmem:[#allocation10 + $0x20] sm:$0xff]
        %v2037 = vld [vmem:[#allocation10 + $0x28] sm:$0xff]
        %v2038 = vld [vmem:[#allocation10 + $0x30] sm:$0xff]
        %v2039 = vld [vmem:[#allocation10 + $0x38] sm:$0xff]
        %v2040 = vld [vmem:[#allocation12] sm:$0x1]
        %v2042 = vlaneseq
        %v2043 = vshrl.u32 %v2042, 7
        %v2044 = vsub.s32 0, %v2043
        %v2045 = vrot.slane %v2040, %v2044
        %v2048 = vsel %vm809, %v2029, 0
        %2050 = vmatprep.subr.mxu0 0.0
        %2051 = vmatpush1.msra.mxu0 %v2032
        %2052 = vmatprep.subr.mxu0 0.0
        %2053 = vmatpush1.msra.mxu0 %v2033
        %2054 = vmatprep.subr.mxu0 0.0
        %2055 = vmatpush1.msra.mxu0 %v2034
        %2056 = vmatprep.subr.mxu0 0.0
        %2057 = vmatpush1.msra.mxu0 %v2035
        %2058 = vmatprep.subr.mxu0 0.0
        %2059 = vmatpush1.msra.mxu0 %v2036
        %2060 = vmatprep.subr.mxu0 0.0
        %2061 = vmatpush1.msra.mxu0 %v2037
        %2062 = vmatprep.subr.mxu0 0.0
        %2063 = vmatpush1.msra.mxu0 %v2038
        %2064 = vmatprep.subr.mxu0 0.0
        %2065 = vmatpush1.msra.mxu0 %v2039
        %2066 = vmatprep.subr.mxu0 0.0
        %2067 = vmatpush1.msra.mxu0 0.0
        %2068 = vmatprep.subr.mxu0 0.0
        %2069 = vmatpush1.msra.mxu0 0.0
        %2070 = vmatprep.subr.mxu0 0.0
        %2071 = vmatpush1.msra.mxu0 0.0
        %2072 = vmatprep.subr.mxu0 0.0
        %2073 = vmatpush1.msra.mxu0 0.0
        %2074 = vmatprep.subr.mxu0 0.0
        %2075 = vmatpush1.msra.mxu0 0.0
        %2076 = vmatprep.subr.mxu0 0.0
        %2077 = vmatpush1.msra.mxu0 0.0
        %2078 = vmatprep.subr.mxu0 0.0
        %2079 = vmatpush1.msra.mxu0 0.0
        %2080 = vmatprep.subr.mxu0 0.0
        %2081 = vmatpush1.msra.mxu0 0.0
        %2082 = vmatprep.subr.mxu0 0.0
        %2083 = vmatpush1.msra.mxu0 0.0
        %2084 = vmatprep.subr.mxu0 0.0
        %2085 = vmatpush1.msra.mxu0 0.0
        %2086 = vmatprep.subr.mxu0 0.0
        %2087 = vmatpush1.msra.mxu0 0.0
        %2088 = vmatprep.subr.mxu0 0.0
        %2089 = vmatpush1.msra.mxu0 0.0
        %2090 = vmatprep.subr.mxu0 0.0
        %2091 = vmatpush1.msra.mxu0 0.0
        %2092 = vmatprep.subr.mxu0 0.0
        %2093 = vmatpush1.msra.mxu0 0.0
        %2094 = vmatprep.subr.mxu0 0.0
        %2095 = vmatpush1.msra.mxu0 0.0
        %2096 = vmatprep.subr.mxu0 0.0
        %2097 = vmatpush1.msra.mxu0 0.0
        %2098 = vmatprep.subr.mxu0 0.0
        %2099 = vmatpush1.msra.mxu0 0.0
        %2100 = vmatprep.subr.mxu0 0.0
        %2101 = vmatpush1.msra.mxu0 0.0
        %2102 = vmatprep.subr.mxu0 0.0
        %2103 = vmatpush1.msra.mxu0 0.0
        %2104 = vmatprep.subr.mxu0 0.0
        %2105 = vmatpush1.msra.mxu0 0.0
        %2106 = vmatprep.subr.mxu0 0.0
        %2107 = vmatpush1.msra.mxu0 0.0
        %2108 = vmatprep.subr.mxu0 0.0
        %2109 = vmatpush1.msra.mxu0 0.0
        %2110 = vmatprep.subr.mxu0 0.0
        %2111 = vmatpush1.msra.mxu0 0.0
        %2112 = vmatprep.subr.mxu0 0.0
        %2113 = vmatpush1.msra.mxu0 0.0
        %2114 = vmatprep.mubr.f32.mxu0 0.0
        %2115 = vmatmul.mubr.f32.gmra.mrb[0].mxu0 %v2048
        %v2116 = vpop.f32.mrb[0].mxu0
        %v2117 = vadd.f32 %v2045, %v2116
        %v2118 = vpop.f32.mrb[0].mxu0
        %2119 = vdwg.mxu0
        %v2120 = vld [vmem:[#allocation13] sm:$0xff]
        %v2121 = vld [vmem:[#allocation13 + $0x8] sm:$0xff]
        %v2122 = vld [vmem:[#allocation13 + $0x10] sm:$0xff]
        %v2123 = vld [vmem:[#allocation13 + $0x18] sm:$0xff]
        %v2124 = vld [vmem:[#allocation13 + $0x20] sm:$0xff]
        %v2125 = vld [vmem:[#allocation13 + $0x28] sm:$0xff]
        %v2126 = vld [vmem:[#allocation13 + $0x30] sm:$0xff]
        %v2127 = vld [vmem:[#allocation13 + $0x38] sm:$0xff]
        %v2128 = vld [vmem:[#allocation15] sm:$0x1]
        %v2130 = vlaneseq
        %v2131 = vshrl.u32 %v2130, 7
        %v2132 = vsub.s32 0, %v2131
        %v2133 = vrot.slane %v2128, %v2132
        %v2136 = vsel %vm809, %v2117, 0
        %2138 = vmatprep.subr.mxu0 0.0
        %2139 = vmatpush1.msra.mxu0 %v2120
        %2140 = vmatprep.subr.mxu0 0.0
        %2141 = vmatpush1.msra.mxu0 %v2121
        %2142 = vmatprep.subr.mxu0 0.0
        %2143 = vmatpush1.msra.mxu0 %v2122
        %2144 = vmatprep.subr.mxu0 0.0
        %2145 = vmatpush1.msra.mxu0 %v2123
        %2146 = vmatprep.subr.mxu0 0.0
        %2147 = vmatpush1.msra.mxu0 %v2124
        %2148 = vmatprep.subr.mxu0 0.0
        %2149 = vmatpush1.msra.mxu0 %v2125
        %2150 = vmatprep.subr.mxu0 0.0
        %2151 = vmatpush1.msra.mxu0 %v2126
        %2152 = vmatprep.subr.mxu0 0.0
        %2153 = vmatpush1.msra.mxu0 %v2127
        %2154 = vmatprep.subr.mxu0 0.0
        %2155 = vmatpush1.msra.mxu0 0.0
        %2156 = vmatprep.subr.mxu0 0.0
        %2157 = vmatpush1.msra.mxu0 0.0
        %2158 = vmatprep.subr.mxu0 0.0
        %2159 = vmatpush1.msra.mxu0 0.0
        %2160 = vmatprep.subr.mxu0 0.0
        %2161 = vmatpush1.msra.mxu0 0.0
        %2162 = vmatprep.subr.mxu0 0.0
        %2163 = vmatpush1.msra.mxu0 0.0
        %2164 = vmatprep.subr.mxu0 0.0
        %2165 = vmatpush1.msra.mxu0 0.0
        %2166 = vmatprep.subr.mxu0 0.0
        %2167 = vmatpush1.msra.mxu0 0.0
        %2168 = vmatprep.subr.mxu0 0.0
        %2169 = vmatpush1.msra.mxu0 0.0
        %2170 = vmatprep.subr.mxu0 0.0
        %2171 = vmatpush1.msra.mxu0 0.0
        %2172 = vmatprep.subr.mxu0 0.0
        %2173 = vmatpush1.msra.mxu0 0.0
        %2174 = vmatprep.subr.mxu0 0.0
        %2175 = vmatpush1.msra.mxu0 0.0
        %2176 = vmatprep.subr.mxu0 0.0
        %2177 = vmatpush1.msra.mxu0 0.0
        %2178 = vmatprep.subr.mxu0 0.0
        %2179 = vmatpush1.msra.mxu0 0.0
        %2180 = vmatprep.subr.mxu0 0.0
        %2181 = vmatpush1.msra.mxu0 0.0
        %2182 = vmatprep.subr.mxu0 0.0
        %2183 = vmatpush1.msra.mxu0 0.0
        %2184 = vmatprep.subr.mxu0 0.0
        %2185 = vmatpush1.msra.mxu0 0.0
        %2186 = vmatprep.subr.mxu0 0.0
        %2187 = vmatpush1.msra.mxu0 0.0
        %2188 = vmatprep.subr.mxu0 0.0
        %2189 = vmatpush1.msra.mxu0 0.0
        %2190 = vmatprep.subr.mxu0 0.0
        %2191 = vmatpush1.msra.mxu0 0.0
        %2192 = vmatprep.subr.mxu0 0.0
        %2193 = vmatpush1.msra.mxu0 0.0
        %2194 = vmatprep.subr.mxu0 0.0
        %2195 = vmatpush1.msra.mxu0 0.0
        %2196 = vmatprep.subr.mxu0 0.0
        %2197 = vmatpush1.msra.mxu0 0.0
        %2198 = vmatprep.subr.mxu0 0.0
        %2199 = vmatpush1.msra.mxu0 0.0
        %2200 = vmatprep.subr.mxu0 0.0
        %2201 = vmatpush1.msra.mxu0 0.0
        %2202 = vmatprep.mubr.f32.mxu0 0.0
        %2203 = vmatmul.mubr.f32.gmra.mrb[0].mxu0 %v2136
        %v2204 = vpop.f32.mrb[0].mxu0
        %v2205 = vadd.f32 %v2133, %v2204
        %v2206 = vpop.f32.mrb[0].mxu0
        %2207 = vdwg.mxu0
        %v2208 = vld [vmem:[#allocation16] sm:$0xf]
        %v2209 = vld [vmem:[%s14] sm:$0xf]
        %vm2210 = vcmask 31744
        %v2212 = vsel %vm2210, %v2209, 0
        %v2215 = vsel %vm2210, %v2205, 0
        %2217 = vmatprep.subr.mxu0 0.0
        %2218 = vmatpush1.xpose.msra.mxu0 %v2215
        %2219 = vmatprep.subr.mxu0 0.0
        %2220 = vmatpush1.xpose.msra.mxu0 0.0
        %2221 = vmatprep.subr.mxu0 0.0
        %2222 = vmatpush1.xpose.msra.mxu0 0.0
        %2223 = vmatprep.subr.mxu0 0.0
        %2224 = vmatpush1.xpose.msra.mxu0 0.0
        %2225 = vmatprep.subr.mxu0 0.0
        %2226 = vmatpush1.xpose.msra.mxu0 0.0
        %2227 = vmatprep.subr.mxu0 0.0
        %2228 = vmatpush1.xpose.msra.mxu0 0.0
        %2229 = vmatprep.subr.mxu0 0.0
        %2230 = vmatpush1.xpose.msra.mxu0 0.0
        %2231 = vmatprep.subr.mxu0 0.0
        %2232 = vmatpush1.xpose.msra.mxu0 0.0
        %2233 = vmatprep.subr.mxu0 0.0
        %2234 = vmatpush1.xpose.msra.mxu0 0.0
        %2235 = vmatprep.subr.mxu0 0.0
        %2236 = vmatpush1.xpose.msra.mxu0 0.0
        %2237 = vmatprep.subr.mxu0 0.0
        %2238 = vmatpush1.xpose.msra.mxu0 0.0
        %2239 = vmatprep.subr.mxu0 0.0
        %2240 = vmatpush1.xpose.msra.mxu0 0.0
        %2241 = vmatprep.subr.mxu0 0.0
        %2242 = vmatpush1.xpose.msra.mxu0 0.0
        %2243 = vmatprep.subr.mxu0 0.0
        %2244 = vmatpush1.xpose.msra.mxu0 0.0
        %2245 = vmatprep.subr.mxu0 0.0
        %2246 = vmatpush1.xpose.msra.mxu0 0.0
        %2247 = vmatprep.subr.mxu0 0.0
        %2248 = vmatpush1.xpose.msra.mxu0 0.0
        %2249 = vmatprep.subr.mxu0 0.0
        %2250 = vmatpush1.xpose.msra.mxu0 0.0
        %2251 = vmatprep.subr.mxu0 0.0
        %2252 = vmatpush1.xpose.msra.mxu0 0.0
        %2253 = vmatprep.subr.mxu0 0.0
        %2254 = vmatpush1.xpose.msra.mxu0 0.0
        %2255 = vmatprep.subr.mxu0 0.0
        %2256 = vmatpush1.xpose.msra.mxu0 0.0
        %2257 = vmatprep.subr.mxu0 0.0
        %2258 = vmatpush1.xpose.msra.mxu0 0.0
        %2259 = vmatprep.subr.mxu0 0.0
        %2260 = vmatpush1.xpose.msra.mxu0 0.0
        %2261 = vmatprep.subr.mxu0 0.0
        %2262 = vmatpush1.xpose.msra.mxu0 0.0
        %2263 = vmatprep.subr.mxu0 0.0
        %2264 = vmatpush1.xpose.msra.mxu0 0.0
        %2265 = vmatprep.subr.mxu0 0.0
        %2266 = vmatpush1.xpose.msra.mxu0 0.0
        %2267 = vmatprep.subr.mxu0 0.0
        %2268 = vmatpush1.xpose.msra.mxu0 0.0
        %2269 = vmatprep.subr.mxu0 0.0
        %2270 = vmatpush1.xpose.msra.mxu0 0.0
        %2271 = vmatprep.subr.mxu0 0.0
        %2272 = vmatpush1.xpose.msra.mxu0 0.0
        %2273 = vmatprep.subr.mxu0 0.0
        %2274 = vmatpush1.xpose.msra.mxu0 0.0
        %2275 = vmatprep.subr.mxu0 0.0
        %2276 = vmatpush1.xpose.msra.mxu0 0.0
        %2277 = vmatprep.subr.mxu0 0.0
        %2278 = vmatpush1.xpose.msra.mxu0 0.0
        %2279 = vmatprep.subr.mxu0 0.0
        %2280 = vmatpush1.xpose.msra.mxu0 0.0
        %2281 = vmatprep.mubr.f32.mxu0 0.0
        %2282 = vmatmul.mubr.f32.gmra.mrb[0].mxu0 %v2212
        %v2283 = vpop.f32.mrb[0].mxu0
        %v2284 = vadd.f32 0.0, %v2283
        %v2285 = vpop.f32.mrb[0].mxu0
        %2286 = vdwg.mxu0
        %v2287 = vld [vmem:[%s15] sm:$0xff]
        %v2289 = vsel %vm733, %v2284, 0
        %2291 = vmatprep.subr.mxu0 0.0
        %2292 = vmatpush1.msra.mxu0 %v2287
        %2293 = vmatprep.subr.mxu0 0.0
        %2294 = vmatpush1.msra.mxu0 0.0
        %2295 = vmatprep.subr.mxu0 0.0
        %2296 = vmatpush1.msra.mxu0 0.0
        %2297 = vmatprep.subr.mxu0 0.0
        %2298 = vmatpush1.msra.mxu0 0.0
        %2299 = vmatprep.subr.mxu0 0.0
        %2300 = vmatpush1.msra.mxu0 0.0
        %2301 = vmatprep.subr.mxu0 0.0
        %2302 = vmatpush1.msra.mxu0 0.0
        %2303 = vmatprep.subr.mxu0 0.0
        %2304 = vmatpush1.msra.mxu0 0.0
        %2305 = vmatprep.subr.mxu0 0.0
        %2306 = vmatpush1.msra.mxu0 0.0
        %2307 = vmatprep.subr.mxu0 0.0
        %2308 = vmatpush1.msra.mxu0 0.0
        %2309 = vmatprep.subr.mxu0 0.0
        %2310 = vmatpush1.msra.mxu0 0.0
        %2311 = vmatprep.subr.mxu0 0.0
        %2312 = vmatpush1.msra.mxu0 0.0
        %2313 = vmatprep.subr.mxu0 0.0
        %2314 = vmatpush1.msra.mxu0 0.0
        %2315 = vmatprep.subr.mxu0 0.0
        %2316 = vmatpush1.msra.mxu0 0.0
        %2317 = vmatprep.subr.mxu0 0.0
        %2318 = vmatpush1.msra.mxu0 0.0
        %2319 = vmatprep.subr.mxu0 0.0
        %2320 = vmatpush1.msra.mxu0 0.0
        %2321 = vmatprep.subr.mxu0 0.0
        %2322 = vmatpush1.msra.mxu0 0.0
        %2323 = vmatprep.subr.mxu0 0.0
        %2324 = vmatpush1.msra.mxu0 0.0
        %2325 = vmatprep.subr.mxu0 0.0
        %2326 = vmatpush1.msra.mxu0 0.0
        %2327 = vmatprep.subr.mxu0 0.0
        %2328 = vmatpush1.msra.mxu0 0.0
        %2329 = vmatprep.subr.mxu0 0.0
        %2330 = vmatpush1.msra.mxu0 0.0
        %2331 = vmatprep.subr.mxu0 0.0
        %2332 = vmatpush1.msra.mxu0 0.0
        %2333 = vmatprep.subr.mxu0 0.0
        %2334 = vmatpush1.msra.mxu0 0.0
        %2335 = vmatprep.subr.mxu0 0.0
        %2336 = vmatpush1.msra.mxu0 0.0
        %2337 = vmatprep.subr.mxu0 0.0
        %2338 = vmatpush1.msra.mxu0 0.0
        %2339 = vmatprep.subr.mxu0 0.0
        %2340 = vmatpush1.msra.mxu0 0.0
        %2341 = vmatprep.subr.mxu0 0.0
        %2342 = vmatpush1.msra.mxu0 0.0
        %2343 = vmatprep.subr.mxu0 0.0
        %2344 = vmatpush1.msra.mxu0 0.0
        %2345 = vmatprep.subr.mxu0 0.0
        %2346 = vmatpush1.msra.mxu0 0.0
        %2347 = vmatprep.subr.mxu0 0.0
        %2348 = vmatpush1.msra.mxu0 0.0
        %2349 = vmatprep.subr.mxu0 0.0
        %2350 = vmatpush1.msra.mxu0 0.0
        %2351 = vmatprep.subr.mxu0 0.0
        %2352 = vmatpush1.msra.mxu0 0.0
        %2353 = vmatprep.subr.mxu0 0.0
        %2354 = vmatpush1.msra.mxu0 0.0
        %2355 = vmatprep.mubr.f32.mxu0 0.0
        %2356 = vmatmul.mubr.f32.gmra.mrb[0].mxu0 %v2289
        %v2357 = vpop.f32.mrb[0].mxu0
        %v2358 = vadd.f32 0.0, %v2357
        %v2359 = vpop.f32.mrb[0].mxu0
        %2360 = vdwg.mxu0
        %v2361 = vadd.f32 %v2208, %v2358
        %s2362 = scalar_lea.vmem %s14, 4
        %v2363 = vld [vmem:[%s2362] sm:$0xf]
        %v2365 = vsel %vm2210, %v2363, 0
        %2367 = vmatprep.subr.mxu0 0.0
        %2368 = vmatpush1.xpose.msra.mxu0 %v2215
        %2369 = vmatprep.subr.mxu0 0.0
        %2370 = vmatpush1.xpose.msra.mxu0 0.0
        %2371 = vmatprep.subr.mxu0 0.0
        %2372 = vmatpush1.xpose.msra.mxu0 0.0
        %2373 = vmatprep.subr.mxu0 0.0
        %2374 = vmatpush1.xpose.msra.mxu0 0.0
        %2375 = vmatprep.subr.mxu0 0.0
        %2376 = vmatpush1.xpose.msra.mxu0 0.0
        %2377 = vmatprep.subr.mxu0 0.0
        %2378 = vmatpush1.xpose.msra.mxu0 0.0
        %2379 = vmatprep.subr.mxu0 0.0
        %2380 = vmatpush1.xpose.msra.mxu0 0.0
        %2381 = vmatprep.subr.mxu0 0.0
        %2382 = vmatpush1.xpose.msra.mxu0 0.0
        %2383 = vmatprep.subr.mxu0 0.0
        %2384 = vmatpush1.xpose.msra.mxu0 0.0
        %2385 = vmatprep.subr.mxu0 0.0
        %2386 = vmatpush1.xpose.msra.mxu0 0.0
        %2387 = vmatprep.subr.mxu0 0.0
        %2388 = vmatpush1.xpose.msra.mxu0 0.0
        %2389 = vmatprep.subr.mxu0 0.0
        %2390 = vmatpush1.xpose.msra.mxu0 0.0
        %2391 = vmatprep.subr.mxu0 0.0
        %2392 = vmatpush1.xpose.msra.mxu0 0.0
        %2393 = vmatprep.subr.mxu0 0.0
        %2394 = vmatpush1.xpose.msra.mxu0 0.0
        %2395 = vmatprep.subr.mxu0 0.0
        %2396 = vmatpush1.xpose.msra.mxu0 0.0
        %2397 = vmatprep.subr.mxu0 0.0
        %2398 = vmatpush1.xpose.msra.mxu0 0.0
        %2399 = vmatprep.subr.mxu0 0.0
        %2400 = vmatpush1.xpose.msra.mxu0 0.0
        %2401 = vmatprep.subr.mxu0 0.0
        %2402 = vmatpush1.xpose.msra.mxu0 0.0
        %2403 = vmatprep.subr.mxu0 0.0
        %2404 = vmatpush1.xpose.msra.mxu0 0.0
        %2405 = vmatprep.subr.mxu0 0.0
        %2406 = vmatpush1.xpose.msra.mxu0 0.0
        %2407 = vmatprep.subr.mxu0 0.0
        %2408 = vmatpush1.xpose.msra.mxu0 0.0
        %2409 = vmatprep.subr.mxu0 0.0
        %2410 = vmatpush1.xpose.msra.mxu0 0.0
        %2411 = vmatprep.subr.mxu0 0.0
        %2412 = vmatpush1.xpose.msra.mxu0 0.0
        %2413 = vmatprep.subr.mxu0 0.0
        %2414 = vmatpush1.xpose.msra.mxu0 0.0
        %2415 = vmatprep.subr.mxu0 0.0
        %2416 = vmatpush1.xpose.msra.mxu0 0.0
        %2417 = vmatprep.subr.mxu0 0.0
        %2418 = vmatpush1.xpose.msra.mxu0 0.0
        %2419 = vmatprep.subr.mxu0 0.0
        %2420 = vmatpush1.xpose.msra.mxu0 0.0
        %2421 = vmatprep.subr.mxu0 0.0
        %2422 = vmatpush1.xpose.msra.mxu0 0.0
        %2423 = vmatprep.subr.mxu0 0.0
        %2424 = vmatpush1.xpose.msra.mxu0 0.0
        %2425 = vmatprep.subr.mxu0 0.0
        %2426 = vmatpush1.xpose.msra.mxu0 0.0
        %2427 = vmatprep.subr.mxu0 0.0
        %2428 = vmatpush1.xpose.msra.mxu0 0.0
        %2429 = vmatprep.subr.mxu0 0.0
        %2430 = vmatpush1.xpose.msra.mxu0 0.0
        %2431 = vmatprep.mubr.f32.mxu0 0.0
        %2432 = vmatmul.mubr.f32.gmra.mrb[0].mxu0 %v2365
        %v2433 = vpop.f32.mrb[0].mxu0
        %v2434 = vadd.f32 0.0, %v2433
        %v2435 = vpop.f32.mrb[0].mxu0
        %2436 = vdwg.mxu0
        %s2437 = scalar_lea.vmem %s15, 8
        %v2438 = vld [vmem:[%s2437] sm:$0xff]
        %v2440 = vsel %vm733, %v2434, 0
        %2442 = vmatprep.subr.mxu0 0.0
        %2443 = vmatpush1.msra.mxu0 %v2438
        %2444 = vmatprep.subr.mxu0 0.0
        %2445 = vmatpush1.msra.mxu0 0.0
        %2446 = vmatprep.subr.mxu0 0.0
        %2447 = vmatpush1.msra.mxu0 0.0
        %2448 = vmatprep.subr.mxu0 0.0
        %2449 = vmatpush1.msra.mxu0 0.0
        %2450 = vmatprep.subr.mxu0 0.0
        %2451 = vmatpush1.msra.mxu0 0.0
        %2452 = vmatprep.subr.mxu0 0.0
        %2453 = vmatpush1.msra.mxu0 0.0
        %2454 = vmatprep.subr.mxu0 0.0
        %2455 = vmatpush1.msra.mxu0 0.0
        %2456 = vmatprep.subr.mxu0 0.0
        %2457 = vmatpush1.msra.mxu0 0.0
        %2458 = vmatprep.subr.mxu0 0.0
        %2459 = vmatpush1.msra.mxu0 0.0
        %2460 = vmatprep.subr.mxu0 0.0
        %2461 = vmatpush1.msra.mxu0 0.0
        %2462 = vmatprep.subr.mxu0 0.0
        %2463 = vmatpush1.msra.mxu0 0.0
        %2464 = vmatprep.subr.mxu0 0.0
        %2465 = vmatpush1.msra.mxu0 0.0
        %2466 = vmatprep.subr.mxu0 0.0
        %2467 = vmatpush1.msra.mxu0 0.0
        %2468 = vmatprep.subr.mxu0 0.0
        %2469 = vmatpush1.msra.mxu0 0.0
        %2470 = vmatprep.subr.mxu0 0.0
        %2471 = vmatpush1.msra.mxu0 0.0
        %2472 = vmatprep.subr.mxu0 0.0
        %2473 = vmatpush1.msra.mxu0 0.0
        %2474 = vmatprep.subr.mxu0 0.0
        %2475 = vmatpush1.msra.mxu0 0.0
        %2476 = vmatprep.subr.mxu0 0.0
        %2477 = vmatpush1.msra.mxu0 0.0
        %2478 = vmatprep.subr.mxu0 0.0
        %2479 = vmatpush1.msra.mxu0 0.0
        %2480 = vmatprep.subr.mxu0 0.0
        %2481 = vmatpush1.msra.mxu0 0.0
        %2482 = vmatprep.subr.mxu0 0.0
        %2483 = vmatpush1.msra.mxu0 0.0
        %2484 = vmatprep.subr.mxu0 0.0
        %2485 = vmatpush1.msra.mxu0 0.0
        %2486 = vmatprep.subr.mxu0 0.0
        %2487 = vmatpush1.msra.mxu0 0.0
        %2488 = vmatprep.subr.mxu0 0.0
        %2489 = vmatpush1.msra.mxu0 0.0
        %2490 = vmatprep.subr.mxu0 0.0
        %2491 = vmatpush1.msra.mxu0 0.0
        %2492 = vmatprep.subr.mxu0 0.0
        %2493 = vmatpush1.msra.mxu0 0.0
        %2494 = vmatprep.subr.mxu0 0.0
        %2495 = vmatpush1.msra.mxu0 0.0
        %2496 = vmatprep.subr.mxu0 0.0
        %2497 = vmatpush1.msra.mxu0 0.0
        %2498 = vmatprep.subr.mxu0 0.0
        %2499 = vmatpush1.msra.mxu0 0.0
        %2500 = vmatprep.subr.mxu0 0.0
        %2501 = vmatpush1.msra.mxu0 0.0
        %2502 = vmatprep.subr.mxu0 0.0
        %2503 = vmatpush1.msra.mxu0 0.0
        %2504 = vmatprep.subr.mxu0 0.0
        %2505 = vmatpush1.msra.mxu0 0.0
        %2506 = vmatprep.mubr.f32.mxu0 0.0
        %2507 = vmatmul.mubr.f32.gmra.mrb[0].mxu0 %v2440
        %v2508 = vpop.f32.mrb[0].mxu0
        %v2509 = vadd.f32 0.0, %v2508
        %v2510 = vpop.f32.mrb[0].mxu0
        %2511 = vdwg.mxu0
        %v2512 = vadd.f32 %v2361, %v2509
        %s2513 = scalar_lea.vmem %s14, 8
        %v2514 = vld [vmem:[%s2513] sm:$0xf]
        %v2516 = vsel %vm2210, %v2514, 0
        %2518 = vmatprep.subr.mxu0 0.0
        %2519 = vmatpush1.xpose.msra.mxu0 %v2215
        %2520 = vmatprep.subr.mxu0 0.0
        %2521 = vmatpush1.xpose.msra.mxu0 0.0
        %2522 = vmatprep.subr.mxu0 0.0
        %2523 = vmatpush1.xpose.msra.mxu0 0.0
        %2524 = vmatprep.subr.mxu0 0.0
        %2525 = vmatpush1.xpose.msra.mxu0 0.0
        %2526 = vmatprep.subr.mxu0 0.0
        %2527 = vmatpush1.xpose.msra.mxu0 0.0
        %2528 = vmatprep.subr.mxu0 0.0
        %2529 = vmatpush1.xpose.msra.mxu0 0.0
        %2530 = vmatprep.subr.mxu0 0.0
        %2531 = vmatpush1.xpose.msra.mxu0 0.0
        %2532 = vmatprep.subr.mxu0 0.0
        %2533 = vmatpush1.xpose.msra.mxu0 0.0
        %2534 = vmatprep.subr.mxu0 0.0
        %2535 = vmatpush1.xpose.msra.mxu0 0.0
        %2536 = vmatprep.subr.mxu0 0.0
        %2537 = vmatpush1.xpose.msra.mxu0 0.0
        %2538 = vmatprep.subr.mxu0 0.0
        %2539 = vmatpush1.xpose.msra.mxu0 0.0
        %2540 = vmatprep.subr.mxu0 0.0
        %2541 = vmatpush1.xpose.msra.mxu0 0.0
        %2542 = vmatprep.subr.mxu0 0.0
        %2543 = vmatpush1.xpose.msra.mxu0 0.0
        %2544 = vmatprep.subr.mxu0 0.0
        %2545 = vmatpush1.xpose.msra.mxu0 0.0
        %2546 = vmatprep.subr.mxu0 0.0
        %2547 = vmatpush1.xpose.msra.mxu0 0.0
        %2548 = vmatprep.subr.mxu0 0.0
        %2549 = vmatpush1.xpose.msra.mxu0 0.0
        %2550 = vmatprep.subr.mxu0 0.0
        %2551 = vmatpush1.xpose.msra.mxu0 0.0
        %2552 = vmatprep.subr.mxu0 0.0
        %2553 = vmatpush1.xpose.msra.mxu0 0.0
        %2554 = vmatprep.subr.mxu0 0.0
        %2555 = vmatpush1.xpose.msra.mxu0 0.0
        %2556 = vmatprep.subr.mxu0 0.0
        %2557 = vmatpush1.xpose.msra.mxu0 0.0
        %2558 = vmatprep.subr.mxu0 0.0
        %2559 = vmatpush1.xpose.msra.mxu0 0.0
        %2560 = vmatprep.subr.mxu0 0.0
        %2561 = vmatpush1.xpose.msra.mxu0 0.0
        %2562 = vmatprep.subr.mxu0 0.0
        %2563 = vmatpush1.xpose.msra.mxu0 0.0
        %2564 = vmatprep.subr.mxu0 0.0
        %2565 = vmatpush1.xpose.msra.mxu0 0.0
        %2566 = vmatprep.subr.mxu0 0.0
        %2567 = vmatpush1.xpose.msra.mxu0 0.0
        %2568 = vmatprep.subr.mxu0 0.0
        %2569 = vmatpush1.xpose.msra.mxu0 0.0
        %2570 = vmatprep.subr.mxu0 0.0
        %2571 = vmatpush1.xpose.msra.mxu0 0.0
        %2572 = vmatprep.subr.mxu0 0.0
        %2573 = vmatpush1.xpose.msra.mxu0 0.0
        %2574 = vmatprep.subr.mxu0 0.0
        %2575 = vmatpush1.xpose.msra.mxu0 0.0
        %2576 = vmatprep.subr.mxu0 0.0
        %2577 = vmatpush1.xpose.msra.mxu0 0.0
        %2578 = vmatprep.subr.mxu0 0.0
        %2579 = vmatpush1.xpose.msra.mxu0 0.0
        %2580 = vmatprep.subr.mxu0 0.0
        %2581 = vmatpush1.xpose.msra.mxu0 0.0
        %2582 = vmatprep.mubr.f32.mxu0 0.0
        %2583 = vmatmul.mubr.f32.gmra.mrb[0].mxu0 %v2516
        %v2584 = vpop.f32.mrb[0].mxu0
        %v2585 = vadd.f32 0.0, %v2584
        %v2586 = vpop.f32.mrb[0].mxu0
        %2587 = vdwg.mxu0
        %s2588 = scalar_lea.vmem %s15, 16
        %v2589 = vld [vmem:[%s2588] sm:$0xff]
        %v2591 = vsel %vm733, %v2585, 0
        %2593 = vmatprep.subr.mxu0 0.0
        %2594 = vmatpush1.msra.mxu0 %v2589
        %2595 = vmatprep.subr.mxu0 0.0
        %2596 = vmatpush1.msra.mxu0 0.0
        %2597 = vmatprep.subr.mxu0 0.0
        %2598 = vmatpush1.msra.mxu0 0.0
        %2599 = vmatprep.subr.mxu0 0.0
        %2600 = vmatpush1.msra.mxu0 0.0
        %2601 = vmatprep.subr.mxu0 0.0
        %2602 = vmatpush1.msra.mxu0 0.0
        %2603 = vmatprep.subr.mxu0 0.0
        %2604 = vmatpush1.msra.mxu0 0.0
        %2605 = vmatprep.subr.mxu0 0.0
        %2606 = vmatpush1.msra.mxu0 0.0
        %2607 = vmatprep.subr.mxu0 0.0
        %2608 = vmatpush1.msra.mxu0 0.0
        %2609 = vmatprep.subr.mxu0 0.0
        %2610 = vmatpush1.msra.mxu0 0.0
        %2611 = vmatprep.subr.mxu0 0.0
        %2612 = vmatpush1.msra.mxu0 0.0
        %2613 = vmatprep.subr.mxu0 0.0
        %2614 = vmatpush1.msra.mxu0 0.0
        %2615 = vmatprep.subr.mxu0 0.0
        %2616 = vmatpush1.msra.mxu0 0.0
        %2617 = vmatprep.subr.mxu0 0.0
        %2618 = vmatpush1.msra.mxu0 0.0
        %2619 = vmatprep.subr.mxu0 0.0
        %2620 = vmatpush1.msra.mxu0 0.0
        %2621 = vmatprep.subr.mxu0 0.0
        %2622 = vmatpush1.msra.mxu0 0.0
        %2623 = vmatprep.subr.mxu0 0.0
        %2624 = vmatpush1.msra.mxu0 0.0
        %2625 = vmatprep.subr.mxu0 0.0
        %2626 = vmatpush1.msra.mxu0 0.0
        %2627 = vmatprep.subr.mxu0 0.0
        %2628 = vmatpush1.msra.mxu0 0.0
        %2629 = vmatprep.subr.mxu0 0.0
        %2630 = vmatpush1.msra.mxu0 0.0
        %2631 = vmatprep.subr.mxu0 0.0
        %2632 = vmatpush1.msra.mxu0 0.0
        %2633 = vmatprep.subr.mxu0 0.0
        %2634 = vmatpush1.msra.mxu0 0.0
        %2635 = vmatprep.subr.mxu0 0.0
        %2636 = vmatpush1.msra.mxu0 0.0
        %2637 = vmatprep.subr.mxu0 0.0
        %2638 = vmatpush1.msra.mxu0 0.0
        %2639 = vmatprep.subr.mxu0 0.0
        %2640 = vmatpush1.msra.mxu0 0.0
        %2641 = vmatprep.subr.mxu0 0.0
        %2642 = vmatpush1.msra.mxu0 0.0
        %2643 = vmatprep.subr.mxu0 0.0
        %2644 = vmatpush1.msra.mxu0 0.0
        %2645 = vmatprep.subr.mxu0 0.0
        %2646 = vmatpush1.msra.mxu0 0.0
        %2647 = vmatprep.subr.mxu0 0.0
        %2648 = vmatpush1.msra.mxu0 0.0
        %2649 = vmatprep.subr.mxu0 0.0
        %2650 = vmatpush1.msra.mxu0 0.0
        %2651 = vmatprep.subr.mxu0 0.0
        %2652 = vmatpush1.msra.mxu0 0.0
        %2653 = vmatprep.subr.mxu0 0.0
        %2654 = vmatpush1.msra.mxu0 0.0
        %2655 = vmatprep.subr.mxu0 0.0
        %2656 = vmatpush1.msra.mxu0 0.0
        %2657 = vmatprep.mubr.f32.mxu0 0.0
        %2658 = vmatmul.mubr.f32.gmra.mrb[0].mxu0 %v2591
        %v2659 = vpop.f32.mrb[0].mxu0
        %v2660 = vadd.f32 0.0, %v2659
        %v2661 = vpop.f32.mrb[0].mxu0
        %2662 = vdwg.mxu0
        %v2663 = vadd.f32 %v2512, %v2660
        %vm2664 = vcmask 134144
        %2665 = vst.msk [vmem:[%s685] sm:$0xf] %vm2664, %v2663
        %s2666 = sand.u32 %s413, 1
        %s2667 = scalar_lea.sflag [#allocation6], %s2666
        %s2668 = sand.u32 %s413, 1
        %s2669 = smul.addr %s2668, 4
        %s2670 = scalar_lea.vmem [#allocation18], %s2669
        %p2671 = scmp.lt.s32.totalorder %s38, 1
        %s2672 = scalar_select %p2671, %s38, 1
        %s2673 = scalar_lea.vmem %s18, %s2672
        // Predicated region
        $region121: #{unet_block_out_forward.1} parent=87 // pred_check
          %p2674 = pneg %p423
        $region122: #{unet_block_out_forward.1} parent=87 // pred_check_branch
          %2676 = sbr.rel (%p2674) target = $region124
        $region123: #{unet_block_out_forward.1} parent=87 // pred_region
          %s2678 = ssub.s32 64, 64
          %2679 = vsyncadd %s2667, %s2678
          %s2680 = smul.addr %s38, 64
          %s2681 = scalar_lea.hbm %s17, %s2680
          %s2683 = sshll.u32 %s2670, 4
          %s2684 = int_to_ptr.vmem [resolvable:$true] %s2683
          %2686 = dma.vmem_to_hbm [thread:$0]  %s2684, 64, %s2681, %s2667
        $region124: #{unet_block_out_forward.1} parent=87 // pred_fallthru
          _
        // Predicated region
        $region125: #{unet_block_out_forward.1} parent=87 // pred_check
          %p2687 = pneg %p449
        $region126: #{unet_block_out_forward.1} parent=87 // pred_check_branch
          %2689 = sbr.rel (%p2687) target = $region128
        $region127: #{unet_block_out_forward.1} parent=87 // pred_region
          _
        $region128: #{unet_block_out_forward.1} parent=87 // pred_fallthru
          _
      $region88: #{unet_block_out_forward.1} parent=5 // pred_fallthru
        _
      %p2690 = scmp.le.s32.totalorder 2, %s33
      // Predicated region
      $region129: #{unet_block_out_forward.1} parent=5 // pred_check
        %p2691 = pneg %p2690
      $region130: #{unet_block_out_forward.1} parent=5 // pred_check_branch
        %2693 = sbr.rel (%p2691) target = $region132
      $region131: #{unet_block_out_forward.1} parent=5 // pred_region
        %s2694 = ssub.s32 %s33, 2
        // Predicated region
        $region133: #{unet_block_out_forward.1} parent=131 // pred_check
          %p2695 = pneg %p429
        $region134: #{unet_block_out_forward.1} parent=131 // pred_check_branch
          %2697 = sbr.rel (%p2695) target = $region136
        $region135: #{unet_block_out_forward.1} parent=131 // pred_region
          %s2698 = sand.u32 %s414, 1
          %s2699 = scalar_lea.sflag [#allocation6], %s2698
          %s2700 = sand.u32 %s414, 1
          %s2701 = smul.addr %s2700, 4
          %s2702 = scalar_lea.vmem [#allocation18], %s2701
          %2703 = dma.done %s2699, 64
        $region136: #{unet_block_out_forward.1} parent=131 // pred_fallthru
          _
        // Predicated region
        $region137: #{unet_block_out_forward.1} parent=131 // pred_check
          %p2704 = pneg %p455
        $region138: #{unet_block_out_forward.1} parent=131 // pred_check_branch
          %2706 = sbr.rel (%p2704) target = $region140
        $region139: #{unet_block_out_forward.1} parent=131 // pred_region
          %p2707 = scmp.lt.s32.totalorder %s39, 1
          %s2708 = scalar_select %p2707, %s39, 1
          %s2709 = scalar_lea.vmem %s18, %s2708
        $region140: #{unet_block_out_forward.1} parent=131 // pred_fallthru
          _
      $region132: #{unet_block_out_forward.1} parent=5 // pred_fallthru
        _
    $region6: #{unet_block_out_forward.1} parent=1 // loop_footer
      %s37 = sadd.s32 1, %s33
    $region7: #{unet_block_out_forward.1} parent=1 // loop_footer_branch
      %32 = sbr.rel target = $region3
    $region8: #{unet_block_out_forward.1} parent=1 // loop_exit
      _
    %2710 = vsyncpa [#allocation5], 1
    %s2711 = scalar_lea.sflag [#allocation5], 1
    %2712 = vsyncpa %s2711, 1
    %2713 = vsyncpa [#allocation8], 1
    %2714 = vsyncpa [#allocation11], 1
    %2715 = vsyncpa [#allocation14], 1
    %2716 = vsyncpa [#allocation17], 1
    %2717 = vsyncpa [#allocation6], 1
    %s2718 = scalar_lea.sflag [#allocation6], 1
    %2719 = vsyncpa %s2718, 1

</llo_original>
